<compile_context>
chip_gen: v7x
topology: tpu7x:2x2x1
jax: 0.10.0
libtpu: 0.0.40
codegen_flags: <defaults>
</compile_context>

<pallas_src>
import jax
import jax.numpy as jnp
from jax.experimental import pallas as pl
from jax.experimental.pallas import tpu as pltpu

FC_OUT = 1024          # fc_out_channels
MLP_HEAD = 256         # mlp_head_channels
TEMPERATURE = 0.2
IOU_THRESHOLD = 0.5
LOSS_WEIGHT = 1.0
# reweight_type == 'none'  -> coefficient = ones_like(iou)
# reduction    == 'mean'

_NEG_INF = -1e30


# ----------------------------------------------------------------------------
# Fused kernel: head (MLP) + L2 normalize + similarity + masked log-softmax
#               + IoU-kept mean reduction -> scalar loss
# ----------------------------------------------------------------------------
def _fused_loss_kernel(x_ref, w1_ref, b1_ref, w2_ref, b2_ref,
                       lab_col_ref, lab_row_ref, iou_ref, out_ref):
    """x_ref      : (2*NP, 1024) bf16  rows [0:NP) = features, [NP:2NP) = protos
       w1_ref     : (1024, 1024) bf16
       b1_ref     : (1, 1024)    f32
       w2_ref     : (1024, 256)  bf16
       b2_ref     : (1, 256)     f32
       lab_col_ref: (NP, 1)  int32  (padded rows  = -1)
       lab_row_ref: (1, NP)  int32  (padded cols  = -1)
       iou_ref    : (NP, 1)  f32    (padded rows  = -1.0 -> dropped by keep)
       out_ref    : (1, 1)   f32    scalar loss"""
    np_rows = lab_col_ref.shape[0]

    # ---- contrastive head: Linear -> ReLU -> Linear (bf16 MXU, f32 acc) ----
    h = jnp.dot(x_ref[...], w1_ref[...], preferred_element_type=jnp.float32)
    h = jnp.maximum(h + b1_ref[...], 0.0)
    z = jnp.dot(h.astype(jnp.bfloat16), w2_ref[...],
                preferred_element_type=jnp.float32) + b2_ref[...]

    # ---- F.normalize(dim=1) in f32 (rsqrt -> EUP slot) ----
    inv_norm = jax.lax.rsqrt(
        jnp.maximum(jnp.sum(z * z, axis=-1, keepdims=True), 1e-24))
    z = z * inv_norm

    # np_rows is a multiple of 8, so these f32 slices stay sublane-aligned.
    f = z[:np_rows, :]              # (NP, 256) normalized features
    p = z[np_rows:, :]              # (NP, 256) normalized prototypes_expand

    # ---- cosine similarity / temperature (f @ p.T, f32 for fidelity) ----
    sim = jax.lax.dot_general(
        f, p, dimension_numbers=(((1,), (1,)), ((), ())),
        preferred_element_type=jnp.float32) / TEMPERATURE

    lab_col = lab_col_ref[...]                 # (NP, 1) int32
    lab_row = lab_row_ref[...]                 # (1, NP) int32
    col_valid = lab_row >= 0                   # padded prototype columns

    # exclude padded columns from the softmax denominator
    sim = jnp.where(col_valid, sim, _NEG_INF)

    row_max = jnp.max(sim, axis=1, keepdims=True)
    sim = sim - row_max
    log_prob = sim - jnp.log(jnp.sum(jnp.exp(sim), axis=1, keepdims=True))

    label_mask = jnp.logical_and(lab_col == lab_row, col_valid).astype(jnp.float32)
    denom = jnp.sum(label_mask, axis=1, keepdims=True)        # >= 1 for valid rows
    per_label = (jnp.sum(log_prob * label_mask, axis=1, keepdims=True)
                 / jnp.maximum(denom, 1.0))                   # (NP, 1)

    keep = (iou_ref[...] >= IOU_THRESHOLD).astype(jnp.float32)   # padded -> 0
    # reweight_type == 'none' -> coefficient = 1
    loss_vec = -per_label * keep

    total = jnp.sum(loss_vec, keepdims=True)                  # (1, 1)
    n_keep = jnp.sum(keep, keepdims=True)                     # (1, 1)
    # 'mean' over kept rows; torch returns 0 when keep.sum() == 0
    mean_loss = jnp.where(n_keep > 0.0,
                          total / jnp.maximum(n_keep, 1.0),
                          jnp.zeros_like(total))
    out_ref[...] = LOSS_WEIGHT * mean_loss


# ----------------------------------------------------------------------------
# Wrapper
# ----------------------------------------------------------------------------
def contrastive_loss(features, prototypes, labels, ious, w1, b1, w2, b2):
    """features: (N, 1024) f32, prototypes: (num_classes, 1024) f32,
    labels: (N,) int in [0, num_classes] (== num_classes means 'own feature'),
    ious: (N,) f32."""
    n = features.shape[0]
    num_classes = prototypes.shape[0]
    # TODO(synk): the torch early-return for features.shape[0] == 0 is a
    # dynamic-shape path; here N is static and assumed > 0.

    # prototypes_expand gather (label == num_classes -> sample's own feature),
    # plain JAX glue outside the kernel.
    idx = jnp.clip(labels, 0, num_classes - 1)
    gathered = prototypes[idx]
    use_self = (labels == num_classes)[:, None]
    prototypes_expand = jnp.where(use_self, features, gathered)

    # pad rows to a sublane multiple so the in-kernel f/p slices stay aligned
    n_pad = ((n + 7) // 8) * 8
    pad = n_pad - n

    feats_p = jnp.pad(features.astype(jnp.float32), ((0, pad), (0, 0)))
    protos_p = jnp.pad(prototypes_expand.astype(jnp.float32), ((0, pad), (0, 0)))
    # single concatenated batch -> head weights DMA'd from HBM once and MXU
    # weight registers loaded once per linear
    x_cat = jnp.concatenate([feats_p, protos_p], axis=0).astype(jnp.bfloat16)

    lab_p = jnp.pad(labels.astype(jnp.int32), (0, pad), constant_values=-1)
    iou_p = jnp.pad(ious.astype(jnp.float32), (0, pad), constant_values=-1.0)

    lab_col = lab_p[:, None]                 # (n_pad, 1)
    lab_row = lab_p[None, :]                 # (1, n_pad)  (no in-kernel .T)
    iou2d = iou_p[:, None]                   # (n_pad, 1)

    w1b = w1.astype(jnp.bfloat16)
    w2b = w2.astype(jnp.bfloat16)
    b1f = b1.reshape(1, FC_OUT).astype(jnp.float32)
    b2f = b2.reshape(1, MLP_HEAD).astype(jnp.float32)

    m = 2 * n_pad
    flops = (2 * m * FC_OUT * FC_OUT            # first linear
             + 2 * m * FC_OUT * MLP_HEAD        # second linear
             + 2 * n_pad * n_pad * MLP_HEAD)    # similarity matmul
    transcendentals = n_pad * n_pad + 2 * n_pad + m
    bytes_accessed = (x_cat.size * 2 + w1b.size * 2 + w2b.size * 2
                      + b1f.size * 4 + b2f.size * 4
                      + (lab_col.size + lab_row.size) * 4 + iou2d.size * 4 + 4)

    vmem = pl.BlockSpec(memory_space=pltpu.MemorySpace.VMEM)
    loss = pl.pallas_call(
        _fused_loss_kernel,
        out_shape=jax.ShapeDtypeStruct((1, 1), jnp.float32),
        in_specs=[vmem] * 8,
        out_specs=vmem,
        compiler_params=pltpu.CompilerParams(
            vmem_limit_bytes=32 * 1024 * 1024),   # safe on v7x's 64 MiB VMEM too
        cost_estimate=pl.CostEstimate(
            flops=flops, transcendentals=transcendentals,
            bytes_accessed=bytes_accessed),
    )(x_cat, w1b, b1f, w2b, b2f, lab_col, lab_row, iou2d)
    # TODO(synk): for very large proposal counts, tile the head over rows with
    # resident weights and tile the NxN loss over query rows (v7x 64 MiB VMEM);
    # unnecessary at current sizes.
    return loss[0, 0]


# ----------------------------------------------------------------------------
# Pure-JAX references (sanity checks)
# ----------------------------------------------------------------------------
def _ref_loss(features, prototypes, labels, ious, w1, b1, w2, b2, matmul_dtype):
    num_classes = prototypes.shape[0]
    idx = jnp.clip(labels, 0, num_classes - 1)
    pe = jnp.where((labels == num_classes)[:, None], features, prototypes[idx])

    def head(x):
        xm = x.astype(matmul_dtype)
        h = jnp.dot(xm, w1.astype(matmul_dtype),
                    preferred_element_type=jnp.float32) + b1.reshape(1, -1)
        h = jnp.maximum(h, 0.0)
        z = jnp.dot(h.astype(matmul_dtype), w2.astype(matmul_dtype),
                    preferred_element_type=jnp.float32) + b2.reshape(1, -1)
        return z / jnp.maximum(jnp.linalg.norm(z, axis=1, keepdims=True), 1e-12)

    f = head(features)
    p = head(pe)
    sim = f @ p.T / TEMPERATURE
    sim = sim - sim.max(axis=1, keepdims=True)
    log_prob = sim - jnp.log(jnp.exp(sim).sum(axis=1, keepdims=True))
    lm = (labels[:, None] == labels[None, :]).astype(jnp.float32)
    pll = (log_prob * lm).sum(1) / lm.sum(1)
    keep = (ious >= IOU_THRESHOLD).astype(jnp.float32)
    nk = keep.sum()
    return LOSS_WEIGHT * jnp.where(
        nk > 0, (-pll * keep).sum() / jnp.maximum(nk, 1.0), 0.0)


if __name__ == "__main__":
    key = jax.random.PRNGKey(0)
    k_feat, k_proto, k_lab, k_iou, k_w1, k_b1, k_w2, k_b2 = jax.random.split(key, 8)

    N = 8             # number of proposals
    NUM_CLASSES = 4   # len(prototypes)

    features = jax.random.normal(k_feat, (N, FC_OUT), jnp.float32)
    prototypes = jax.random.normal(k_proto, (NUM_CLASSES, FC_OUT), jnp.float32)
    # labels in [0, NUM_CLASSES]; value NUM_CLASSES means "use own feature"
    labels = jax.random.randint(k_lab, (N,), 0, NUM_CLASSES + 1)
    ious = jax.random.uniform(k_iou, (N,), jnp.float32)

    # deterministic synthetic contrastive_head parameters
    w1 = 0.02 * jax.random.normal(k_w1, (FC_OUT, FC_OUT), jnp.float32)
    b1 = 0.02 * jax.random.normal(k_b1, (1, FC_OUT), jnp.float32)
    w2 = 0.02 * jax.random.normal(k_w2, (FC_OUT, MLP_HEAD), jnp.float32)
    b2 = 0.02 * jax.random.normal(k_b2, (1, MLP_HEAD), jnp.float32)

    loss = contrastive_loss(features, prototypes, labels, ious, w1, b1, w2, b2)
    jax.block_until_ready(loss)

    # same-math reference (bf16 matmul operands, f32 accumulation) -> tight
    ref_bf16 = _ref_loss(features, prototypes, labels, ious,
                         w1, b1, w2, b2, jnp.bfloat16)
    # full-f32 reference -> loose sanity on bf16 operand precision
    ref_f32 = _ref_loss(features, prototypes, labels, ious,
                        w1, b1, w2, b2, jnp.float32)

    assert jnp.allclose(loss, ref_bf16, rtol=1e-3, atol=1e-4), (loss, ref_bf16)
    assert jnp.allclose(loss, ref_f32, rtol=1e-1, atol=1e-2), (loss, ref_f32)

    print("KERNEL_OK")
</pallas_src>

<mosaic_0001>
module attributes {stable_mosaic.version = 11 : i64} {
  func.func @_fused_loss_kernel(%arg0: memref<16x1024xbf16, #tpu.memory_space<vmem>>, %arg1: memref<1024x1024xbf16, #tpu.memory_space<vmem>>, %arg2: memref<1x1024xf32, #tpu.memory_space<vmem>>, %arg3: memref<1024x256xbf16, #tpu.memory_space<vmem>>, %arg4: memref<1x256xf32, #tpu.memory_space<vmem>>, %arg5: memref<8x1xi32, #tpu.memory_space<vmem>>, %arg6: memref<1x8xi32, #tpu.memory_space<vmem>>, %arg7: memref<8x1xf32, #tpu.memory_space<vmem>>, %arg8: memref<1x1xf32, #tpu.memory_space<vmem>>) attributes {dimension_semantics = [], scalar_prefetch = 0 : i64, scratch_operands = 0 : i64, tpu.core_type = #tpu.core_type<tc>} {
    %c0 = arith.constant 0 : index
    %c0_0 = arith.constant 0 : index
    %0 = vector.load %arg0[%c0, %c0_0] : memref<16x1024xbf16, #tpu.memory_space<vmem>>, vector<16x1024xbf16>
    %c0_1 = arith.constant 0 : index
    %c0_2 = arith.constant 0 : index
    %1 = vector.load %arg1[%c0_1, %c0_2] : memref<1024x1024xbf16, #tpu.memory_space<vmem>>, vector<1024x1024xbf16>
    %cst = arith.constant dense<0.000000e+00> : vector<16x1024xf32>
    %2 = tpu.matmul %0, %1, %cst {dimension_numbers = #tpu.dot_dimension_numbers<[1], [0], [0], [1], [0, 0, 1, 1], [], []>} : vector<16x1024xbf16>, vector<1024x1024xbf16>, vector<16x1024xf32> -> vector<16x1024xf32>
    %c0_3 = arith.constant 0 : index
    %c0_4 = arith.constant 0 : index
    %3 = vector.load %arg2[%c0_3, %c0_4] : memref<1x1024xf32, #tpu.memory_space<vmem>>, vector<1x1024xf32>
    %4 = vector.broadcast %3 : vector<1x1024xf32> to vector<16x1024xf32>
    %5 = arith.addf %2, %4 : vector<16x1024xf32>
    %cst_5 = arith.constant 0.000000e+00 : f32
    %6 = vector.broadcast %cst_5 : f32 to vector<16x1024xf32>
    %7 = arith.maximumf %5, %6 : vector<16x1024xf32>
    %8 = arith.truncf %7 : vector<16x1024xf32> to vector<16x1024xbf16>
    %c0_6 = arith.constant 0 : index
    %c0_7 = arith.constant 0 : index
    %9 = vector.load %arg3[%c0_6, %c0_7] : memref<1024x256xbf16, #tpu.memory_space<vmem>>, vector<1024x256xbf16>
    %cst_8 = arith.constant dense<0.000000e+00> : vector<16x256xf32>
    %10 = tpu.matmul %8, %9, %cst_8 {dimension_numbers = #tpu.dot_dimension_numbers<[1], [0], [0], [1], [0, 0, 1, 1], [], []>} : vector<16x1024xbf16>, vector<1024x256xbf16>, vector<16x256xf32> -> vector<16x256xf32>
    %c0_9 = arith.constant 0 : index
    %c0_10 = arith.constant 0 : index
    %11 = vector.load %arg4[%c0_9, %c0_10] : memref<1x256xf32, #tpu.memory_space<vmem>>, vector<1x256xf32>
    %12 = vector.broadcast %11 : vector<1x256xf32> to vector<16x256xf32>
    %13 = arith.addf %10, %12 : vector<16x256xf32>
    %14 = arith.mulf %13, %13 : vector<16x256xf32>
    %cst_11 = arith.constant dense<0.000000e+00> : vector<16xf32>
    %15 = vector.multi_reduction <add>, %14, %cst_11 [1] : vector<16x256xf32> to vector<16xf32>
    %16 = vector.shape_cast %15 : vector<16xf32> to vector<16x1xf32>
    %cst_12 = arith.constant 1.000000e-24 : f32
    %17 = vector.broadcast %cst_12 : f32 to vector<16x1xf32>
    %18 = arith.maximumf %16, %17 : vector<16x1xf32>
    %19 = math.rsqrt %18 : vector<16x1xf32>
    %20 = vector.broadcast %19 : vector<16x1xf32> to vector<16x256xf32>
    %21 = arith.mulf %13, %20 : vector<16x256xf32>
    %22 = vector.extract_strided_slice %21 {offsets = [0, 0], sizes = [8, 256], strides = [1, 1]} : vector<16x256xf32> to vector<8x256xf32>
    %23 = vector.extract_strided_slice %21 {offsets = [8, 0], sizes = [8, 256], strides = [1, 1]} : vector<16x256xf32> to vector<8x256xf32>
    %cst_13 = arith.constant dense<0.000000e+00> : vector<8x8xf32>
    %24 = tpu.matmul %22, %23, %cst_13 {dimension_numbers = #tpu.dot_dimension_numbers<[1], [1], [0], [0], [0, 0, 1, 0], [], []>} : vector<8x256xf32>, vector<8x256xf32>, vector<8x8xf32> -> vector<8x8xf32>
    %cst_14 = arith.constant 2.000000e-01 : f32
    %25 = vector.broadcast %cst_14 : f32 to vector<8x8xf32>
    %26 = arith.divf %24, %25 : vector<8x8xf32>
    %c0_15 = arith.constant 0 : index
    %c0_16 = arith.constant 0 : index
    %27 = vector.load %arg5[%c0_15, %c0_16] : memref<8x1xi32, #tpu.memory_space<vmem>>, vector<8x1xi32>
    %c0_17 = arith.constant 0 : index
    %c0_18 = arith.constant 0 : index
    %28 = vector.load %arg6[%c0_17, %c0_18] : memref<1x8xi32, #tpu.memory_space<vmem>>, vector<1x8xi32>
    %c0_i32 = arith.constant 0 : i32
    %29 = vector.broadcast %c0_i32 : i32 to vector<1x8xi32>
    %30 = arith.cmpi sge, %28, %29 : vector<1x8xi32>
    %cst_19 = arith.constant -1.000000e+30 : f32
    %31 = vector.shape_cast %30 : vector<1x8xi1> to vector<1x8xi1>
    %32 = vector.broadcast %31 : vector<1x8xi1> to vector<8x8xi1>
    %33 = vector.broadcast %cst_19 : f32 to vector<8x8xf32>
    %34 = arith.select %32, %26, %33 : vector<8x8xi1>, vector<8x8xf32>
    %cst_20 = arith.constant dense<0xFF800000> : vector<8xf32>
    %35 = vector.multi_reduction <maximumf>, %34, %cst_20 [1] : vector<8x8xf32> to vector<8xf32>
    %36 = vector.shape_cast %35 : vector<8xf32> to vector<8x1xf32>
    %37 = vector.broadcast %36 : vector<8x1xf32> to vector<8x8xf32>
    %38 = arith.subf %34, %37 : vector<8x8xf32>
    %39 = math.exp %38 : vector<8x8xf32>
    %cst_21 = arith.constant dense<0.000000e+00> : vector<8xf32>
    %40 = vector.multi_reduction <add>, %39, %cst_21 [1] : vector<8x8xf32> to vector<8xf32>
    %41 = vector.shape_cast %40 : vector<8xf32> to vector<8x1xf32>
    %42 = math.log %41 : vector<8x1xf32>
    %43 = vector.broadcast %42 : vector<8x1xf32> to vector<8x8xf32>
    %44 = arith.subf %38, %43 : vector<8x8xf32>
    %45 = vector.broadcast %27 : vector<8x1xi32> to vector<8x8xi32>
    %46 = vector.broadcast %28 : vector<1x8xi32> to vector<8x8xi32>
    %47 = arith.cmpi eq, %45, %46 : vector<8x8xi32>
    %48 = vector.broadcast %30 : vector<1x8xi1> to vector<8x8xi1>
    %49 = arith.andi %47, %48 : vector<8x8xi1>
    %50 = arith.extui %49 : vector<8x8xi1> to vector<8x8xi32>
    %51 = arith.sitofp %50 : vector<8x8xi32> to vector<8x8xf32>
    %cst_22 = arith.constant dense<0.000000e+00> : vector<8xf32>
    %52 = vector.multi_reduction <add>, %51, %cst_22 [1] : vector<8x8xf32> to vector<8xf32>
    %53 = vector.shape_cast %52 : vector<8xf32> to vector<8x1xf32>
    %54 = arith.mulf %44, %51 : vector<8x8xf32>
    %cst_23 = arith.constant dense<0.000000e+00> : vector<8xf32>
    %55 = vector.multi_reduction <add>, %54, %cst_23 [1] : vector<8x8xf32> to vector<8xf32>
    %56 = vector.shape_cast %55 : vector<8xf32> to vector<8x1xf32>
    %cst_24 = arith.constant 1.000000e+00 : f32
    %57 = vector.broadcast %cst_24 : f32 to vector<8x1xf32>
    %58 = arith.maximumf %53, %57 : vector<8x1xf32>
    %59 = arith.divf %56, %58 : vector<8x1xf32>
    %c0_25 = arith.constant 0 : index
    %c0_26 = arith.constant 0 : index
    %60 = vector.load %arg7[%c0_25, %c0_26] : memref<8x1xf32, #tpu.memory_space<vmem>>, vector<8x1xf32>
    %cst_27 = arith.constant 5.000000e-01 : f32
    %61 = vector.broadcast %cst_27 : f32 to vector<8x1xf32>
    %62 = arith.cmpf oge, %60, %61 : vector<8x1xf32>
    %63 = arith.extui %62 : vector<8x1xi1> to vector<8x1xi32>
    %64 = arith.sitofp %63 : vector<8x1xi32> to vector<8x1xf32>
    %cst_28 = arith.constant 0.000000e+00 : f32
    %65 = vector.broadcast %cst_28 : f32 to vector<8x1xf32>
    %66 = arith.subf %65, %59 : vector<8x1xf32>
    %67 = arith.mulf %66, %64 : vector<8x1xf32>
    %68 = vector.shape_cast %67 : vector<8x1xf32> to vector<1x8x1xf32>
    %cst_29 = arith.constant dense<0.000000e+00> : vector<1xf32>
    %69 = vector.multi_reduction <add>, %68, %cst_29 [1, 2] : vector<1x8x1xf32> to vector<1xf32>
    %70 = vector.shape_cast %69 : vector<1xf32> to vector<1x1x1xf32>
    %71 = vector.extract %70[0, 0, 0] : f32 from vector<1x1x1xf32>
    %72 = vector.broadcast %71 : f32 to vector<1x1xf32>
    %73 = vector.shape_cast %64 : vector<8x1xf32> to vector<1x8x1xf32>
    %cst_30 = arith.constant dense<0.000000e+00> : vector<1xf32>
    %74 = vector.multi_reduction <add>, %73, %cst_30 [1, 2] : vector<1x8x1xf32> to vector<1xf32>
    %75 = vector.shape_cast %74 : vector<1xf32> to vector<1x1x1xf32>
    %76 = vector.extract %75[0, 0, 0] : f32 from vector<1x1x1xf32>
    %77 = vector.broadcast %76 : f32 to vector<1x1xf32>
    %cst_31 = arith.constant 0.000000e+00 : f32
    %78 = vector.broadcast %cst_31 : f32 to vector<1x1xf32>
    %79 = arith.cmpf ogt, %77, %78 : vector<1x1xf32>
    %cst_32 = arith.constant 1.000000e+00 : f32
    %80 = vector.broadcast %cst_32 : f32 to vector<1x1xf32>
    %81 = arith.maximumf %77, %80 : vector<1x1xf32>
    %82 = arith.divf %72, %81 : vector<1x1xf32>
    %cst_33 = arith.constant 0.000000e+00 : f32
    %83 = vector.broadcast %cst_33 : f32 to vector<1x1xf32>
    %84 = arith.select %79, %82, %83 : vector<1x1xi1>, vector<1x1xf32>
    %cst_34 = arith.constant 1.000000e+00 : f32
    %85 = vector.broadcast %cst_34 : f32 to vector<1x1xf32>
    %86 = arith.mulf %85, %84 : vector<1x1xf32>
    %c0_35 = arith.constant 0 : index
    %c0_36 = arith.constant 0 : index
    %87 = vector.load %arg8[%c0_35, %c0_36] : memref<1x1xf32, #tpu.memory_space<vmem>>, vector<1x1xf32>
    tpu.vector_store %arg8[%c0_35, %c0_36], %86 {strides = array<i32>} : memref<1x1xf32, #tpu.memory_space<vmem>>, vector<1x1xf32>,
    return
  }
}

</mosaic_0001>

<llo_original>
// kernel: tpu_custom_call.1
$region0: #{tpu_custom_call.1}
  #allocation0 [shape = 'u32[]', space=smem, size = 0x4, offset = 0x4, fixed_abs, tag = 'smem constant byte address 0x4 - core index']
  #allocation1 [shape = 'u32[144,128]{1,0:T(1,128)}', space=vmem, size = 0x12000, scoped, tag = 'internal scratch']
  %s0 = inlined_call_operand.hbm [shape: bf16[16,1024], index: 0, kind: input, shape index: {}]
  %s1 = inlined_call_operand.hbm [shape: bf16[1024,1024], index: 1, kind: input, shape index: {}]
  %s2 = inlined_call_operand.hbm [shape: f32[1,1024], index: 2, kind: input, shape index: {}]
  %s3 = inlined_call_operand.hbm [shape: bf16[1024,256], index: 3, kind: input, shape index: {}]
  %s4 = inlined_call_operand.hbm [shape: f32[1,256], index: 4, kind: input, shape index: {}]
  %s5 = inlined_call_operand.vmem [shape: s32[8,1], index: 5, kind: input, shape index: {}]
  %s6 = inlined_call_operand.hbm [shape: s32[1,8], index: 6, kind: input, shape index: {}]
  %s7 = inlined_call_operand.vmem [shape: f32[8,1], index: 7, kind: input, shape index: {}]
  %s8 = inlined_call_operand.hbm [shape: f32[1,1], index: 8, kind: output, shape index: {}]
  %s9 = sld [smem:[#allocation0]]
  $region66: #{tpu_custom_call.1} parent=0
    _
  %s11 = ssub.s32 1, %s9
  %s12 = scalar_select 0, %s11, %s9
  $region1: #{tpu_custom_call.1} parent=0
    #allocation2 [shape = 'u8[32768]{0}', space=vmem, size = 0x8000, scoped, tag = 'input window, operand 0, single buffered']
    #allocation3 [shape = 's32[1]{0}', space=sflag, size = 0x4, scoped, tag = 'scoped memory for tpu_custom_call.1']
    #allocation4 [shape = 's32[1]{0}', space=sflag, size = 0x4, scoped, tag = 'scoped memory for tpu_custom_call.1']
    #allocation5 [shape = 'u8[2097152]{0}', space=vmem, size = 0x200000, scoped, tag = 'input window, operand 1, single buffered']
    #allocation6 [shape = 's32[1]{0}', space=sflag, size = 0x4, scoped, tag = 'scoped memory for tpu_custom_call.1']
    #allocation7 [shape = 'u8[4096]{0}', space=vmem, size = 0x1000, scoped, tag = 'input window, operand 2, single buffered']
    #allocation8 [shape = 'u8[524288]{0}', space=vmem, size = 0x80000, scoped, tag = 'input window, operand 3, single buffered']
    #allocation9 [shape = 's32[1]{0}', space=sflag, size = 0x4, scoped, tag = 'scoped memory for tpu_custom_call.1']
    #allocation10 [shape = 'u8[1024]{0}', space=vmem, size = 0x400, scoped, tag = 'input window, operand 4, single buffered']
    #allocation11 [shape = 'u8[512]{0}', space=vmem, size = 0x400, scoped, tag = 'input window, operand 6, single buffered']
    #allocation12 [shape = 's32[1]{0}', space=sflag, size = 0x4, scoped, tag = 'scoped memory for tpu_custom_call.1']
    #allocation13 [shape = 'u8[512]{0}', space=vmem, size = 0x400, scoped, tag = 'output window, operand 0, single buffered']
    %13 = vsyncpa [#allocation3], 0
    %14 = vsyncpa [#allocation6], 0
    %15 = vsyncpa [#allocation9], 0
    %16 = vsyncpa [#allocation12], 0
    %17 = vsyncpa [#allocation4], 0
    // Predicated region
    $region2: #{tpu_custom_call.1} parent=1 // pred_check
      _
    $region3: #{tpu_custom_call.1} parent=1 // pred_check_branch
      %19 = sbr.rel (0) target = $region5
    $region4: #{tpu_custom_call.1} parent=1 // pred_region
      %s21 = ssub.s32 1024, 1024
      %22 = vsyncadd [#allocation3], %s21
      %s23 = sshll.u32 [#allocation2], 4
      %s24 = int_to_ptr.vmem [resolvable:$true] %s23
      %29 = dma.hbm_to_vmem [thread:$0]  %s0, 1024, %s24, [#allocation3], 512, 512, 32
    $region5: #{tpu_custom_call.1} parent=1 // pred_fallthru
      _
    // Predicated region
    $region6: #{tpu_custom_call.1} parent=1 // pred_check
      _
    $region7: #{tpu_custom_call.1} parent=1 // pred_check_branch
      %31 = sbr.rel (0) target = $region9
    $region8: #{tpu_custom_call.1} parent=1 // pred_region
      %s33 = ssub.s32 65536, 65536
      %34 = vsyncadd [#allocation6], %s33
      %s35 = sshll.u32 [#allocation5], 4
      %s36 = int_to_ptr.vmem [resolvable:$true] %s35
      %41 = dma.hbm_to_vmem [thread:$0]  %s1, 65536, %s36, [#allocation6], 512, 512, 32
    $region9: #{tpu_custom_call.1} parent=1 // pred_fallthru
      _
    // Predicated region
    $region10: #{tpu_custom_call.1} parent=1 // pred_check
      _
    $region11: #{tpu_custom_call.1} parent=1 // pred_check_branch
      %43 = sbr.rel (0) target = $region13
    $region12: #{tpu_custom_call.1} parent=1 // pred_region
      %s45 = ssub.s32 128, 128
      %46 = vsyncadd [#allocation6], %s45
      %s48 = sshll.u32 [#allocation7], 4
      %s49 = int_to_ptr.vmem [resolvable:$true] %s48
      %51 = dma.hbm_to_vmem [thread:$0]  %s2, 128, %s49, [#allocation6]
    $region13: #{tpu_custom_call.1} parent=1 // pred_fallthru
      _
    // Predicated region
    $region14: #{tpu_custom_call.1} parent=1 // pred_check
      _
    $region15: #{tpu_custom_call.1} parent=1 // pred_check_branch
      %53 = sbr.rel (0) target = $region17
    $region16: #{tpu_custom_call.1} parent=1 // pred_region
      %s55 = ssub.s32 16384, 16384
      %56 = vsyncadd [#allocation9], %s55
      %s57 = sshll.u32 [#allocation8], 4
      %s58 = int_to_ptr.vmem [resolvable:$true] %s57
      %63 = dma.hbm_to_vmem [thread:$0]  %s3, 16384, %s58, [#allocation9], 128, 128, 8
    $region17: #{tpu_custom_call.1} parent=1 // pred_fallthru
      _
    // Predicated region
    $region18: #{tpu_custom_call.1} parent=1 // pred_check
      _
    $region19: #{tpu_custom_call.1} parent=1 // pred_check_branch
      %65 = sbr.rel (0) target = $region21
    $region20: #{tpu_custom_call.1} parent=1 // pred_region
      %s67 = ssub.s32 32, 32
      %68 = vsyncadd [#allocation9], %s67
      %s70 = sshll.u32 [#allocation10], 4
      %s71 = int_to_ptr.vmem [resolvable:$true] %s70
      %73 = dma.hbm_to_vmem [thread:$0]  %s4, 32, %s71, [#allocation9]
    $region21: #{tpu_custom_call.1} parent=1 // pred_fallthru
      _
    // Predicated region
    $region22: #{tpu_custom_call.1} parent=1 // pred_check
      _
    $region23: #{tpu_custom_call.1} parent=1 // pred_check_branch
      %75 = sbr.rel (0) target = $region25
    $region24: #{tpu_custom_call.1} parent=1 // pred_region
      _
    $region25: #{tpu_custom_call.1} parent=1 // pred_fallthru
      _
    // Predicated region
    $region26: #{tpu_custom_call.1} parent=1 // pred_check
      _
    $region27: #{tpu_custom_call.1} parent=1 // pred_check_branch
      %77 = sbr.rel (0) target = $region29
    $region28: #{tpu_custom_call.1} parent=1 // pred_region
      %s79 = ssub.s32 16, 16
      %80 = vsyncadd [#allocation12], %s79
      %s82 = sshll.u32 [#allocation11], 4
      %s83 = int_to_ptr.vmem [resolvable:$true] %s82
      %85 = dma.hbm_to_vmem [thread:$0]  %s6, 16, %s83, [#allocation12]
    $region29: #{tpu_custom_call.1} parent=1 // pred_fallthru
      _
    // Predicated region
    $region30: #{tpu_custom_call.1} parent=1 // pred_check
      _
    $region31: #{tpu_custom_call.1} parent=1 // pred_check_branch
      %87 = sbr.rel (0) target = $region33
    $region32: #{tpu_custom_call.1} parent=1 // pred_region
      _
    $region33: #{tpu_custom_call.1} parent=1 // pred_fallthru
      _
    // Predicated region
    $region34: #{tpu_custom_call.1} parent=1 // pred_check
      _
    $region35: #{tpu_custom_call.1} parent=1 // pred_check_branch
      %89 = sbr.rel (0) target = $region37
    $region36: #{tpu_custom_call.1} parent=1 // pred_region
      %90 = dma.done [#allocation3], 1024
    $region37: #{tpu_custom_call.1} parent=1 // pred_fallthru
      _
    // Predicated region
    $region38: #{tpu_custom_call.1} parent=1 // pred_check
      _
    $region39: #{tpu_custom_call.1} parent=1 // pred_check_branch
      %92 = sbr.rel (0) target = $region41
    $region40: #{tpu_custom_call.1} parent=1 // pred_region
      %93 = dma.done [#allocation6], 65536
    $region41: #{tpu_custom_call.1} parent=1 // pred_fallthru
      _
    // Predicated region
    $region42: #{tpu_custom_call.1} parent=1 // pred_check
      _
    $region43: #{tpu_custom_call.1} parent=1 // pred_check_branch
      %95 = sbr.rel (0) target = $region45
    $region44: #{tpu_custom_call.1} parent=1 // pred_region
      %96 = dma.done [#allocation6], 128
    $region45: #{tpu_custom_call.1} parent=1 // pred_fallthru
      _
    // Predicated region
    $region46: #{tpu_custom_call.1} parent=1 // pred_check
      _
    $region47: #{tpu_custom_call.1} parent=1 // pred_check_branch
      %98 = sbr.rel (0) target = $region49
    $region48: #{tpu_custom_call.1} parent=1 // pred_region
      %99 = dma.done [#allocation9], 16384
    $region49: #{tpu_custom_call.1} parent=1 // pred_fallthru
      _
    // Predicated region
    $region50: #{tpu_custom_call.1} parent=1 // pred_check
      _
    $region51: #{tpu_custom_call.1} parent=1 // pred_check_branch
      %101 = sbr.rel (0) target = $region53
    $region52: #{tpu_custom_call.1} parent=1 // pred_region
      %102 = dma.done [#allocation9], 32
    $region53: #{tpu_custom_call.1} parent=1 // pred_fallthru
      _
    // Predicated region
    $region54: #{tpu_custom_call.1} parent=1 // pred_check
      _
    $region55: #{tpu_custom_call.1} parent=1 // pred_check_branch
      %104 = sbr.rel (0) target = $region57
    $region56: #{tpu_custom_call.1} parent=1 // pred_region
      %105 = dma.done [#allocation12], 16
    $region57: #{tpu_custom_call.1} parent=1 // pred_fallthru
      _
    %v106 = vld [vmem:[#allocation2] sm:$0xff]
    %v107 = vld [vmem:[#allocation2 + $0x8] sm:$0xff]
    %v108 = vld [vmem:[#allocation2 + $0x10] sm:$0xff]
    %v109 = vld [vmem:[#allocation2 + $0x18] sm:$0xff]
    %v110 = vld [vmem:[#allocation2 + $0x20] sm:$0xff]
    %v111 = vld [vmem:[#allocation2 + $0x28] sm:$0xff]
    %v112 = vld [vmem:[#allocation2 + $0x30] sm:$0xff]
    %v113 = vld [vmem:[#allocation2 + $0x38] sm:$0xff]
    %v114 = vld [vmem:[#allocation5] sm:$0xff]
    %v115 = vld [vmem:[#allocation5 + $0x8] sm:$0xff]
    %v116 = vld [vmem:[#allocation5 + $0x10] sm:$0xff]
    %v117 = vld [vmem:[#allocation5 + $0x18] sm:$0xff]
    %v118 = vld [vmem:[#allocation5 + $0x20] sm:$0xff]
    %v119 = vld [vmem:[#allocation5 + $0x28] sm:$0xff]
    %v120 = vld [vmem:[#allocation5 + $0x30] sm:$0xff]
    %v121 = vld [vmem:[#allocation5 + $0x38] sm:$0xff]
    %v122 = vld [vmem:[#allocation5 + $0x40] sm:$0xff]
    %v123 = vld [vmem:[#allocation5 + $0x48] sm:$0xff]
    %v124 = vld [vmem:[#allocation5 + $0x50] sm:$0xff]
    %v125 = vld [vmem:[#allocation5 + $0x58] sm:$0xff]
    %v126 = vld [vmem:[#allocation5 + $0x60] sm:$0xff]
    %v127 = vld [vmem:[#allocation5 + $0x68] sm:$0xff]
    %v128 = vld [vmem:[#allocation5 + $0x70] sm:$0xff]
    %v129 = vld [vmem:[#allocation5 + $0x78] sm:$0xff]
    %v130 = vld [vmem:[#allocation5 + $0x80] sm:$0xff]
    %v131 = vld [vmem:[#allocation5 + $0x88] sm:$0xff]
    %v132 = vld [vmem:[#allocation5 + $0x90] sm:$0xff]
    %v133 = vld [vmem:[#allocation5 + $0x98] sm:$0xff]
    %v134 = vld [vmem:[#allocation5 + $0xa0] sm:$0xff]
    %v135 = vld [vmem:[#allocation5 + $0xa8] sm:$0xff]
    %v136 = vld [vmem:[#allocation5 + $0xb0] sm:$0xff]
    %v137 = vld [vmem:[#allocation5 + $0xb8] sm:$0xff]
    %v138 = vld [vmem:[#allocation5 + $0xc0] sm:$0xff]
    %v139 = vld [vmem:[#allocation5 + $0xc8] sm:$0xff]
    %v140 = vld [vmem:[#allocation5 + $0xd0] sm:$0xff]
    %v141 = vld [vmem:[#allocation5 + $0xd8] sm:$0xff]
    %v142 = vld [vmem:[#allocation5 + $0xe0] sm:$0xff]
    %v143 = vld [vmem:[#allocation5 + $0xe8] sm:$0xff]
    %v144 = vld [vmem:[#allocation5 + $0xf0] sm:$0xff]
    %v145 = vld [vmem:[#allocation5 + $0xf8] sm:$0xff]
    %v146 = vld [vmem:[#allocation5 + $0x100] sm:$0xff]
    %v147 = vld [vmem:[#allocation5 + $0x108] sm:$0xff]
    %v148 = vld [vmem:[#allocation5 + $0x110] sm:$0xff]
    %v149 = vld [vmem:[#allocation5 + $0x118] sm:$0xff]
    %v150 = vld [vmem:[#allocation5 + $0x120] sm:$0xff]
    %v151 = vld [vmem:[#allocation5 + $0x128] sm:$0xff]
    %v152 = vld [vmem:[#allocation5 + $0x130] sm:$0xff]
    %v153 = vld [vmem:[#allocation5 + $0x138] sm:$0xff]
    %v154 = vld [vmem:[#allocation5 + $0x140] sm:$0xff]
    %v155 = vld [vmem:[#allocation5 + $0x148] sm:$0xff]
    %v156 = vld [vmem:[#allocation5 + $0x150] sm:$0xff]
    %v157 = vld [vmem:[#allocation5 + $0x158] sm:$0xff]
    %v158 = vld [vmem:[#allocation5 + $0x160] sm:$0xff]
    %v159 = vld [vmem:[#allocation5 + $0x168] sm:$0xff]
    %v160 = vld [vmem:[#allocation5 + $0x170] sm:$0xff]
    %v161 = vld [vmem:[#allocation5 + $0x178] sm:$0xff]
    %v162 = vld [vmem:[#allocation5 + $0x180] sm:$0xff]
    %v163 = vld [vmem:[#allocation5 + $0x188] sm:$0xff]
    %v164 = vld [vmem:[#allocation5 + $0x190] sm:$0xff]
    %v165 = vld [vmem:[#allocation5 + $0x198] sm:$0xff]
    %v166 = vld [vmem:[#allocation5 + $0x1a0] sm:$0xff]
    %v167 = vld [vmem:[#allocation5 + $0x1a8] sm:$0xff]
    %v168 = vld [vmem:[#allocation5 + $0x1b0] sm:$0xff]
    %v169 = vld [vmem:[#allocation5 + $0x1b8] sm:$0xff]
    %v170 = vld [vmem:[#allocation5 + $0x1c0] sm:$0xff]
    %v171 = vld [vmem:[#allocation5 + $0x1c8] sm:$0xff]
    %v172 = vld [vmem:[#allocation5 + $0x1d0] sm:$0xff]
    %v173 = vld [vmem:[#allocation5 + $0x1d8] sm:$0xff]
    %v174 = vld [vmem:[#allocation5 + $0x1e0] sm:$0xff]
    %v175 = vld [vmem:[#allocation5 + $0x1e8] sm:$0xff]
    %v176 = vld [vmem:[#allocation5 + $0x1f0] sm:$0xff]
    %v177 = vld [vmem:[#allocation5 + $0x1f8] sm:$0xff]
    %v178 = vld [vmem:[#allocation5 + $0x200] sm:$0xff]
    %v179 = vld [vmem:[#allocation5 + $0x208] sm:$0xff]
    %v180 = vld [vmem:[#allocation5 + $0x210] sm:$0xff]
    %v181 = vld [vmem:[#allocation5 + $0x218] sm:$0xff]
    %v182 = vld [vmem:[#allocation5 + $0x220] sm:$0xff]
    %v183 = vld [vmem:[#allocation5 + $0x228] sm:$0xff]
    %v184 = vld [vmem:[#allocation5 + $0x230] sm:$0xff]
    %v185 = vld [vmem:[#allocation5 + $0x238] sm:$0xff]
    %v186 = vld [vmem:[#allocation5 + $0x240] sm:$0xff]
    %v187 = vld [vmem:[#allocation5 + $0x248] sm:$0xff]
    %v188 = vld [vmem:[#allocation5 + $0x250] sm:$0xff]
    %v189 = vld [vmem:[#allocation5 + $0x258] sm:$0xff]
    %v190 = vld [vmem:[#allocation5 + $0x260] sm:$0xff]
    %v191 = vld [vmem:[#allocation5 + $0x268] sm:$0xff]
    %v192 = vld [vmem:[#allocation5 + $0x270] sm:$0xff]
    %v193 = vld [vmem:[#allocation5 + $0x278] sm:$0xff]
    %v194 = vld [vmem:[#allocation5 + $0x280] sm:$0xff]
    %v195 = vld [vmem:[#allocation5 + $0x288] sm:$0xff]
    %v196 = vld [vmem:[#allocation5 + $0x290] sm:$0xff]
    %v197 = vld [vmem:[#allocation5 + $0x298] sm:$0xff]
    %v198 = vld [vmem:[#allocation5 + $0x2a0] sm:$0xff]
    %v199 = vld [vmem:[#allocation5 + $0x2a8] sm:$0xff]
    %v200 = vld [vmem:[#allocation5 + $0x2b0] sm:$0xff]
    %v201 = vld [vmem:[#allocation5 + $0x2b8] sm:$0xff]
    %v202 = vld [vmem:[#allocation5 + $0x2c0] sm:$0xff]
    %v203 = vld [vmem:[#allocation5 + $0x2c8] sm:$0xff]
    %v204 = vld [vmem:[#allocation5 + $0x2d0] sm:$0xff]
    %v205 = vld [vmem:[#allocation5 + $0x2d8] sm:$0xff]
    %v206 = vld [vmem:[#allocation5 + $0x2e0] sm:$0xff]
    %v207 = vld [vmem:[#allocation5 + $0x2e8] sm:$0xff]
    %v208 = vld [vmem:[#allocation5 + $0x2f0] sm:$0xff]
    %v209 = vld [vmem:[#allocation5 + $0x2f8] sm:$0xff]
    %v210 = vld [vmem:[#allocation5 + $0x300] sm:$0xff]
    %v211 = vld [vmem:[#allocation5 + $0x308] sm:$0xff]
    %v212 = vld [vmem:[#allocation5 + $0x310] sm:$0xff]
    %v213 = vld [vmem:[#allocation5 + $0x318] sm:$0xff]
    %v214 = vld [vmem:[#allocation5 + $0x320] sm:$0xff]
    %v215 = vld [vmem:[#allocation5 + $0x328] sm:$0xff]
    %v216 = vld [vmem:[#allocation5 + $0x330] sm:$0xff]
    %v217 = vld [vmem:[#allocation5 + $0x338] sm:$0xff]
    %v218 = vld [vmem:[#allocation5 + $0x340] sm:$0xff]
    %v219 = vld [vmem:[#allocation5 + $0x348] sm:$0xff]
    %v220 = vld [vmem:[#allocation5 + $0x350] sm:$0xff]
    %v221 = vld [vmem:[#allocation5 + $0x358] sm:$0xff]
    %v222 = vld [vmem:[#allocation5 + $0x360] sm:$0xff]
    %v223 = vld [vmem:[#allocation5 + $0x368] sm:$0xff]
    %v224 = vld [vmem:[#allocation5 + $0x370] sm:$0xff]
    %v225 = vld [vmem:[#allocation5 + $0x378] sm:$0xff]
    %v226 = vld [vmem:[#allocation5 + $0x380] sm:$0xff]
    %v227 = vld [vmem:[#allocation5 + $0x388] sm:$0xff]
    %v228 = vld [vmem:[#allocation5 + $0x390] sm:$0xff]
    %v229 = vld [vmem:[#allocation5 + $0x398] sm:$0xff]
    %v230 = vld [vmem:[#allocation5 + $0x3a0] sm:$0xff]
    %v231 = vld [vmem:[#allocation5 + $0x3a8] sm:$0xff]
    %v232 = vld [vmem:[#allocation5 + $0x3b0] sm:$0xff]
    %v233 = vld [vmem:[#allocation5 + $0x3b8] sm:$0xff]
    %v234 = vld [vmem:[#allocation5 + $0x3c0] sm:$0xff]
    %v235 = vld [vmem:[#allocation5 + $0x3c8] sm:$0xff]
    %v236 = vld [vmem:[#allocation5 + $0x3d0] sm:$0xff]
    %v237 = vld [vmem:[#allocation5 + $0x3d8] sm:$0xff]
    %v238 = vld [vmem:[#allocation5 + $0x3e0] sm:$0xff]
    %v239 = vld [vmem:[#allocation5 + $0x3e8] sm:$0xff]
    %v240 = vld [vmem:[#allocation5 + $0x3f0] sm:$0xff]
    %v241 = vld [vmem:[#allocation5 + $0x3f8] sm:$0xff]
    %v242 = vld [vmem:[#allocation5 + $0x400] sm:$0xff]
    %v243 = vld [vmem:[#allocation5 + $0x408] sm:$0xff]
    %v244 = vld [vmem:[#allocation5 + $0x410] sm:$0xff]
    %v245 = vld [vmem:[#allocation5 + $0x418] sm:$0xff]
    %v246 = vld [vmem:[#allocation5 + $0x420] sm:$0xff]
    %v247 = vld [vmem:[#allocation5 + $0x428] sm:$0xff]
    %v248 = vld [vmem:[#allocation5 + $0x430] sm:$0xff]
    %v249 = vld [vmem:[#allocation5 + $0x438] sm:$0xff]
    %v250 = vld [vmem:[#allocation5 + $0x440] sm:$0xff]
    %v251 = vld [vmem:[#allocation5 + $0x448] sm:$0xff]
    %v252 = vld [vmem:[#allocation5 + $0x450] sm:$0xff]
    %v253 = vld [vmem:[#allocation5 + $0x458] sm:$0xff]
    %v254 = vld [vmem:[#allocation5 + $0x460] sm:$0xff]
    %v255 = vld [vmem:[#allocation5 + $0x468] sm:$0xff]
    %v256 = vld [vmem:[#allocation5 + $0x470] sm:$0xff]
    %v257 = vld [vmem:[#allocation5 + $0x478] sm:$0xff]
    %v258 = vld [vmem:[#allocation5 + $0x480] sm:$0xff]
    %v259 = vld [vmem:[#allocation5 + $0x488] sm:$0xff]
    %v260 = vld [vmem:[#allocation5 + $0x490] sm:$0xff]
    %v261 = vld [vmem:[#allocation5 + $0x498] sm:$0xff]
    %v262 = vld [vmem:[#allocation5 + $0x4a0] sm:$0xff]
    %v263 = vld [vmem:[#allocation5 + $0x4a8] sm:$0xff]
    %v264 = vld [vmem:[#allocation5 + $0x4b0] sm:$0xff]
    %v265 = vld [vmem:[#allocation5 + $0x4b8] sm:$0xff]
    %v266 = vld [vmem:[#allocation5 + $0x4c0] sm:$0xff]
    %v267 = vld [vmem:[#allocation5 + $0x4c8] sm:$0xff]
    %v268 = vld [vmem:[#allocation5 + $0x4d0] sm:$0xff]
    %v269 = vld [vmem:[#allocation5 + $0x4d8] sm:$0xff]
    %v270 = vld [vmem:[#allocation5 + $0x4e0] sm:$0xff]
    %v271 = vld [vmem:[#allocation5 + $0x4e8] sm:$0xff]
    %v272 = vld [vmem:[#allocation5 + $0x4f0] sm:$0xff]
    %v273 = vld [vmem:[#allocation5 + $0x4f8] sm:$0xff]
    %v274 = vld [vmem:[#allocation5 + $0x500] sm:$0xff]
    %v275 = vld [vmem:[#allocation5 + $0x508] sm:$0xff]
    %v276 = vld [vmem:[#allocation5 + $0x510] sm:$0xff]
    %v277 = vld [vmem:[#allocation5 + $0x518] sm:$0xff]
    %v278 = vld [vmem:[#allocation5 + $0x520] sm:$0xff]
    %v279 = vld [vmem:[#allocation5 + $0x528] sm:$0xff]
    %v280 = vld [vmem:[#allocation5 + $0x530] sm:$0xff]
    %v281 = vld [vmem:[#allocation5 + $0x538] sm:$0xff]
    %v282 = vld [vmem:[#allocation5 + $0x540] sm:$0xff]
    %v283 = vld [vmem:[#allocation5 + $0x548] sm:$0xff]
    %v284 = vld [vmem:[#allocation5 + $0x550] sm:$0xff]
    %v285 = vld [vmem:[#allocation5 + $0x558] sm:$0xff]
    %v286 = vld [vmem:[#allocation5 + $0x560] sm:$0xff]
    %v287 = vld [vmem:[#allocation5 + $0x568] sm:$0xff]
    %v288 = vld [vmem:[#allocation5 + $0x570] sm:$0xff]
    %v289 = vld [vmem:[#allocation5 + $0x578] sm:$0xff]
    %v290 = vld [vmem:[#allocation5 + $0x580] sm:$0xff]
    %v291 = vld [vmem:[#allocation5 + $0x588] sm:$0xff]
    %v292 = vld [vmem:[#allocation5 + $0x590] sm:$0xff]
    %v293 = vld [vmem:[#allocation5 + $0x598] sm:$0xff]
    %v294 = vld [vmem:[#allocation5 + $0x5a0] sm:$0xff]
    %v295 = vld [vmem:[#allocation5 + $0x5a8] sm:$0xff]
    %v296 = vld [vmem:[#allocation5 + $0x5b0] sm:$0xff]
    %v297 = vld [vmem:[#allocation5 + $0x5b8] sm:$0xff]
    %v298 = vld [vmem:[#allocation5 + $0x5c0] sm:$0xff]
    %v299 = vld [vmem:[#allocation5 + $0x5c8] sm:$0xff]
    %v300 = vld [vmem:[#allocation5 + $0x5d0] sm:$0xff]
    %v301 = vld [vmem:[#allocation5 + $0x5d8] sm:$0xff]
    %v302 = vld [vmem:[#allocation5 + $0x5e0] sm:$0xff]
    %v303 = vld [vmem:[#allocation5 + $0x5e8] sm:$0xff]
    %v304 = vld [vmem:[#allocation5 + $0x5f0] sm:$0xff]
    %v305 = vld [vmem:[#allocation5 + $0x5f8] sm:$0xff]
    %v306 = vld [vmem:[#allocation5 + $0x600] sm:$0xff]
    %v307 = vld [vmem:[#allocation5 + $0x608] sm:$0xff]
    %v308 = vld [vmem:[#allocation5 + $0x610] sm:$0xff]
    %v309 = vld [vmem:[#allocation5 + $0x618] sm:$0xff]
    %v310 = vld [vmem:[#allocation5 + $0x620] sm:$0xff]
    %v311 = vld [vmem:[#allocation5 + $0x628] sm:$0xff]
    %v312 = vld [vmem:[#allocation5 + $0x630] sm:$0xff]
    %v313 = vld [vmem:[#allocation5 + $0x638] sm:$0xff]
    %v314 = vld [vmem:[#allocation5 + $0x640] sm:$0xff]
    %v315 = vld [vmem:[#allocation5 + $0x648] sm:$0xff]
    %v316 = vld [vmem:[#allocation5 + $0x650] sm:$0xff]
    %v317 = vld [vmem:[#allocation5 + $0x658] sm:$0xff]
    %v318 = vld [vmem:[#allocation5 + $0x660] sm:$0xff]
    %v319 = vld [vmem:[#allocation5 + $0x668] sm:$0xff]
    %v320 = vld [vmem:[#allocation5 + $0x670] sm:$0xff]
    %v321 = vld [vmem:[#allocation5 + $0x678] sm:$0xff]
    %v322 = vld [vmem:[#allocation5 + $0x680] sm:$0xff]
    %v323 = vld [vmem:[#allocation5 + $0x688] sm:$0xff]
    %v324 = vld [vmem:[#allocation5 + $0x690] sm:$0xff]
    %v325 = vld [vmem:[#allocation5 + $0x698] sm:$0xff]
    %v326 = vld [vmem:[#allocation5 + $0x6a0] sm:$0xff]
    %v327 = vld [vmem:[#allocation5 + $0x6a8] sm:$0xff]
    %v328 = vld [vmem:[#allocation5 + $0x6b0] sm:$0xff]
    %v329 = vld [vmem:[#allocation5 + $0x6b8] sm:$0xff]
    %v330 = vld [vmem:[#allocation5 + $0x6c0] sm:$0xff]
    %v331 = vld [vmem:[#allocation5 + $0x6c8] sm:$0xff]
    %v332 = vld [vmem:[#allocation5 + $0x6d0] sm:$0xff]
    %v333 = vld [vmem:[#allocation5 + $0x6d8] sm:$0xff]
    %v334 = vld [vmem:[#allocation5 + $0x6e0] sm:$0xff]
    %v335 = vld [vmem:[#allocation5 + $0x6e8] sm:$0xff]
    %v336 = vld [vmem:[#allocation5 + $0x6f0] sm:$0xff]
    %v337 = vld [vmem:[#allocation5 + $0x6f8] sm:$0xff]
    %v338 = vld [vmem:[#allocation5 + $0x700] sm:$0xff]
    %v339 = vld [vmem:[#allocation5 + $0x708] sm:$0xff]
    %v340 = vld [vmem:[#allocation5 + $0x710] sm:$0xff]
    %v341 = vld [vmem:[#allocation5 + $0x718] sm:$0xff]
    %v342 = vld [vmem:[#allocation5 + $0x720] sm:$0xff]
    %v343 = vld [vmem:[#allocation5 + $0x728] sm:$0xff]
    %v344 = vld [vmem:[#allocation5 + $0x730] sm:$0xff]
    %v345 = vld [vmem:[#allocation5 + $0x738] sm:$0xff]
    %v346 = vld [vmem:[#allocation5 + $0x740] sm:$0xff]
    %v347 = vld [vmem:[#allocation5 + $0x748] sm:$0xff]
    %v348 = vld [vmem:[#allocation5 + $0x750] sm:$0xff]
    %v349 = vld [vmem:[#allocation5 + $0x758] sm:$0xff]
    %v350 = vld [vmem:[#allocation5 + $0x760] sm:$0xff]
    %v351 = vld [vmem:[#allocation5 + $0x768] sm:$0xff]
    %v352 = vld [vmem:[#allocation5 + $0x770] sm:$0xff]
    %v353 = vld [vmem:[#allocation5 + $0x778] sm:$0xff]
    %v354 = vld [vmem:[#allocation5 + $0x780] sm:$0xff]
    %v355 = vld [vmem:[#allocation5 + $0x788] sm:$0xff]
    %v356 = vld [vmem:[#allocation5 + $0x790] sm:$0xff]
    %v357 = vld [vmem:[#allocation5 + $0x798] sm:$0xff]
    %v358 = vld [vmem:[#allocation5 + $0x7a0] sm:$0xff]
    %v359 = vld [vmem:[#allocation5 + $0x7a8] sm:$0xff]
    %v360 = vld [vmem:[#allocation5 + $0x7b0] sm:$0xff]
    %v361 = vld [vmem:[#allocation5 + $0x7b8] sm:$0xff]
    %v362 = vld [vmem:[#allocation5 + $0x7c0] sm:$0xff]
    %v363 = vld [vmem:[#allocation5 + $0x7c8] sm:$0xff]
    %v364 = vld [vmem:[#allocation5 + $0x7d0] sm:$0xff]
    %v365 = vld [vmem:[#allocation5 + $0x7d8] sm:$0xff]
    %v366 = vld [vmem:[#allocation5 + $0x7e0] sm:$0xff]
    %v367 = vld [vmem:[#allocation5 + $0x7e8] sm:$0xff]
    %v368 = vld [vmem:[#allocation5 + $0x7f0] sm:$0xff]
    %v369 = vld [vmem:[#allocation5 + $0x7f8] sm:$0xff]
    %v370 = vld [vmem:[#allocation5 + $0x800] sm:$0xff]
    %v371 = vld [vmem:[#allocation5 + $0x808] sm:$0xff]
    %v372 = vld [vmem:[#allocation5 + $0x810] sm:$0xff]
    %v373 = vld [vmem:[#allocation5 + $0x818] sm:$0xff]
    %v374 = vld [vmem:[#allocation5 + $0x820] sm:$0xff]
    %v375 = vld [vmem:[#allocation5 + $0x828] sm:$0xff]
    %v376 = vld [vmem:[#allocation5 + $0x830] sm:$0xff]
    %v377 = vld [vmem:[#allocation5 + $0x838] sm:$0xff]
    %v378 = vld [vmem:[#allocation5 + $0x840] sm:$0xff]
    %v379 = vld [vmem:[#allocation5 + $0x848] sm:$0xff]
    %v380 = vld [vmem:[#allocation5 + $0x850] sm:$0xff]
    %v381 = vld [vmem:[#allocation5 + $0x858] sm:$0xff]
    %v382 = vld [vmem:[#allocation5 + $0x860] sm:$0xff]
    %v383 = vld [vmem:[#allocation5 + $0x868] sm:$0xff]
    %v384 = vld [vmem:[#allocation5 + $0x870] sm:$0xff]
    %v385 = vld [vmem:[#allocation5 + $0x878] sm:$0xff]
    %v386 = vld [vmem:[#allocation5 + $0x880] sm:$0xff]
    %v387 = vld [vmem:[#allocation5 + $0x888] sm:$0xff]
    %v388 = vld [vmem:[#allocation5 + $0x890] sm:$0xff]
    %v389 = vld [vmem:[#allocation5 + $0x898] sm:$0xff]
    %v390 = vld [vmem:[#allocation5 + $0x8a0] sm:$0xff]
    %v391 = vld [vmem:[#allocation5 + $0x8a8] sm:$0xff]
    %v392 = vld [vmem:[#allocation5 + $0x8b0] sm:$0xff]
    %v393 = vld [vmem:[#allocation5 + $0x8b8] sm:$0xff]
    %v394 = vld [vmem:[#allocation5 + $0x8c0] sm:$0xff]
    %v395 = vld [vmem:[#allocation5 + $0x8c8] sm:$0xff]
    %v396 = vld [vmem:[#allocation5 + $0x8d0] sm:$0xff]
    %v397 = vld [vmem:[#allocation5 + $0x8d8] sm:$0xff]
    %v398 = vld [vmem:[#allocation5 + $0x8e0] sm:$0xff]
    %v399 = vld [vmem:[#allocation5 + $0x8e8] sm:$0xff]
    %v400 = vld [vmem:[#allocation5 + $0x8f0] sm:$0xff]
    %v401 = vld [vmem:[#allocation5 + $0x8f8] sm:$0xff]
    %v402 = vld [vmem:[#allocation5 + $0x900] sm:$0xff]
    %v403 = vld [vmem:[#allocation5 + $0x908] sm:$0xff]
    %v404 = vld [vmem:[#allocation5 + $0x910] sm:$0xff]
    %v405 = vld [vmem:[#allocation5 + $0x918] sm:$0xff]
    %v406 = vld [vmem:[#allocation5 + $0x920] sm:$0xff]
    %v407 = vld [vmem:[#allocation5 + $0x928] sm:$0xff]
    %v408 = vld [vmem:[#allocation5 + $0x930] sm:$0xff]
    %v409 = vld [vmem:[#allocation5 + $0x938] sm:$0xff]
    %v410 = vld [vmem:[#allocation5 + $0x940] sm:$0xff]
    %v411 = vld [vmem:[#allocation5 + $0x948] sm:$0xff]
    %v412 = vld [vmem:[#allocation5 + $0x950] sm:$0xff]
    %v413 = vld [vmem:[#allocation5 + $0x958] sm:$0xff]
    %v414 = vld [vmem:[#allocation5 + $0x960] sm:$0xff]
    %v415 = vld [vmem:[#allocation5 + $0x968] sm:$0xff]
    %v416 = vld [vmem:[#allocation5 + $0x970] sm:$0xff]
    %v417 = vld [vmem:[#allocation5 + $0x978] sm:$0xff]
    %v418 = vld [vmem:[#allocation5 + $0x980] sm:$0xff]
    %v419 = vld [vmem:[#allocation5 + $0x988] sm:$0xff]
    %v420 = vld [vmem:[#allocation5 + $0x990] sm:$0xff]
    %v421 = vld [vmem:[#allocation5 + $0x998] sm:$0xff]
    %v422 = vld [vmem:[#allocation5 + $0x9a0] sm:$0xff]
    %v423 = vld [vmem:[#allocation5 + $0x9a8] sm:$0xff]
    %v424 = vld [vmem:[#allocation5 + $0x9b0] sm:$0xff]
    %v425 = vld [vmem:[#allocation5 + $0x9b8] sm:$0xff]
    %v426 = vld [vmem:[#allocation5 + $0x9c0] sm:$0xff]
    %v427 = vld [vmem:[#allocation5 + $0x9c8] sm:$0xff]
    %v428 = vld [vmem:[#allocation5 + $0x9d0] sm:$0xff]
    %v429 = vld [vmem:[#allocation5 + $0x9d8] sm:$0xff]
    %v430 = vld [vmem:[#allocation5 + $0x9e0] sm:$0xff]
    %v431 = vld [vmem:[#allocation5 + $0x9e8] sm:$0xff]
    %v432 = vld [vmem:[#allocation5 + $0x9f0] sm:$0xff]
    %v433 = vld [vmem:[#allocation5 + $0x9f8] sm:$0xff]
    %v434 = vld [vmem:[#allocation5 + $0xa00] sm:$0xff]
    %v435 = vld [vmem:[#allocation5 + $0xa08] sm:$0xff]
    %v436 = vld [vmem:[#allocation5 + $0xa10] sm:$0xff]
    %v437 = vld [vmem:[#allocation5 + $0xa18] sm:$0xff]
    %v438 = vld [vmem:[#allocation5 + $0xa20] sm:$0xff]
    %v439 = vld [vmem:[#allocation5 + $0xa28] sm:$0xff]
    %v440 = vld [vmem:[#allocation5 + $0xa30] sm:$0xff]
    %v441 = vld [vmem:[#allocation5 + $0xa38] sm:$0xff]
    %v442 = vld [vmem:[#allocation5 + $0xa40] sm:$0xff]
    %v443 = vld [vmem:[#allocation5 + $0xa48] sm:$0xff]
    %v444 = vld [vmem:[#allocation5 + $0xa50] sm:$0xff]
    %v445 = vld [vmem:[#allocation5 + $0xa58] sm:$0xff]
    %v446 = vld [vmem:[#allocation5 + $0xa60] sm:$0xff]
    %v447 = vld [vmem:[#allocation5 + $0xa68] sm:$0xff]
    %v448 = vld [vmem:[#allocation5 + $0xa70] sm:$0xff]
    %v449 = vld [vmem:[#allocation5 + $0xa78] sm:$0xff]
    %v450 = vld [vmem:[#allocation5 + $0xa80] sm:$0xff]
    %v451 = vld [vmem:[#allocation5 + $0xa88] sm:$0xff]
    %v452 = vld [vmem:[#allocation5 + $0xa90] sm:$0xff]
    %v453 = vld [vmem:[#allocation5 + $0xa98] sm:$0xff]
    %v454 = vld [vmem:[#allocation5 + $0xaa0] sm:$0xff]
    %v455 = vld [vmem:[#allocation5 + $0xaa8] sm:$0xff]
    %v456 = vld [vmem:[#allocation5 + $0xab0] sm:$0xff]
    %v457 = vld [vmem:[#allocation5 + $0xab8] sm:$0xff]
    %v458 = vld [vmem:[#allocation5 + $0xac0] sm:$0xff]
    %v459 = vld [vmem:[#allocation5 + $0xac8] sm:$0xff]
    %v460 = vld [vmem:[#allocation5 + $0xad0] sm:$0xff]
    %v461 = vld [vmem:[#allocation5 + $0xad8] sm:$0xff]
    %v462 = vld [vmem:[#allocation5 + $0xae0] sm:$0xff]
    %v463 = vld [vmem:[#allocation5 + $0xae8] sm:$0xff]
    %v464 = vld [vmem:[#allocation5 + $0xaf0] sm:$0xff]
    %v465 = vld [vmem:[#allocation5 + $0xaf8] sm:$0xff]
    %v466 = vld [vmem:[#allocation5 + $0xb00] sm:$0xff]
    %v467 = vld [vmem:[#allocation5 + $0xb08] sm:$0xff]
    %v468 = vld [vmem:[#allocation5 + $0xb10] sm:$0xff]
    %v469 = vld [vmem:[#allocation5 + $0xb18] sm:$0xff]
    %v470 = vld [vmem:[#allocation5 + $0xb20] sm:$0xff]
    %v471 = vld [vmem:[#allocation5 + $0xb28] sm:$0xff]
    %v472 = vld [vmem:[#allocation5 + $0xb30] sm:$0xff]
    %v473 = vld [vmem:[#allocation5 + $0xb38] sm:$0xff]
    %v474 = vld [vmem:[#allocation5 + $0xb40] sm:$0xff]
    %v475 = vld [vmem:[#allocation5 + $0xb48] sm:$0xff]
    %v476 = vld [vmem:[#allocation5 + $0xb50] sm:$0xff]
    %v477 = vld [vmem:[#allocation5 + $0xb58] sm:$0xff]
    %v478 = vld [vmem:[#allocation5 + $0xb60] sm:$0xff]
    %v479 = vld [vmem:[#allocation5 + $0xb68] sm:$0xff]
    %v480 = vld [vmem:[#allocation5 + $0xb70] sm:$0xff]
    %v481 = vld [vmem:[#allocation5 + $0xb78] sm:$0xff]
    %v482 = vld [vmem:[#allocation5 + $0xb80] sm:$0xff]
    %v483 = vld [vmem:[#allocation5 + $0xb88] sm:$0xff]
    %v484 = vld [vmem:[#allocation5 + $0xb90] sm:$0xff]
    %v485 = vld [vmem:[#allocation5 + $0xb98] sm:$0xff]
    %v486 = vld [vmem:[#allocation5 + $0xba0] sm:$0xff]
    %v487 = vld [vmem:[#allocation5 + $0xba8] sm:$0xff]
    %v488 = vld [vmem:[#allocation5 + $0xbb0] sm:$0xff]
    %v489 = vld [vmem:[#allocation5 + $0xbb8] sm:$0xff]
    %v490 = vld [vmem:[#allocation5 + $0xbc0] sm:$0xff]
    %v491 = vld [vmem:[#allocation5 + $0xbc8] sm:$0xff]
    %v492 = vld [vmem:[#allocation5 + $0xbd0] sm:$0xff]
    %v493 = vld [vmem:[#allocation5 + $0xbd8] sm:$0xff]
    %v494 = vld [vmem:[#allocation5 + $0xbe0] sm:$0xff]
    %v495 = vld [vmem:[#allocation5 + $0xbe8] sm:$0xff]
    %v496 = vld [vmem:[#allocation5 + $0xbf0] sm:$0xff]
    %v497 = vld [vmem:[#allocation5 + $0xbf8] sm:$0xff]
    %v498 = vld [vmem:[#allocation5 + $0xc00] sm:$0xff]
    %v499 = vld [vmem:[#allocation5 + $0xc08] sm:$0xff]
    %v500 = vld [vmem:[#allocation5 + $0xc10] sm:$0xff]
    %v501 = vld [vmem:[#allocation5 + $0xc18] sm:$0xff]
    %v502 = vld [vmem:[#allocation5 + $0xc20] sm:$0xff]
    %v503 = vld [vmem:[#allocation5 + $0xc28] sm:$0xff]
    %v504 = vld [vmem:[#allocation5 + $0xc30] sm:$0xff]
    %v505 = vld [vmem:[#allocation5 + $0xc38] sm:$0xff]
    %v506 = vld [vmem:[#allocation5 + $0xc40] sm:$0xff]
    %v507 = vld [vmem:[#allocation5 + $0xc48] sm:$0xff]
    %v508 = vld [vmem:[#allocation5 + $0xc50] sm:$0xff]
    %v509 = vld [vmem:[#allocation5 + $0xc58] sm:$0xff]
    %v510 = vld [vmem:[#allocation5 + $0xc60] sm:$0xff]
    %v511 = vld [vmem:[#allocation5 + $0xc68] sm:$0xff]
    %v512 = vld [vmem:[#allocation5 + $0xc70] sm:$0xff]
    %v513 = vld [vmem:[#allocation5 + $0xc78] sm:$0xff]
    %v514 = vld [vmem:[#allocation5 + $0xc80] sm:$0xff]
    %v515 = vld [vmem:[#allocation5 + $0xc88] sm:$0xff]
    %v516 = vld [vmem:[#allocation5 + $0xc90] sm:$0xff]
    %v517 = vld [vmem:[#allocation5 + $0xc98] sm:$0xff]
    %v518 = vld [vmem:[#allocation5 + $0xca0] sm:$0xff]
    %v519 = vld [vmem:[#allocation5 + $0xca8] sm:$0xff]
    %v520 = vld [vmem:[#allocation5 + $0xcb0] sm:$0xff]
    %v521 = vld [vmem:[#allocation5 + $0xcb8] sm:$0xff]
    %v522 = vld [vmem:[#allocation5 + $0xcc0] sm:$0xff]
    %v523 = vld [vmem:[#allocation5 + $0xcc8] sm:$0xff]
    %v524 = vld [vmem:[#allocation5 + $0xcd0] sm:$0xff]
    %v525 = vld [vmem:[#allocation5 + $0xcd8] sm:$0xff]
    %v526 = vld [vmem:[#allocation5 + $0xce0] sm:$0xff]
    %v527 = vld [vmem:[#allocation5 + $0xce8] sm:$0xff]
    %v528 = vld [vmem:[#allocation5 + $0xcf0] sm:$0xff]
    %v529 = vld [vmem:[#allocation5 + $0xcf8] sm:$0xff]
    %v530 = vld [vmem:[#allocation5 + $0xd00] sm:$0xff]
    %v531 = vld [vmem:[#allocation5 + $0xd08] sm:$0xff]
    %v532 = vld [vmem:[#allocation5 + $0xd10] sm:$0xff]
    %v533 = vld [vmem:[#allocation5 + $0xd18] sm:$0xff]
    %v534 = vld [vmem:[#allocation5 + $0xd20] sm:$0xff]
    %v535 = vld [vmem:[#allocation5 + $0xd28] sm:$0xff]
    %v536 = vld [vmem:[#allocation5 + $0xd30] sm:$0xff]
    %v537 = vld [vmem:[#allocation5 + $0xd38] sm:$0xff]
    %v538 = vld [vmem:[#allocation5 + $0xd40] sm:$0xff]
    %v539 = vld [vmem:[#allocation5 + $0xd48] sm:$0xff]
    %v540 = vld [vmem:[#allocation5 + $0xd50] sm:$0xff]
    %v541 = vld [vmem:[#allocation5 + $0xd58] sm:$0xff]
    %v542 = vld [vmem:[#allocation5 + $0xd60] sm:$0xff]
    %v543 = vld [vmem:[#allocation5 + $0xd68] sm:$0xff]
    %v544 = vld [vmem:[#allocation5 + $0xd70] sm:$0xff]
    %v545 = vld [vmem:[#allocation5 + $0xd78] sm:$0xff]
    %v546 = vld [vmem:[#allocation5 + $0xd80] sm:$0xff]
    %v547 = vld [vmem:[#allocation5 + $0xd88] sm:$0xff]
    %v548 = vld [vmem:[#allocation5 + $0xd90] sm:$0xff]
    %v549 = vld [vmem:[#allocation5 + $0xd98] sm:$0xff]
    %v550 = vld [vmem:[#allocation5 + $0xda0] sm:$0xff]
    %v551 = vld [vmem:[#allocation5 + $0xda8] sm:$0xff]
    %v552 = vld [vmem:[#allocation5 + $0xdb0] sm:$0xff]
    %v553 = vld [vmem:[#allocation5 + $0xdb8] sm:$0xff]
    %v554 = vld [vmem:[#allocation5 + $0xdc0] sm:$0xff]
    %v555 = vld [vmem:[#allocation5 + $0xdc8] sm:$0xff]
    %v556 = vld [vmem:[#allocation5 + $0xdd0] sm:$0xff]
    %v557 = vld [vmem:[#allocation5 + $0xdd8] sm:$0xff]
    %v558 = vld [vmem:[#allocation5 + $0xde0] sm:$0xff]
    %v559 = vld [vmem:[#allocation5 + $0xde8] sm:$0xff]
    %v560 = vld [vmem:[#allocation5 + $0xdf0] sm:$0xff]
    %v561 = vld [vmem:[#allocation5 + $0xdf8] sm:$0xff]
    %v562 = vld [vmem:[#allocation5 + $0xe00] sm:$0xff]
    %v563 = vld [vmem:[#allocation5 + $0xe08] sm:$0xff]
    %v564 = vld [vmem:[#allocation5 + $0xe10] sm:$0xff]
    %v565 = vld [vmem:[#allocation5 + $0xe18] sm:$0xff]
    %v566 = vld [vmem:[#allocation5 + $0xe20] sm:$0xff]
    %v567 = vld [vmem:[#allocation5 + $0xe28] sm:$0xff]
    %v568 = vld [vmem:[#allocation5 + $0xe30] sm:$0xff]
    %v569 = vld [vmem:[#allocation5 + $0xe38] sm:$0xff]
    %v570 = vld [vmem:[#allocation5 + $0xe40] sm:$0xff]
    %v571 = vld [vmem:[#allocation5 + $0xe48] sm:$0xff]
    %v572 = vld [vmem:[#allocation5 + $0xe50] sm:$0xff]
    %v573 = vld [vmem:[#allocation5 + $0xe58] sm:$0xff]
    %v574 = vld [vmem:[#allocation5 + $0xe60] sm:$0xff]
    %v575 = vld [vmem:[#allocation5 + $0xe68] sm:$0xff]
    %v576 = vld [vmem:[#allocation5 + $0xe70] sm:$0xff]
    %v577 = vld [vmem:[#allocation5 + $0xe78] sm:$0xff]
    %v578 = vld [vmem:[#allocation5 + $0xe80] sm:$0xff]
    %v579 = vld [vmem:[#allocation5 + $0xe88] sm:$0xff]
    %v580 = vld [vmem:[#allocation5 + $0xe90] sm:$0xff]
    %v581 = vld [vmem:[#allocation5 + $0xe98] sm:$0xff]
    %v582 = vld [vmem:[#allocation5 + $0xea0] sm:$0xff]
    %v583 = vld [vmem:[#allocation5 + $0xea8] sm:$0xff]
    %v584 = vld [vmem:[#allocation5 + $0xeb0] sm:$0xff]
    %v585 = vld [vmem:[#allocation5 + $0xeb8] sm:$0xff]
    %v586 = vld [vmem:[#allocation5 + $0xec0] sm:$0xff]
    %v587 = vld [vmem:[#allocation5 + $0xec8] sm:$0xff]
    %v588 = vld [vmem:[#allocation5 + $0xed0] sm:$0xff]
    %v589 = vld [vmem:[#allocation5 + $0xed8] sm:$0xff]
    %v590 = vld [vmem:[#allocation5 + $0xee0] sm:$0xff]
    %v591 = vld [vmem:[#allocation5 + $0xee8] sm:$0xff]
    %v592 = vld [vmem:[#allocation5 + $0xef0] sm:$0xff]
    %v593 = vld [vmem:[#allocation5 + $0xef8] sm:$0xff]
    %v594 = vld [vmem:[#allocation5 + $0xf00] sm:$0xff]
    %v595 = vld [vmem:[#allocation5 + $0xf08] sm:$0xff]
    %v596 = vld [vmem:[#allocation5 + $0xf10] sm:$0xff]
    %v597 = vld [vmem:[#allocation5 + $0xf18] sm:$0xff]
    %v598 = vld [vmem:[#allocation5 + $0xf20] sm:$0xff]
    %v599 = vld [vmem:[#allocation5 + $0xf28] sm:$0xff]
    %v600 = vld [vmem:[#allocation5 + $0xf30] sm:$0xff]
    %v601 = vld [vmem:[#allocation5 + $0xf38] sm:$0xff]
    %v602 = vld [vmem:[#allocation5 + $0xf40] sm:$0xff]
    %v603 = vld [vmem:[#allocation5 + $0xf48] sm:$0xff]
    %v604 = vld [vmem:[#allocation5 + $0xf50] sm:$0xff]
    %v605 = vld [vmem:[#allocation5 + $0xf58] sm:$0xff]
    %v606 = vld [vmem:[#allocation5 + $0xf60] sm:$0xff]
    %v607 = vld [vmem:[#allocation5 + $0xf68] sm:$0xff]
    %v608 = vld [vmem:[#allocation5 + $0xf70] sm:$0xff]
    %v609 = vld [vmem:[#allocation5 + $0xf78] sm:$0xff]
    %v610 = vld [vmem:[#allocation5 + $0xf80] sm:$0xff]
    %v611 = vld [vmem:[#allocation5 + $0xf88] sm:$0xff]
    %v612 = vld [vmem:[#allocation5 + $0xf90] sm:$0xff]
    %v613 = vld [vmem:[#allocation5 + $0xf98] sm:$0xff]
    %v614 = vld [vmem:[#allocation5 + $0xfa0] sm:$0xff]
    %v615 = vld [vmem:[#allocation5 + $0xfa8] sm:$0xff]
    %v616 = vld [vmem:[#allocation5 + $0xfb0] sm:$0xff]
    %v617 = vld [vmem:[#allocation5 + $0xfb8] sm:$0xff]
    %v618 = vld [vmem:[#allocation5 + $0xfc0] sm:$0xff]
    %v619 = vld [vmem:[#allocation5 + $0xfc8] sm:$0xff]
    %v620 = vld [vmem:[#allocation5 + $0xfd0] sm:$0xff]
    %v621 = vld [vmem:[#allocation5 + $0xfd8] sm:$0xff]
    %v622 = vld [vmem:[#allocation5 + $0xfe0] sm:$0xff]
    %v623 = vld [vmem:[#allocation5 + $0xfe8] sm:$0xff]
    %v624 = vld [vmem:[#allocation5 + $0xff0] sm:$0xff]
    %v625 = vld [vmem:[#allocation5 + $0xff8] sm:$0xff]
    %v626 = vld [vmem:[#allocation7] sm:$0xff]
    %v628 = vlaneseq
    %v629 = vshrl.u32 %v628, 7
    %v630 = vsub.s32 0, %v629
    %v631 = vrot.slane %v626, %v630
    %v632 = vlaneseq
    %v633 = vshrl.u32 %v632, 7
    %v634 = vsub.s32 1, %v633
    %v635 = vrot.slane %v626, %v634
    %v636 = vlaneseq
    %v637 = vshrl.u32 %v636, 7
    %v638 = vsub.s32 2, %v637
    %v639 = vrot.slane %v626, %v638
    %v640 = vlaneseq
    %v641 = vshrl.u32 %v640, 7
    %v642 = vsub.s32 3, %v641
    %v643 = vrot.slane %v626, %v642
    %v644 = vlaneseq
    %v645 = vshrl.u32 %v644, 7
    %v646 = vsub.s32 4, %v645
    %v647 = vrot.slane %v626, %v646
    %v648 = vlaneseq
    %v649 = vshrl.u32 %v648, 7
    %v650 = vsub.s32 5, %v649
    %v651 = vrot.slane %v626, %v650
    %v652 = vlaneseq
    %v653 = vshrl.u32 %v652, 7
    %v654 = vsub.s32 6, %v653
    %v655 = vrot.slane %v626, %v654
    %v656 = vlaneseq
    %v657 = vshrl.u32 %v656, 7
    %v658 = vsub.s32 7, %v657
    %v659 = vrot.slane %v626, %v658
    %v676 = vunpack.c.l.b16 %v106
    %v677 = vunpack.c.h.b16 %v106
    %v678 = vunpack.c.l.b16 %v107
    %v679 = vunpack.c.h.b16 %v107
    %v680 = vunpack.c.l.b16 %v108
    %v681 = vunpack.c.h.b16 %v108
    %v682 = vunpack.c.l.b16 %v109
    %v683 = vunpack.c.h.b16 %v109
    %v684 = vunpack.c.l.b16 %v110
    %v685 = vunpack.c.h.b16 %v110
    %v686 = vunpack.c.l.b16 %v111
    %v687 = vunpack.c.h.b16 %v111
    %v688 = vunpack.c.l.b16 %v112
    %v689 = vunpack.c.h.b16 %v112
    %v690 = vunpack.c.l.b16 %v113
    %v691 = vunpack.c.h.b16 %v113
    %v692 = vpack.c.b16 %v684, %v676
    %v693 = vpack.c.b16 %v685, %v677
    %v694 = vpack.c.b16 %v686, %v678
    %v695 = vpack.c.b16 %v687, %v679
    %v696 = vpack.c.b16 %v688, %v680
    %v697 = vpack.c.b16 %v689, %v681
    %v698 = vpack.c.b16 %v690, %v682
    %v699 = vpack.c.b16 %v691, %v683
    %v1220 = vunpack.c.l.b16 %v114
    %v1221 = vunpack.c.h.b16 %v114
    %v1222 = vunpack.c.l.b16 %v115
    %v1223 = vunpack.c.h.b16 %v115
    %v1224 = vunpack.c.l.b16 %v116
    %v1225 = vunpack.c.h.b16 %v116
    %v1226 = vunpack.c.l.b16 %v117
    %v1227 = vunpack.c.h.b16 %v117
    %v1228 = vunpack.c.l.b16 %v118
    %v1229 = vunpack.c.h.b16 %v118
    %v1230 = vunpack.c.l.b16 %v119
    %v1231 = vunpack.c.h.b16 %v119
    %v1232 = vunpack.c.l.b16 %v120
    %v1233 = vunpack.c.h.b16 %v120
    %v1234 = vunpack.c.l.b16 %v121
    %v1235 = vunpack.c.h.b16 %v121
    %v1236 = vunpack.c.l.b16 %v122
    %v1237 = vunpack.c.h.b16 %v122
    %v1238 = vunpack.c.l.b16 %v123
    %v1239 = vunpack.c.h.b16 %v123
    %v1240 = vunpack.c.l.b16 %v124
    %v1241 = vunpack.c.h.b16 %v124
    %v1242 = vunpack.c.l.b16 %v125
    %v1243 = vunpack.c.h.b16 %v125
    %v1244 = vunpack.c.l.b16 %v126
    %v1245 = vunpack.c.h.b16 %v126
    %v1246 = vunpack.c.l.b16 %v127
    %v1247 = vunpack.c.h.b16 %v127
    %v1248 = vunpack.c.l.b16 %v128
    %v1249 = vunpack.c.h.b16 %v128
    %v1250 = vunpack.c.l.b16 %v129
    %v1251 = vunpack.c.h.b16 %v129
    %v1252 = vunpack.c.l.b16 %v130
    %v1253 = vunpack.c.h.b16 %v130
    %v1254 = vunpack.c.l.b16 %v131
    %v1255 = vunpack.c.h.b16 %v131
    %v1256 = vunpack.c.l.b16 %v132
    %v1257 = vunpack.c.h.b16 %v132
    %v1258 = vunpack.c.l.b16 %v133
    %v1259 = vunpack.c.h.b16 %v133
    %v1260 = vunpack.c.l.b16 %v134
    %v1261 = vunpack.c.h.b16 %v134
    %v1262 = vunpack.c.l.b16 %v135
    %v1263 = vunpack.c.h.b16 %v135
    %v1264 = vunpack.c.l.b16 %v136
    %v1265 = vunpack.c.h.b16 %v136
    %v1266 = vunpack.c.l.b16 %v137
    %v1267 = vunpack.c.h.b16 %v137
    %v1268 = vunpack.c.l.b16 %v138
    %v1269 = vunpack.c.h.b16 %v138
    %v1270 = vunpack.c.l.b16 %v139
    %v1271 = vunpack.c.h.b16 %v139
    %v1272 = vunpack.c.l.b16 %v140
    %v1273 = vunpack.c.h.b16 %v140
    %v1274 = vunpack.c.l.b16 %v141
    %v1275 = vunpack.c.h.b16 %v141
    %v1276 = vunpack.c.l.b16 %v142
    %v1277 = vunpack.c.h.b16 %v142
    %v1278 = vunpack.c.l.b16 %v143
    %v1279 = vunpack.c.h.b16 %v143
    %v1280 = vunpack.c.l.b16 %v144
    %v1281 = vunpack.c.h.b16 %v144
    %v1282 = vunpack.c.l.b16 %v145
    %v1283 = vunpack.c.h.b16 %v145
    %v1284 = vunpack.c.l.b16 %v146
    %v1285 = vunpack.c.h.b16 %v146
    %v1286 = vunpack.c.l.b16 %v147
    %v1287 = vunpack.c.h.b16 %v147
    %v1288 = vunpack.c.l.b16 %v148
    %v1289 = vunpack.c.h.b16 %v148
    %v1290 = vunpack.c.l.b16 %v149
    %v1291 = vunpack.c.h.b16 %v149
    %v1292 = vunpack.c.l.b16 %v150
    %v1293 = vunpack.c.h.b16 %v150
    %v1294 = vunpack.c.l.b16 %v151
    %v1295 = vunpack.c.h.b16 %v151
    %v1296 = vunpack.c.l.b16 %v152
    %v1297 = vunpack.c.h.b16 %v152
    %v1298 = vunpack.c.l.b16 %v153
    %v1299 = vunpack.c.h.b16 %v153
    %v1300 = vunpack.c.l.b16 %v154
    %v1301 = vunpack.c.h.b16 %v154
    %v1302 = vunpack.c.l.b16 %v155
    %v1303 = vunpack.c.h.b16 %v155
    %v1304 = vunpack.c.l.b16 %v156
    %v1305 = vunpack.c.h.b16 %v156
    %v1306 = vunpack.c.l.b16 %v157
    %v1307 = vunpack.c.h.b16 %v157
    %v1308 = vunpack.c.l.b16 %v158
    %v1309 = vunpack.c.h.b16 %v158
    %v1310 = vunpack.c.l.b16 %v159
    %v1311 = vunpack.c.h.b16 %v159
    %v1312 = vunpack.c.l.b16 %v160
    %v1313 = vunpack.c.h.b16 %v160
    %v1314 = vunpack.c.l.b16 %v161
    %v1315 = vunpack.c.h.b16 %v161
    %v1316 = vunpack.c.l.b16 %v162
    %v1317 = vunpack.c.h.b16 %v162
    %v1318 = vunpack.c.l.b16 %v163
    %v1319 = vunpack.c.h.b16 %v163
    %v1320 = vunpack.c.l.b16 %v164
    %v1321 = vunpack.c.h.b16 %v164
    %v1322 = vunpack.c.l.b16 %v165
    %v1323 = vunpack.c.h.b16 %v165
    %v1324 = vunpack.c.l.b16 %v166
    %v1325 = vunpack.c.h.b16 %v166
    %v1326 = vunpack.c.l.b16 %v167
    %v1327 = vunpack.c.h.b16 %v167
    %v1328 = vunpack.c.l.b16 %v168
    %v1329 = vunpack.c.h.b16 %v168
    %v1330 = vunpack.c.l.b16 %v169
    %v1331 = vunpack.c.h.b16 %v169
    %v1332 = vunpack.c.l.b16 %v170
    %v1333 = vunpack.c.h.b16 %v170
    %v1334 = vunpack.c.l.b16 %v171
    %v1335 = vunpack.c.h.b16 %v171
    %v1336 = vunpack.c.l.b16 %v172
    %v1337 = vunpack.c.h.b16 %v172
    %v1338 = vunpack.c.l.b16 %v173
    %v1339 = vunpack.c.h.b16 %v173
    %v1340 = vunpack.c.l.b16 %v174
    %v1341 = vunpack.c.h.b16 %v174
    %v1342 = vunpack.c.l.b16 %v175
    %v1343 = vunpack.c.h.b16 %v175
    %v1344 = vunpack.c.l.b16 %v176
    %v1345 = vunpack.c.h.b16 %v176
    %v1346 = vunpack.c.l.b16 %v177
    %v1347 = vunpack.c.h.b16 %v177
    %v1348 = vunpack.c.l.b16 %v178
    %v1349 = vunpack.c.h.b16 %v178
    %v1350 = vunpack.c.l.b16 %v179
    %v1351 = vunpack.c.h.b16 %v179
    %v1352 = vunpack.c.l.b16 %v180
    %v1353 = vunpack.c.h.b16 %v180
    %v1354 = vunpack.c.l.b16 %v181
    %v1355 = vunpack.c.h.b16 %v181
    %v1356 = vunpack.c.l.b16 %v182
    %v1357 = vunpack.c.h.b16 %v182
    %v1358 = vunpack.c.l.b16 %v183
    %v1359 = vunpack.c.h.b16 %v183
    %v1360 = vunpack.c.l.b16 %v184
    %v1361 = vunpack.c.h.b16 %v184
    %v1362 = vunpack.c.l.b16 %v185
    %v1363 = vunpack.c.h.b16 %v185
    %v1364 = vunpack.c.l.b16 %v186
    %v1365 = vunpack.c.h.b16 %v186
    %v1366 = vunpack.c.l.b16 %v187
    %v1367 = vunpack.c.h.b16 %v187
    %v1368 = vunpack.c.l.b16 %v188
    %v1369 = vunpack.c.h.b16 %v188
    %v1370 = vunpack.c.l.b16 %v189
    %v1371 = vunpack.c.h.b16 %v189
    %v1372 = vunpack.c.l.b16 %v190
    %v1373 = vunpack.c.h.b16 %v190
    %v1374 = vunpack.c.l.b16 %v191
    %v1375 = vunpack.c.h.b16 %v191
    %v1376 = vunpack.c.l.b16 %v192
    %v1377 = vunpack.c.h.b16 %v192
    %v1378 = vunpack.c.l.b16 %v193
    %v1379 = vunpack.c.h.b16 %v193
    %v1380 = vunpack.c.l.b16 %v194
    %v1381 = vunpack.c.h.b16 %v194
    %v1382 = vunpack.c.l.b16 %v195
    %v1383 = vunpack.c.h.b16 %v195
    %v1384 = vunpack.c.l.b16 %v196
    %v1385 = vunpack.c.h.b16 %v196
    %v1386 = vunpack.c.l.b16 %v197
    %v1387 = vunpack.c.h.b16 %v197
    %v1388 = vunpack.c.l.b16 %v198
    %v1389 = vunpack.c.h.b16 %v198
    %v1390 = vunpack.c.l.b16 %v199
    %v1391 = vunpack.c.h.b16 %v199
    %v1392 = vunpack.c.l.b16 %v200
    %v1393 = vunpack.c.h.b16 %v200
    %v1394 = vunpack.c.l.b16 %v201
    %v1395 = vunpack.c.h.b16 %v201
    %v1396 = vunpack.c.l.b16 %v202
    %v1397 = vunpack.c.h.b16 %v202
    %v1398 = vunpack.c.l.b16 %v203
    %v1399 = vunpack.c.h.b16 %v203
    %v1400 = vunpack.c.l.b16 %v204
    %v1401 = vunpack.c.h.b16 %v204
    %v1402 = vunpack.c.l.b16 %v205
    %v1403 = vunpack.c.h.b16 %v205
    %v1404 = vunpack.c.l.b16 %v206
    %v1405 = vunpack.c.h.b16 %v206
    %v1406 = vunpack.c.l.b16 %v207
    %v1407 = vunpack.c.h.b16 %v207
    %v1408 = vunpack.c.l.b16 %v208
    %v1409 = vunpack.c.h.b16 %v208
    %v1410 = vunpack.c.l.b16 %v209
    %v1411 = vunpack.c.h.b16 %v209
    %v1412 = vunpack.c.l.b16 %v210
    %v1413 = vunpack.c.h.b16 %v210
    %v1414 = vunpack.c.l.b16 %v211
    %v1415 = vunpack.c.h.b16 %v211
    %v1416 = vunpack.c.l.b16 %v212
    %v1417 = vunpack.c.h.b16 %v212
    %v1418 = vunpack.c.l.b16 %v213
    %v1419 = vunpack.c.h.b16 %v213
    %v1420 = vunpack.c.l.b16 %v214
    %v1421 = vunpack.c.h.b16 %v214
    %v1422 = vunpack.c.l.b16 %v215
    %v1423 = vunpack.c.h.b16 %v215
    %v1424 = vunpack.c.l.b16 %v216
    %v1425 = vunpack.c.h.b16 %v216
    %v1426 = vunpack.c.l.b16 %v217
    %v1427 = vunpack.c.h.b16 %v217
    %v1428 = vunpack.c.l.b16 %v218
    %v1429 = vunpack.c.h.b16 %v218
    %v1430 = vunpack.c.l.b16 %v219
    %v1431 = vunpack.c.h.b16 %v219
    %v1432 = vunpack.c.l.b16 %v220
    %v1433 = vunpack.c.h.b16 %v220
    %v1434 = vunpack.c.l.b16 %v221
    %v1435 = vunpack.c.h.b16 %v221
    %v1436 = vunpack.c.l.b16 %v222
    %v1437 = vunpack.c.h.b16 %v222
    %v1438 = vunpack.c.l.b16 %v223
    %v1439 = vunpack.c.h.b16 %v223
    %v1440 = vunpack.c.l.b16 %v224
    %v1441 = vunpack.c.h.b16 %v224
    %v1442 = vunpack.c.l.b16 %v225
    %v1443 = vunpack.c.h.b16 %v225
    %v1444 = vunpack.c.l.b16 %v226
    %v1445 = vunpack.c.h.b16 %v226
    %v1446 = vunpack.c.l.b16 %v227
    %v1447 = vunpack.c.h.b16 %v227
    %v1448 = vunpack.c.l.b16 %v228
    %v1449 = vunpack.c.h.b16 %v228
    %v1450 = vunpack.c.l.b16 %v229
    %v1451 = vunpack.c.h.b16 %v229
    %v1452 = vunpack.c.l.b16 %v230
    %v1453 = vunpack.c.h.b16 %v230
    %v1454 = vunpack.c.l.b16 %v231
    %v1455 = vunpack.c.h.b16 %v231
    %v1456 = vunpack.c.l.b16 %v232
    %v1457 = vunpack.c.h.b16 %v232
    %v1458 = vunpack.c.l.b16 %v233
    %v1459 = vunpack.c.h.b16 %v233
    %v1460 = vunpack.c.l.b16 %v234
    %v1461 = vunpack.c.h.b16 %v234
    %v1462 = vunpack.c.l.b16 %v235
    %v1463 = vunpack.c.h.b16 %v235
    %v1464 = vunpack.c.l.b16 %v236
    %v1465 = vunpack.c.h.b16 %v236
    %v1466 = vunpack.c.l.b16 %v237
    %v1467 = vunpack.c.h.b16 %v237
    %v1468 = vunpack.c.l.b16 %v238
    %v1469 = vunpack.c.h.b16 %v238
    %v1470 = vunpack.c.l.b16 %v239
    %v1471 = vunpack.c.h.b16 %v239
    %v1472 = vunpack.c.l.b16 %v240
    %v1473 = vunpack.c.h.b16 %v240
    %v1474 = vunpack.c.l.b16 %v241
    %v1475 = vunpack.c.h.b16 %v241
    %v1476 = vunpack.c.l.b16 %v242
    %v1477 = vunpack.c.h.b16 %v242
    %v1478 = vunpack.c.l.b16 %v243
    %v1479 = vunpack.c.h.b16 %v243
    %v1480 = vunpack.c.l.b16 %v244
    %v1481 = vunpack.c.h.b16 %v244
    %v1482 = vunpack.c.l.b16 %v245
    %v1483 = vunpack.c.h.b16 %v245
    %v1484 = vunpack.c.l.b16 %v246
    %v1485 = vunpack.c.h.b16 %v246
    %v1486 = vunpack.c.l.b16 %v247
    %v1487 = vunpack.c.h.b16 %v247
    %v1488 = vunpack.c.l.b16 %v248
    %v1489 = vunpack.c.h.b16 %v248
    %v1490 = vunpack.c.l.b16 %v249
    %v1491 = vunpack.c.h.b16 %v249
    %v1492 = vunpack.c.l.b16 %v250
    %v1493 = vunpack.c.h.b16 %v250
    %v1494 = vunpack.c.l.b16 %v251
    %v1495 = vunpack.c.h.b16 %v251
    %v1496 = vunpack.c.l.b16 %v252
    %v1497 = vunpack.c.h.b16 %v252
    %v1498 = vunpack.c.l.b16 %v253
    %v1499 = vunpack.c.h.b16 %v253
    %v1500 = vunpack.c.l.b16 %v254
    %v1501 = vunpack.c.h.b16 %v254
    %v1502 = vunpack.c.l.b16 %v255
    %v1503 = vunpack.c.h.b16 %v255
    %v1504 = vunpack.c.l.b16 %v256
    %v1505 = vunpack.c.h.b16 %v256
    %v1506 = vunpack.c.l.b16 %v257
    %v1507 = vunpack.c.h.b16 %v257
    %v1508 = vunpack.c.l.b16 %v258
    %v1509 = vunpack.c.h.b16 %v258
    %v1510 = vunpack.c.l.b16 %v259
    %v1511 = vunpack.c.h.b16 %v259
    %v1512 = vunpack.c.l.b16 %v260
    %v1513 = vunpack.c.h.b16 %v260
    %v1514 = vunpack.c.l.b16 %v261
    %v1515 = vunpack.c.h.b16 %v261
    %v1516 = vunpack.c.l.b16 %v262
    %v1517 = vunpack.c.h.b16 %v262
    %v1518 = vunpack.c.l.b16 %v263
    %v1519 = vunpack.c.h.b16 %v263
    %v1520 = vunpack.c.l.b16 %v264
    %v1521 = vunpack.c.h.b16 %v264
    %v1522 = vunpack.c.l.b16 %v265
    %v1523 = vunpack.c.h.b16 %v265
    %v1524 = vunpack.c.l.b16 %v266
    %v1525 = vunpack.c.h.b16 %v266
    %v1526 = vunpack.c.l.b16 %v267
    %v1527 = vunpack.c.h.b16 %v267
    %v1528 = vunpack.c.l.b16 %v268
    %v1529 = vunpack.c.h.b16 %v268
    %v1530 = vunpack.c.l.b16 %v269
    %v1531 = vunpack.c.h.b16 %v269
    %v1532 = vunpack.c.l.b16 %v270
    %v1533 = vunpack.c.h.b16 %v270
    %v1534 = vunpack.c.l.b16 %v271
    %v1535 = vunpack.c.h.b16 %v271
    %v1536 = vunpack.c.l.b16 %v272
    %v1537 = vunpack.c.h.b16 %v272
    %v1538 = vunpack.c.l.b16 %v273
    %v1539 = vunpack.c.h.b16 %v273
    %v1540 = vunpack.c.l.b16 %v274
    %v1541 = vunpack.c.h.b16 %v274
    %v1542 = vunpack.c.l.b16 %v275
    %v1543 = vunpack.c.h.b16 %v275
    %v1544 = vunpack.c.l.b16 %v276
    %v1545 = vunpack.c.h.b16 %v276
    %v1546 = vunpack.c.l.b16 %v277
    %v1547 = vunpack.c.h.b16 %v277
    %v1548 = vunpack.c.l.b16 %v278
    %v1549 = vunpack.c.h.b16 %v278
    %v1550 = vunpack.c.l.b16 %v279
    %v1551 = vunpack.c.h.b16 %v279
    %v1552 = vunpack.c.l.b16 %v280
    %v1553 = vunpack.c.h.b16 %v280
    %v1554 = vunpack.c.l.b16 %v281
    %v1555 = vunpack.c.h.b16 %v281
    %v1556 = vunpack.c.l.b16 %v282
    %v1557 = vunpack.c.h.b16 %v282
    %v1558 = vunpack.c.l.b16 %v283
    %v1559 = vunpack.c.h.b16 %v283
    %v1560 = vunpack.c.l.b16 %v284
    %v1561 = vunpack.c.h.b16 %v284
    %v1562 = vunpack.c.l.b16 %v285
    %v1563 = vunpack.c.h.b16 %v285
    %v1564 = vunpack.c.l.b16 %v286
    %v1565 = vunpack.c.h.b16 %v286
    %v1566 = vunpack.c.l.b16 %v287
    %v1567 = vunpack.c.h.b16 %v287
    %v1568 = vunpack.c.l.b16 %v288
    %v1569 = vunpack.c.h.b16 %v288
    %v1570 = vunpack.c.l.b16 %v289
    %v1571 = vunpack.c.h.b16 %v289
    %v1572 = vunpack.c.l.b16 %v290
    %v1573 = vunpack.c.h.b16 %v290
    %v1574 = vunpack.c.l.b16 %v291
    %v1575 = vunpack.c.h.b16 %v291
    %v1576 = vunpack.c.l.b16 %v292
    %v1577 = vunpack.c.h.b16 %v292
    %v1578 = vunpack.c.l.b16 %v293
    %v1579 = vunpack.c.h.b16 %v293
    %v1580 = vunpack.c.l.b16 %v294
    %v1581 = vunpack.c.h.b16 %v294
    %v1582 = vunpack.c.l.b16 %v295
    %v1583 = vunpack.c.h.b16 %v295
    %v1584 = vunpack.c.l.b16 %v296
    %v1585 = vunpack.c.h.b16 %v296
    %v1586 = vunpack.c.l.b16 %v297
    %v1587 = vunpack.c.h.b16 %v297
    %v1588 = vunpack.c.l.b16 %v298
    %v1589 = vunpack.c.h.b16 %v298
    %v1590 = vunpack.c.l.b16 %v299
    %v1591 = vunpack.c.h.b16 %v299
    %v1592 = vunpack.c.l.b16 %v300
    %v1593 = vunpack.c.h.b16 %v300
    %v1594 = vunpack.c.l.b16 %v301
    %v1595 = vunpack.c.h.b16 %v301
    %v1596 = vunpack.c.l.b16 %v302
    %v1597 = vunpack.c.h.b16 %v302
    %v1598 = vunpack.c.l.b16 %v303
    %v1599 = vunpack.c.h.b16 %v303
    %v1600 = vunpack.c.l.b16 %v304
    %v1601 = vunpack.c.h.b16 %v304
    %v1602 = vunpack.c.l.b16 %v305
    %v1603 = vunpack.c.h.b16 %v305
    %v1604 = vunpack.c.l.b16 %v306
    %v1605 = vunpack.c.h.b16 %v306
    %v1606 = vunpack.c.l.b16 %v307
    %v1607 = vunpack.c.h.b16 %v307
    %v1608 = vunpack.c.l.b16 %v308
    %v1609 = vunpack.c.h.b16 %v308
    %v1610 = vunpack.c.l.b16 %v309
    %v1611 = vunpack.c.h.b16 %v309
    %v1612 = vunpack.c.l.b16 %v310
    %v1613 = vunpack.c.h.b16 %v310
    %v1614 = vunpack.c.l.b16 %v311
    %v1615 = vunpack.c.h.b16 %v311
    %v1616 = vunpack.c.l.b16 %v312
    %v1617 = vunpack.c.h.b16 %v312
    %v1618 = vunpack.c.l.b16 %v313
    %v1619 = vunpack.c.h.b16 %v313
    %v1620 = vunpack.c.l.b16 %v314
    %v1621 = vunpack.c.h.b16 %v314
    %v1622 = vunpack.c.l.b16 %v315
    %v1623 = vunpack.c.h.b16 %v315
    %v1624 = vunpack.c.l.b16 %v316
    %v1625 = vunpack.c.h.b16 %v316
    %v1626 = vunpack.c.l.b16 %v317
    %v1627 = vunpack.c.h.b16 %v317
    %v1628 = vunpack.c.l.b16 %v318
    %v1629 = vunpack.c.h.b16 %v318
    %v1630 = vunpack.c.l.b16 %v319
    %v1631 = vunpack.c.h.b16 %v319
    %v1632 = vunpack.c.l.b16 %v320
    %v1633 = vunpack.c.h.b16 %v320
    %v1634 = vunpack.c.l.b16 %v321
    %v1635 = vunpack.c.h.b16 %v321
    %v1636 = vunpack.c.l.b16 %v322
    %v1637 = vunpack.c.h.b16 %v322
    %v1638 = vunpack.c.l.b16 %v323
    %v1639 = vunpack.c.h.b16 %v323
    %v1640 = vunpack.c.l.b16 %v324
    %v1641 = vunpack.c.h.b16 %v324
    %v1642 = vunpack.c.l.b16 %v325
    %v1643 = vunpack.c.h.b16 %v325
    %v1644 = vunpack.c.l.b16 %v326
    %v1645 = vunpack.c.h.b16 %v326
    %v1646 = vunpack.c.l.b16 %v327
    %v1647 = vunpack.c.h.b16 %v327
    %v1648 = vunpack.c.l.b16 %v328
    %v1649 = vunpack.c.h.b16 %v328
    %v1650 = vunpack.c.l.b16 %v329
    %v1651 = vunpack.c.h.b16 %v329
    %v1652 = vunpack.c.l.b16 %v330
    %v1653 = vunpack.c.h.b16 %v330
    %v1654 = vunpack.c.l.b16 %v331
    %v1655 = vunpack.c.h.b16 %v331
    %v1656 = vunpack.c.l.b16 %v332
    %v1657 = vunpack.c.h.b16 %v332
    %v1658 = vunpack.c.l.b16 %v333
    %v1659 = vunpack.c.h.b16 %v333
    %v1660 = vunpack.c.l.b16 %v334
    %v1661 = vunpack.c.h.b16 %v334
    %v1662 = vunpack.c.l.b16 %v335
    %v1663 = vunpack.c.h.b16 %v335
    %v1664 = vunpack.c.l.b16 %v336
    %v1665 = vunpack.c.h.b16 %v336
    %v1666 = vunpack.c.l.b16 %v337
    %v1667 = vunpack.c.h.b16 %v337
    %v1668 = vunpack.c.l.b16 %v338
    %v1669 = vunpack.c.h.b16 %v338
    %v1670 = vunpack.c.l.b16 %v339
    %v1671 = vunpack.c.h.b16 %v339
    %v1672 = vunpack.c.l.b16 %v340
    %v1673 = vunpack.c.h.b16 %v340
    %v1674 = vunpack.c.l.b16 %v341
    %v1675 = vunpack.c.h.b16 %v341
    %v1676 = vunpack.c.l.b16 %v342
    %v1677 = vunpack.c.h.b16 %v342
    %v1678 = vunpack.c.l.b16 %v343
    %v1679 = vunpack.c.h.b16 %v343
    %v1680 = vunpack.c.l.b16 %v344
    %v1681 = vunpack.c.h.b16 %v344
    %v1682 = vunpack.c.l.b16 %v345
    %v1683 = vunpack.c.h.b16 %v345
    %v1684 = vunpack.c.l.b16 %v346
    %v1685 = vunpack.c.h.b16 %v346
    %v1686 = vunpack.c.l.b16 %v347
    %v1687 = vunpack.c.h.b16 %v347
    %v1688 = vunpack.c.l.b16 %v348
    %v1689 = vunpack.c.h.b16 %v348
    %v1690 = vunpack.c.l.b16 %v349
    %v1691 = vunpack.c.h.b16 %v349
    %v1692 = vunpack.c.l.b16 %v350
    %v1693 = vunpack.c.h.b16 %v350
    %v1694 = vunpack.c.l.b16 %v351
    %v1695 = vunpack.c.h.b16 %v351
    %v1696 = vunpack.c.l.b16 %v352
    %v1697 = vunpack.c.h.b16 %v352
    %v1698 = vunpack.c.l.b16 %v353
    %v1699 = vunpack.c.h.b16 %v353
    %v1700 = vunpack.c.l.b16 %v354
    %v1701 = vunpack.c.h.b16 %v354
    %v1702 = vunpack.c.l.b16 %v355
    %v1703 = vunpack.c.h.b16 %v355
    %v1704 = vunpack.c.l.b16 %v356
    %v1705 = vunpack.c.h.b16 %v356
    %v1706 = vunpack.c.l.b16 %v357
    %v1707 = vunpack.c.h.b16 %v357
    %v1708 = vunpack.c.l.b16 %v358
    %v1709 = vunpack.c.h.b16 %v358
    %v1710 = vunpack.c.l.b16 %v359
    %v1711 = vunpack.c.h.b16 %v359
    %v1712 = vunpack.c.l.b16 %v360
    %v1713 = vunpack.c.h.b16 %v360
    %v1714 = vunpack.c.l.b16 %v361
    %v1715 = vunpack.c.h.b16 %v361
    %v1716 = vunpack.c.l.b16 %v362
    %v1717 = vunpack.c.h.b16 %v362
    %v1718 = vunpack.c.l.b16 %v363
    %v1719 = vunpack.c.h.b16 %v363
    %v1720 = vunpack.c.l.b16 %v364
    %v1721 = vunpack.c.h.b16 %v364
    %v1722 = vunpack.c.l.b16 %v365
    %v1723 = vunpack.c.h.b16 %v365
    %v1724 = vunpack.c.l.b16 %v366
    %v1725 = vunpack.c.h.b16 %v366
    %v1726 = vunpack.c.l.b16 %v367
    %v1727 = vunpack.c.h.b16 %v367
    %v1728 = vunpack.c.l.b16 %v368
    %v1729 = vunpack.c.h.b16 %v368
    %v1730 = vunpack.c.l.b16 %v369
    %v1731 = vunpack.c.h.b16 %v369
    %v1732 = vunpack.c.l.b16 %v370
    %v1733 = vunpack.c.h.b16 %v370
    %v1734 = vunpack.c.l.b16 %v371
    %v1735 = vunpack.c.h.b16 %v371
    %v1736 = vunpack.c.l.b16 %v372
    %v1737 = vunpack.c.h.b16 %v372
    %v1738 = vunpack.c.l.b16 %v373
    %v1739 = vunpack.c.h.b16 %v373
    %v1740 = vunpack.c.l.b16 %v374
    %v1741 = vunpack.c.h.b16 %v374
    %v1742 = vunpack.c.l.b16 %v375
    %v1743 = vunpack.c.h.b16 %v375
    %v1744 = vunpack.c.l.b16 %v376
    %v1745 = vunpack.c.h.b16 %v376
    %v1746 = vunpack.c.l.b16 %v377
    %v1747 = vunpack.c.h.b16 %v377
    %v1748 = vunpack.c.l.b16 %v378
    %v1749 = vunpack.c.h.b16 %v378
    %v1750 = vunpack.c.l.b16 %v379
    %v1751 = vunpack.c.h.b16 %v379
    %v1752 = vunpack.c.l.b16 %v380
    %v1753 = vunpack.c.h.b16 %v380
    %v1754 = vunpack.c.l.b16 %v381
    %v1755 = vunpack.c.h.b16 %v381
    %v1756 = vunpack.c.l.b16 %v382
    %v1757 = vunpack.c.h.b16 %v382
    %v1758 = vunpack.c.l.b16 %v383
    %v1759 = vunpack.c.h.b16 %v383
    %v1760 = vunpack.c.l.b16 %v384
    %v1761 = vunpack.c.h.b16 %v384
    %v1762 = vunpack.c.l.b16 %v385
    %v1763 = vunpack.c.h.b16 %v385
    %v1764 = vunpack.c.l.b16 %v386
    %v1765 = vunpack.c.h.b16 %v386
    %v1766 = vunpack.c.l.b16 %v387
    %v1767 = vunpack.c.h.b16 %v387
    %v1768 = vunpack.c.l.b16 %v388
    %v1769 = vunpack.c.h.b16 %v388
    %v1770 = vunpack.c.l.b16 %v389
    %v1771 = vunpack.c.h.b16 %v389
    %v1772 = vunpack.c.l.b16 %v390
    %v1773 = vunpack.c.h.b16 %v390
    %v1774 = vunpack.c.l.b16 %v391
    %v1775 = vunpack.c.h.b16 %v391
    %v1776 = vunpack.c.l.b16 %v392
    %v1777 = vunpack.c.h.b16 %v392
    %v1778 = vunpack.c.l.b16 %v393
    %v1779 = vunpack.c.h.b16 %v393
    %v1780 = vunpack.c.l.b16 %v394
    %v1781 = vunpack.c.h.b16 %v394
    %v1782 = vunpack.c.l.b16 %v395
    %v1783 = vunpack.c.h.b16 %v395
    %v1784 = vunpack.c.l.b16 %v396
    %v1785 = vunpack.c.h.b16 %v396
    %v1786 = vunpack.c.l.b16 %v397
    %v1787 = vunpack.c.h.b16 %v397
    %v1788 = vunpack.c.l.b16 %v398
    %v1789 = vunpack.c.h.b16 %v398
    %v1790 = vunpack.c.l.b16 %v399
    %v1791 = vunpack.c.h.b16 %v399
    %v1792 = vunpack.c.l.b16 %v400
    %v1793 = vunpack.c.h.b16 %v400
    %v1794 = vunpack.c.l.b16 %v401
    %v1795 = vunpack.c.h.b16 %v401
    %v1796 = vunpack.c.l.b16 %v402
    %v1797 = vunpack.c.h.b16 %v402
    %v1798 = vunpack.c.l.b16 %v403
    %v1799 = vunpack.c.h.b16 %v403
    %v1800 = vunpack.c.l.b16 %v404
    %v1801 = vunpack.c.h.b16 %v404
    %v1802 = vunpack.c.l.b16 %v405
    %v1803 = vunpack.c.h.b16 %v405
    %v1804 = vunpack.c.l.b16 %v406
    %v1805 = vunpack.c.h.b16 %v406
    %v1806 = vunpack.c.l.b16 %v407
    %v1807 = vunpack.c.h.b16 %v407
    %v1808 = vunpack.c.l.b16 %v408
    %v1809 = vunpack.c.h.b16 %v408
    %v1810 = vunpack.c.l.b16 %v409
    %v1811 = vunpack.c.h.b16 %v409
    %v1812 = vunpack.c.l.b16 %v410
    %v1813 = vunpack.c.h.b16 %v410
    %v1814 = vunpack.c.l.b16 %v411
    %v1815 = vunpack.c.h.b16 %v411
    %v1816 = vunpack.c.l.b16 %v412
    %v1817 = vunpack.c.h.b16 %v412
    %v1818 = vunpack.c.l.b16 %v413
    %v1819 = vunpack.c.h.b16 %v413
    %v1820 = vunpack.c.l.b16 %v414
    %v1821 = vunpack.c.h.b16 %v414
    %v1822 = vunpack.c.l.b16 %v415
    %v1823 = vunpack.c.h.b16 %v415
    %v1824 = vunpack.c.l.b16 %v416
    %v1825 = vunpack.c.h.b16 %v416
    %v1826 = vunpack.c.l.b16 %v417
    %v1827 = vunpack.c.h.b16 %v417
    %v1828 = vunpack.c.l.b16 %v418
    %v1829 = vunpack.c.h.b16 %v418
    %v1830 = vunpack.c.l.b16 %v419
    %v1831 = vunpack.c.h.b16 %v419
    %v1832 = vunpack.c.l.b16 %v420
    %v1833 = vunpack.c.h.b16 %v420
    %v1834 = vunpack.c.l.b16 %v421
    %v1835 = vunpack.c.h.b16 %v421
    %v1836 = vunpack.c.l.b16 %v422
    %v1837 = vunpack.c.h.b16 %v422
    %v1838 = vunpack.c.l.b16 %v423
    %v1839 = vunpack.c.h.b16 %v423
    %v1840 = vunpack.c.l.b16 %v424
    %v1841 = vunpack.c.h.b16 %v424
    %v1842 = vunpack.c.l.b16 %v425
    %v1843 = vunpack.c.h.b16 %v425
    %v1844 = vunpack.c.l.b16 %v426
    %v1845 = vunpack.c.h.b16 %v426
    %v1846 = vunpack.c.l.b16 %v427
    %v1847 = vunpack.c.h.b16 %v427
    %v1848 = vunpack.c.l.b16 %v428
    %v1849 = vunpack.c.h.b16 %v428
    %v1850 = vunpack.c.l.b16 %v429
    %v1851 = vunpack.c.h.b16 %v429
    %v1852 = vunpack.c.l.b16 %v430
    %v1853 = vunpack.c.h.b16 %v430
    %v1854 = vunpack.c.l.b16 %v431
    %v1855 = vunpack.c.h.b16 %v431
    %v1856 = vunpack.c.l.b16 %v432
    %v1857 = vunpack.c.h.b16 %v432
    %v1858 = vunpack.c.l.b16 %v433
    %v1859 = vunpack.c.h.b16 %v433
    %v1860 = vunpack.c.l.b16 %v434
    %v1861 = vunpack.c.h.b16 %v434
    %v1862 = vunpack.c.l.b16 %v435
    %v1863 = vunpack.c.h.b16 %v435
    %v1864 = vunpack.c.l.b16 %v436
    %v1865 = vunpack.c.h.b16 %v436
    %v1866 = vunpack.c.l.b16 %v437
    %v1867 = vunpack.c.h.b16 %v437
    %v1868 = vunpack.c.l.b16 %v438
    %v1869 = vunpack.c.h.b16 %v438
    %v1870 = vunpack.c.l.b16 %v439
    %v1871 = vunpack.c.h.b16 %v439
    %v1872 = vunpack.c.l.b16 %v440
    %v1873 = vunpack.c.h.b16 %v440
    %v1874 = vunpack.c.l.b16 %v441
    %v1875 = vunpack.c.h.b16 %v441
    %v1876 = vunpack.c.l.b16 %v442
    %v1877 = vunpack.c.h.b16 %v442
    %v1878 = vunpack.c.l.b16 %v443
    %v1879 = vunpack.c.h.b16 %v443
    %v1880 = vunpack.c.l.b16 %v444
    %v1881 = vunpack.c.h.b16 %v444
    %v1882 = vunpack.c.l.b16 %v445
    %v1883 = vunpack.c.h.b16 %v445
    %v1884 = vunpack.c.l.b16 %v446
    %v1885 = vunpack.c.h.b16 %v446
    %v1886 = vunpack.c.l.b16 %v447
    %v1887 = vunpack.c.h.b16 %v447
    %v1888 = vunpack.c.l.b16 %v448
    %v1889 = vunpack.c.h.b16 %v448
    %v1890 = vunpack.c.l.b16 %v449
    %v1891 = vunpack.c.h.b16 %v449
    %v1892 = vunpack.c.l.b16 %v450
    %v1893 = vunpack.c.h.b16 %v450
    %v1894 = vunpack.c.l.b16 %v451
    %v1895 = vunpack.c.h.b16 %v451
    %v1896 = vunpack.c.l.b16 %v452
    %v1897 = vunpack.c.h.b16 %v452
    %v1898 = vunpack.c.l.b16 %v453
    %v1899 = vunpack.c.h.b16 %v453
    %v1900 = vunpack.c.l.b16 %v454
    %v1901 = vunpack.c.h.b16 %v454
    %v1902 = vunpack.c.l.b16 %v455
    %v1903 = vunpack.c.h.b16 %v455
    %v1904 = vunpack.c.l.b16 %v456
    %v1905 = vunpack.c.h.b16 %v456
    %v1906 = vunpack.c.l.b16 %v457
    %v1907 = vunpack.c.h.b16 %v457
    %v1908 = vunpack.c.l.b16 %v458
    %v1909 = vunpack.c.h.b16 %v458
    %v1910 = vunpack.c.l.b16 %v459
    %v1911 = vunpack.c.h.b16 %v459
    %v1912 = vunpack.c.l.b16 %v460
    %v1913 = vunpack.c.h.b16 %v460
    %v1914 = vunpack.c.l.b16 %v461
    %v1915 = vunpack.c.h.b16 %v461
    %v1916 = vunpack.c.l.b16 %v462
    %v1917 = vunpack.c.h.b16 %v462
    %v1918 = vunpack.c.l.b16 %v463
    %v1919 = vunpack.c.h.b16 %v463
    %v1920 = vunpack.c.l.b16 %v464
    %v1921 = vunpack.c.h.b16 %v464
    %v1922 = vunpack.c.l.b16 %v465
    %v1923 = vunpack.c.h.b16 %v465
    %v1924 = vunpack.c.l.b16 %v466
    %v1925 = vunpack.c.h.b16 %v466
    %v1926 = vunpack.c.l.b16 %v467
    %v1927 = vunpack.c.h.b16 %v467
    %v1928 = vunpack.c.l.b16 %v468
    %v1929 = vunpack.c.h.b16 %v468
    %v1930 = vunpack.c.l.b16 %v469
    %v1931 = vunpack.c.h.b16 %v469
    %v1932 = vunpack.c.l.b16 %v470
    %v1933 = vunpack.c.h.b16 %v470
    %v1934 = vunpack.c.l.b16 %v471
    %v1935 = vunpack.c.h.b16 %v471
    %v1936 = vunpack.c.l.b16 %v472
    %v1937 = vunpack.c.h.b16 %v472
    %v1938 = vunpack.c.l.b16 %v473
    %v1939 = vunpack.c.h.b16 %v473
    %v1940 = vunpack.c.l.b16 %v474
    %v1941 = vunpack.c.h.b16 %v474
    %v1942 = vunpack.c.l.b16 %v475
    %v1943 = vunpack.c.h.b16 %v475
    %v1944 = vunpack.c.l.b16 %v476
    %v1945 = vunpack.c.h.b16 %v476
    %v1946 = vunpack.c.l.b16 %v477
    %v1947 = vunpack.c.h.b16 %v477
    %v1948 = vunpack.c.l.b16 %v478
    %v1949 = vunpack.c.h.b16 %v478
    %v1950 = vunpack.c.l.b16 %v479
    %v1951 = vunpack.c.h.b16 %v479
    %v1952 = vunpack.c.l.b16 %v480
    %v1953 = vunpack.c.h.b16 %v480
    %v1954 = vunpack.c.l.b16 %v481
    %v1955 = vunpack.c.h.b16 %v481
    %v1956 = vunpack.c.l.b16 %v482
    %v1957 = vunpack.c.h.b16 %v482
    %v1958 = vunpack.c.l.b16 %v483
    %v1959 = vunpack.c.h.b16 %v483
    %v1960 = vunpack.c.l.b16 %v484
    %v1961 = vunpack.c.h.b16 %v484
    %v1962 = vunpack.c.l.b16 %v485
    %v1963 = vunpack.c.h.b16 %v485
    %v1964 = vunpack.c.l.b16 %v486
    %v1965 = vunpack.c.h.b16 %v486
    %v1966 = vunpack.c.l.b16 %v487
    %v1967 = vunpack.c.h.b16 %v487
    %v1968 = vunpack.c.l.b16 %v488
    %v1969 = vunpack.c.h.b16 %v488
    %v1970 = vunpack.c.l.b16 %v489
    %v1971 = vunpack.c.h.b16 %v489
    %v1972 = vunpack.c.l.b16 %v490
    %v1973 = vunpack.c.h.b16 %v490
    %v1974 = vunpack.c.l.b16 %v491
    %v1975 = vunpack.c.h.b16 %v491
    %v1976 = vunpack.c.l.b16 %v492
    %v1977 = vunpack.c.h.b16 %v492
    %v1978 = vunpack.c.l.b16 %v493
    %v1979 = vunpack.c.h.b16 %v493
    %v1980 = vunpack.c.l.b16 %v494
    %v1981 = vunpack.c.h.b16 %v494
    %v1982 = vunpack.c.l.b16 %v495
    %v1983 = vunpack.c.h.b16 %v495
    %v1984 = vunpack.c.l.b16 %v496
    %v1985 = vunpack.c.h.b16 %v496
    %v1986 = vunpack.c.l.b16 %v497
    %v1987 = vunpack.c.h.b16 %v497
    %v1988 = vunpack.c.l.b16 %v498
    %v1989 = vunpack.c.h.b16 %v498
    %v1990 = vunpack.c.l.b16 %v499
    %v1991 = vunpack.c.h.b16 %v499
    %v1992 = vunpack.c.l.b16 %v500
    %v1993 = vunpack.c.h.b16 %v500
    %v1994 = vunpack.c.l.b16 %v501
    %v1995 = vunpack.c.h.b16 %v501
    %v1996 = vunpack.c.l.b16 %v502
    %v1997 = vunpack.c.h.b16 %v502
    %v1998 = vunpack.c.l.b16 %v503
    %v1999 = vunpack.c.h.b16 %v503
    %v2000 = vunpack.c.l.b16 %v504
    %v2001 = vunpack.c.h.b16 %v504
    %v2002 = vunpack.c.l.b16 %v505
    %v2003 = vunpack.c.h.b16 %v505
    %v2004 = vunpack.c.l.b16 %v506
    %v2005 = vunpack.c.h.b16 %v506
    %v2006 = vunpack.c.l.b16 %v507
    %v2007 = vunpack.c.h.b16 %v507
    %v2008 = vunpack.c.l.b16 %v508
    %v2009 = vunpack.c.h.b16 %v508
    %v2010 = vunpack.c.l.b16 %v509
    %v2011 = vunpack.c.h.b16 %v509
    %v2012 = vunpack.c.l.b16 %v510
    %v2013 = vunpack.c.h.b16 %v510
    %v2014 = vunpack.c.l.b16 %v511
    %v2015 = vunpack.c.h.b16 %v511
    %v2016 = vunpack.c.l.b16 %v512
    %v2017 = vunpack.c.h.b16 %v512
    %v2018 = vunpack.c.l.b16 %v513
    %v2019 = vunpack.c.h.b16 %v513
    %v2020 = vunpack.c.l.b16 %v514
    %v2021 = vunpack.c.h.b16 %v514
    %v2022 = vunpack.c.l.b16 %v515
    %v2023 = vunpack.c.h.b16 %v515
    %v2024 = vunpack.c.l.b16 %v516
    %v2025 = vunpack.c.h.b16 %v516
    %v2026 = vunpack.c.l.b16 %v517
    %v2027 = vunpack.c.h.b16 %v517
    %v2028 = vunpack.c.l.b16 %v518
    %v2029 = vunpack.c.h.b16 %v518
    %v2030 = vunpack.c.l.b16 %v519
    %v2031 = vunpack.c.h.b16 %v519
    %v2032 = vunpack.c.l.b16 %v520
    %v2033 = vunpack.c.h.b16 %v520
    %v2034 = vunpack.c.l.b16 %v521
    %v2035 = vunpack.c.h.b16 %v521
    %v2036 = vunpack.c.l.b16 %v522
    %v2037 = vunpack.c.h.b16 %v522
    %v2038 = vunpack.c.l.b16 %v523
    %v2039 = vunpack.c.h.b16 %v523
    %v2040 = vunpack.c.l.b16 %v524
    %v2041 = vunpack.c.h.b16 %v524
    %v2042 = vunpack.c.l.b16 %v525
    %v2043 = vunpack.c.h.b16 %v525
    %v2044 = vunpack.c.l.b16 %v526
    %v2045 = vunpack.c.h.b16 %v526
    %v2046 = vunpack.c.l.b16 %v527
    %v2047 = vunpack.c.h.b16 %v527
    %v2048 = vunpack.c.l.b16 %v528
    %v2049 = vunpack.c.h.b16 %v528
    %v2050 = vunpack.c.l.b16 %v529
    %v2051 = vunpack.c.h.b16 %v529
    %v2052 = vunpack.c.l.b16 %v530
    %v2053 = vunpack.c.h.b16 %v530
    %v2054 = vunpack.c.l.b16 %v531
    %v2055 = vunpack.c.h.b16 %v531
    %v2056 = vunpack.c.l.b16 %v532
    %v2057 = vunpack.c.h.b16 %v532
    %v2058 = vunpack.c.l.b16 %v533
    %v2059 = vunpack.c.h.b16 %v533
    %v2060 = vunpack.c.l.b16 %v534
    %v2061 = vunpack.c.h.b16 %v534
    %v2062 = vunpack.c.l.b16 %v535
    %v2063 = vunpack.c.h.b16 %v535
    %v2064 = vunpack.c.l.b16 %v536
    %v2065 = vunpack.c.h.b16 %v536
    %v2066 = vunpack.c.l.b16 %v537
    %v2067 = vunpack.c.h.b16 %v537
    %v2068 = vunpack.c.l.b16 %v538
    %v2069 = vunpack.c.h.b16 %v538
    %v2070 = vunpack.c.l.b16 %v539
    %v2071 = vunpack.c.h.b16 %v539
    %v2072 = vunpack.c.l.b16 %v540
    %v2073 = vunpack.c.h.b16 %v540
    %v2074 = vunpack.c.l.b16 %v541
    %v2075 = vunpack.c.h.b16 %v541
    %v2076 = vunpack.c.l.b16 %v542
    %v2077 = vunpack.c.h.b16 %v542
    %v2078 = vunpack.c.l.b16 %v543
    %v2079 = vunpack.c.h.b16 %v543
    %v2080 = vunpack.c.l.b16 %v544
    %v2081 = vunpack.c.h.b16 %v544
    %v2082 = vunpack.c.l.b16 %v545
    %v2083 = vunpack.c.h.b16 %v545
    %v2084 = vunpack.c.l.b16 %v546
    %v2085 = vunpack.c.h.b16 %v546
    %v2086 = vunpack.c.l.b16 %v547
    %v2087 = vunpack.c.h.b16 %v547
    %v2088 = vunpack.c.l.b16 %v548
    %v2089 = vunpack.c.h.b16 %v548
    %v2090 = vunpack.c.l.b16 %v549
    %v2091 = vunpack.c.h.b16 %v549
    %v2092 = vunpack.c.l.b16 %v550
    %v2093 = vunpack.c.h.b16 %v550
    %v2094 = vunpack.c.l.b16 %v551
    %v2095 = vunpack.c.h.b16 %v551
    %v2096 = vunpack.c.l.b16 %v552
    %v2097 = vunpack.c.h.b16 %v552
    %v2098 = vunpack.c.l.b16 %v553
    %v2099 = vunpack.c.h.b16 %v553
    %v2100 = vunpack.c.l.b16 %v554
    %v2101 = vunpack.c.h.b16 %v554
    %v2102 = vunpack.c.l.b16 %v555
    %v2103 = vunpack.c.h.b16 %v555
    %v2104 = vunpack.c.l.b16 %v556
    %v2105 = vunpack.c.h.b16 %v556
    %v2106 = vunpack.c.l.b16 %v557
    %v2107 = vunpack.c.h.b16 %v557
    %v2108 = vunpack.c.l.b16 %v558
    %v2109 = vunpack.c.h.b16 %v558
    %v2110 = vunpack.c.l.b16 %v559
    %v2111 = vunpack.c.h.b16 %v559
    %v2112 = vunpack.c.l.b16 %v560
    %v2113 = vunpack.c.h.b16 %v560
    %v2114 = vunpack.c.l.b16 %v561
    %v2115 = vunpack.c.h.b16 %v561
    %v2116 = vunpack.c.l.b16 %v562
    %v2117 = vunpack.c.h.b16 %v562
    %v2118 = vunpack.c.l.b16 %v563
    %v2119 = vunpack.c.h.b16 %v563
    %v2120 = vunpack.c.l.b16 %v564
    %v2121 = vunpack.c.h.b16 %v564
    %v2122 = vunpack.c.l.b16 %v565
    %v2123 = vunpack.c.h.b16 %v565
    %v2124 = vunpack.c.l.b16 %v566
    %v2125 = vunpack.c.h.b16 %v566
    %v2126 = vunpack.c.l.b16 %v567
    %v2127 = vunpack.c.h.b16 %v567
    %v2128 = vunpack.c.l.b16 %v568
    %v2129 = vunpack.c.h.b16 %v568
    %v2130 = vunpack.c.l.b16 %v569
    %v2131 = vunpack.c.h.b16 %v569
    %v2132 = vunpack.c.l.b16 %v570
    %v2133 = vunpack.c.h.b16 %v570
    %v2134 = vunpack.c.l.b16 %v571
    %v2135 = vunpack.c.h.b16 %v571
    %v2136 = vunpack.c.l.b16 %v572
    %v2137 = vunpack.c.h.b16 %v572
    %v2138 = vunpack.c.l.b16 %v573
    %v2139 = vunpack.c.h.b16 %v573
    %v2140 = vunpack.c.l.b16 %v574
    %v2141 = vunpack.c.h.b16 %v574
    %v2142 = vunpack.c.l.b16 %v575
    %v2143 = vunpack.c.h.b16 %v575
    %v2144 = vunpack.c.l.b16 %v576
    %v2145 = vunpack.c.h.b16 %v576
    %v2146 = vunpack.c.l.b16 %v577
    %v2147 = vunpack.c.h.b16 %v577
    %v2148 = vunpack.c.l.b16 %v578
    %v2149 = vunpack.c.h.b16 %v578
    %v2150 = vunpack.c.l.b16 %v579
    %v2151 = vunpack.c.h.b16 %v579
    %v2152 = vunpack.c.l.b16 %v580
    %v2153 = vunpack.c.h.b16 %v580
    %v2154 = vunpack.c.l.b16 %v581
    %v2155 = vunpack.c.h.b16 %v581
    %v2156 = vunpack.c.l.b16 %v582
    %v2157 = vunpack.c.h.b16 %v582
    %v2158 = vunpack.c.l.b16 %v583
    %v2159 = vunpack.c.h.b16 %v583
    %v2160 = vunpack.c.l.b16 %v584
    %v2161 = vunpack.c.h.b16 %v584
    %v2162 = vunpack.c.l.b16 %v585
    %v2163 = vunpack.c.h.b16 %v585
    %v2164 = vunpack.c.l.b16 %v586
    %v2165 = vunpack.c.h.b16 %v586
    %v2166 = vunpack.c.l.b16 %v587
    %v2167 = vunpack.c.h.b16 %v587
    %v2168 = vunpack.c.l.b16 %v588
    %v2169 = vunpack.c.h.b16 %v588
    %v2170 = vunpack.c.l.b16 %v589
    %v2171 = vunpack.c.h.b16 %v589
    %v2172 = vunpack.c.l.b16 %v590
    %v2173 = vunpack.c.h.b16 %v590
    %v2174 = vunpack.c.l.b16 %v591
    %v2175 = vunpack.c.h.b16 %v591
    %v2176 = vunpack.c.l.b16 %v592
    %v2177 = vunpack.c.h.b16 %v592
    %v2178 = vunpack.c.l.b16 %v593
    %v2179 = vunpack.c.h.b16 %v593
    %v2180 = vunpack.c.l.b16 %v594
    %v2181 = vunpack.c.h.b16 %v594
    %v2182 = vunpack.c.l.b16 %v595
    %v2183 = vunpack.c.h.b16 %v595
    %v2184 = vunpack.c.l.b16 %v596
    %v2185 = vunpack.c.h.b16 %v596
    %v2186 = vunpack.c.l.b16 %v597
    %v2187 = vunpack.c.h.b16 %v597
    %v2188 = vunpack.c.l.b16 %v598
    %v2189 = vunpack.c.h.b16 %v598
    %v2190 = vunpack.c.l.b16 %v599
    %v2191 = vunpack.c.h.b16 %v599
    %v2192 = vunpack.c.l.b16 %v600
    %v2193 = vunpack.c.h.b16 %v600
    %v2194 = vunpack.c.l.b16 %v601
    %v2195 = vunpack.c.h.b16 %v601
    %v2196 = vunpack.c.l.b16 %v602
    %v2197 = vunpack.c.h.b16 %v602
    %v2198 = vunpack.c.l.b16 %v603
    %v2199 = vunpack.c.h.b16 %v603
    %v2200 = vunpack.c.l.b16 %v604
    %v2201 = vunpack.c.h.b16 %v604
    %v2202 = vunpack.c.l.b16 %v605
    %v2203 = vunpack.c.h.b16 %v605
    %v2204 = vunpack.c.l.b16 %v606
    %v2205 = vunpack.c.h.b16 %v606
    %v2206 = vunpack.c.l.b16 %v607
    %v2207 = vunpack.c.h.b16 %v607
    %v2208 = vunpack.c.l.b16 %v608
    %v2209 = vunpack.c.h.b16 %v608
    %v2210 = vunpack.c.l.b16 %v609
    %v2211 = vunpack.c.h.b16 %v609
    %v2212 = vunpack.c.l.b16 %v610
    %v2213 = vunpack.c.h.b16 %v610
    %v2214 = vunpack.c.l.b16 %v611
    %v2215 = vunpack.c.h.b16 %v611
    %v2216 = vunpack.c.l.b16 %v612
    %v2217 = vunpack.c.h.b16 %v612
    %v2218 = vunpack.c.l.b16 %v613
    %v2219 = vunpack.c.h.b16 %v613
    %v2220 = vunpack.c.l.b16 %v614
    %v2221 = vunpack.c.h.b16 %v614
    %v2222 = vunpack.c.l.b16 %v615
    %v2223 = vunpack.c.h.b16 %v615
    %v2224 = vunpack.c.l.b16 %v616
    %v2225 = vunpack.c.h.b16 %v616
    %v2226 = vunpack.c.l.b16 %v617
    %v2227 = vunpack.c.h.b16 %v617
    %v2228 = vunpack.c.l.b16 %v618
    %v2229 = vunpack.c.h.b16 %v618
    %v2230 = vunpack.c.l.b16 %v619
    %v2231 = vunpack.c.h.b16 %v619
    %v2232 = vunpack.c.l.b16 %v620
    %v2233 = vunpack.c.h.b16 %v620
    %v2234 = vunpack.c.l.b16 %v621
    %v2235 = vunpack.c.h.b16 %v621
    %v2236 = vunpack.c.l.b16 %v622
    %v2237 = vunpack.c.h.b16 %v622
    %v2238 = vunpack.c.l.b16 %v623
    %v2239 = vunpack.c.h.b16 %v623
    %v2240 = vunpack.c.l.b16 %v624
    %v2241 = vunpack.c.h.b16 %v624
    %v2242 = vunpack.c.l.b16 %v625
    %v2243 = vunpack.c.h.b16 %v625
    %v2244 = vpack.c.b16 %v1228, %v1220
    %v2245 = vpack.c.b16 %v1229, %v1221
    %v2246 = vpack.c.b16 %v1230, %v1222
    %v2247 = vpack.c.b16 %v1231, %v1223
    %v2248 = vpack.c.b16 %v1232, %v1224
    %v2249 = vpack.c.b16 %v1233, %v1225
    %v2250 = vpack.c.b16 %v1234, %v1226
    %v2251 = vpack.c.b16 %v1235, %v1227
    %v2252 = vpack.c.b16 %v1244, %v1236
    %v2253 = vpack.c.b16 %v1245, %v1237
    %v2254 = vpack.c.b16 %v1246, %v1238
    %v2255 = vpack.c.b16 %v1247, %v1239
    %v2256 = vpack.c.b16 %v1248, %v1240
    %v2257 = vpack.c.b16 %v1249, %v1241
    %v2258 = vpack.c.b16 %v1250, %v1242
    %v2259 = vpack.c.b16 %v1251, %v1243
    %v2260 = vpack.c.b16 %v1260, %v1252
    %v2261 = vpack.c.b16 %v1261, %v1253
    %v2262 = vpack.c.b16 %v1262, %v1254
    %v2263 = vpack.c.b16 %v1263, %v1255
    %v2264 = vpack.c.b16 %v1264, %v1256
    %v2265 = vpack.c.b16 %v1265, %v1257
    %v2266 = vpack.c.b16 %v1266, %v1258
    %v2267 = vpack.c.b16 %v1267, %v1259
    %v2268 = vpack.c.b16 %v1276, %v1268
    %v2269 = vpack.c.b16 %v1277, %v1269
    %v2270 = vpack.c.b16 %v1278, %v1270
    %v2271 = vpack.c.b16 %v1279, %v1271
    %v2272 = vpack.c.b16 %v1280, %v1272
    %v2273 = vpack.c.b16 %v1281, %v1273
    %v2274 = vpack.c.b16 %v1282, %v1274
    %v2275 = vpack.c.b16 %v1283, %v1275
    %v2276 = vpack.c.b16 %v1292, %v1284
    %v2277 = vpack.c.b16 %v1293, %v1285
    %v2278 = vpack.c.b16 %v1294, %v1286
    %v2279 = vpack.c.b16 %v1295, %v1287
    %v2280 = vpack.c.b16 %v1296, %v1288
    %v2281 = vpack.c.b16 %v1297, %v1289
    %v2282 = vpack.c.b16 %v1298, %v1290
    %v2283 = vpack.c.b16 %v1299, %v1291
    %v2284 = vpack.c.b16 %v1308, %v1300
    %v2285 = vpack.c.b16 %v1309, %v1301
    %v2286 = vpack.c.b16 %v1310, %v1302
    %v2287 = vpack.c.b16 %v1311, %v1303
    %v2288 = vpack.c.b16 %v1312, %v1304
    %v2289 = vpack.c.b16 %v1313, %v1305
    %v2290 = vpack.c.b16 %v1314, %v1306
    %v2291 = vpack.c.b16 %v1315, %v1307
    %v2292 = vpack.c.b16 %v1324, %v1316
    %v2293 = vpack.c.b16 %v1325, %v1317
    %v2294 = vpack.c.b16 %v1326, %v1318
    %v2295 = vpack.c.b16 %v1327, %v1319
    %v2296 = vpack.c.b16 %v1328, %v1320
    %v2297 = vpack.c.b16 %v1329, %v1321
    %v2298 = vpack.c.b16 %v1330, %v1322
    %v2299 = vpack.c.b16 %v1331, %v1323
    %v2300 = vpack.c.b16 %v1340, %v1332
    %v2301 = vpack.c.b16 %v1341, %v1333
    %v2302 = vpack.c.b16 %v1342, %v1334
    %v2303 = vpack.c.b16 %v1343, %v1335
    %v2304 = vpack.c.b16 %v1344, %v1336
    %v2305 = vpack.c.b16 %v1345, %v1337
    %v2306 = vpack.c.b16 %v1346, %v1338
    %v2307 = vpack.c.b16 %v1347, %v1339
    %v2308 = vpack.c.b16 %v1356, %v1348
    %v2309 = vpack.c.b16 %v1357, %v1349
    %v2310 = vpack.c.b16 %v1358, %v1350
    %v2311 = vpack.c.b16 %v1359, %v1351
    %v2312 = vpack.c.b16 %v1360, %v1352
    %v2313 = vpack.c.b16 %v1361, %v1353
    %v2314 = vpack.c.b16 %v1362, %v1354
    %v2315 = vpack.c.b16 %v1363, %v1355
    %v2316 = vpack.c.b16 %v1372, %v1364
    %v2317 = vpack.c.b16 %v1373, %v1365
    %v2318 = vpack.c.b16 %v1374, %v1366
    %v2319 = vpack.c.b16 %v1375, %v1367
    %v2320 = vpack.c.b16 %v1376, %v1368
    %v2321 = vpack.c.b16 %v1377, %v1369
    %v2322 = vpack.c.b16 %v1378, %v1370
    %v2323 = vpack.c.b16 %v1379, %v1371
    %v2324 = vpack.c.b16 %v1388, %v1380
    %v2325 = vpack.c.b16 %v1389, %v1381
    %v2326 = vpack.c.b16 %v1390, %v1382
    %v2327 = vpack.c.b16 %v1391, %v1383
    %v2328 = vpack.c.b16 %v1392, %v1384
    %v2329 = vpack.c.b16 %v1393, %v1385
    %v2330 = vpack.c.b16 %v1394, %v1386
    %v2331 = vpack.c.b16 %v1395, %v1387
    %v2332 = vpack.c.b16 %v1404, %v1396
    %v2333 = vpack.c.b16 %v1405, %v1397
    %v2334 = vpack.c.b16 %v1406, %v1398
    %v2335 = vpack.c.b16 %v1407, %v1399
    %v2336 = vpack.c.b16 %v1408, %v1400
    %v2337 = vpack.c.b16 %v1409, %v1401
    %v2338 = vpack.c.b16 %v1410, %v1402
    %v2339 = vpack.c.b16 %v1411, %v1403
    %v2340 = vpack.c.b16 %v1420, %v1412
    %v2341 = vpack.c.b16 %v1421, %v1413
    %v2342 = vpack.c.b16 %v1422, %v1414
    %v2343 = vpack.c.b16 %v1423, %v1415
    %v2344 = vpack.c.b16 %v1424, %v1416
    %v2345 = vpack.c.b16 %v1425, %v1417
    %v2346 = vpack.c.b16 %v1426, %v1418
    %v2347 = vpack.c.b16 %v1427, %v1419
    %v2348 = vpack.c.b16 %v1436, %v1428
    %v2349 = vpack.c.b16 %v1437, %v1429
    %v2350 = vpack.c.b16 %v1438, %v1430
    %v2351 = vpack.c.b16 %v1439, %v1431
    %v2352 = vpack.c.b16 %v1440, %v1432
    %v2353 = vpack.c.b16 %v1441, %v1433
    %v2354 = vpack.c.b16 %v1442, %v1434
    %v2355 = vpack.c.b16 %v1443, %v1435
    %v2356 = vpack.c.b16 %v1452, %v1444
    %v2357 = vpack.c.b16 %v1453, %v1445
    %v2358 = vpack.c.b16 %v1454, %v1446
    %v2359 = vpack.c.b16 %v1455, %v1447
    %v2360 = vpack.c.b16 %v1456, %v1448
    %v2361 = vpack.c.b16 %v1457, %v1449
    %v2362 = vpack.c.b16 %v1458, %v1450
    %v2363 = vpack.c.b16 %v1459, %v1451
    %v2364 = vpack.c.b16 %v1468, %v1460
    %v2365 = vpack.c.b16 %v1469, %v1461
    %v2366 = vpack.c.b16 %v1470, %v1462
    %v2367 = vpack.c.b16 %v1471, %v1463
    %v2368 = vpack.c.b16 %v1472, %v1464
    %v2369 = vpack.c.b16 %v1473, %v1465
    %v2370 = vpack.c.b16 %v1474, %v1466
    %v2371 = vpack.c.b16 %v1475, %v1467
    %v2372 = vpack.c.b16 %v1484, %v1476
    %v2373 = vpack.c.b16 %v1485, %v1477
    %v2374 = vpack.c.b16 %v1486, %v1478
    %v2375 = vpack.c.b16 %v1487, %v1479
    %v2376 = vpack.c.b16 %v1488, %v1480
    %v2377 = vpack.c.b16 %v1489, %v1481
    %v2378 = vpack.c.b16 %v1490, %v1482
    %v2379 = vpack.c.b16 %v1491, %v1483
    %v2380 = vpack.c.b16 %v1500, %v1492
    %v2381 = vpack.c.b16 %v1501, %v1493
    %v2382 = vpack.c.b16 %v1502, %v1494
    %v2383 = vpack.c.b16 %v1503, %v1495
    %v2384 = vpack.c.b16 %v1504, %v1496
    %v2385 = vpack.c.b16 %v1505, %v1497
    %v2386 = vpack.c.b16 %v1506, %v1498
    %v2387 = vpack.c.b16 %v1507, %v1499
    %v2388 = vpack.c.b16 %v1516, %v1508
    %v2389 = vpack.c.b16 %v1517, %v1509
    %v2390 = vpack.c.b16 %v1518, %v1510
    %v2391 = vpack.c.b16 %v1519, %v1511
    %v2392 = vpack.c.b16 %v1520, %v1512
    %v2393 = vpack.c.b16 %v1521, %v1513
    %v2394 = vpack.c.b16 %v1522, %v1514
    %v2395 = vpack.c.b16 %v1523, %v1515
    %v2396 = vpack.c.b16 %v1532, %v1524
    %v2397 = vpack.c.b16 %v1533, %v1525
    %v2398 = vpack.c.b16 %v1534, %v1526
    %v2399 = vpack.c.b16 %v1535, %v1527
    %v2400 = vpack.c.b16 %v1536, %v1528
    %v2401 = vpack.c.b16 %v1537, %v1529
    %v2402 = vpack.c.b16 %v1538, %v1530
    %v2403 = vpack.c.b16 %v1539, %v1531
    %v2404 = vpack.c.b16 %v1548, %v1540
    %v2405 = vpack.c.b16 %v1549, %v1541
    %v2406 = vpack.c.b16 %v1550, %v1542
    %v2407 = vpack.c.b16 %v1551, %v1543
    %v2408 = vpack.c.b16 %v1552, %v1544
    %v2409 = vpack.c.b16 %v1553, %v1545
    %v2410 = vpack.c.b16 %v1554, %v1546
    %v2411 = vpack.c.b16 %v1555, %v1547
    %v2412 = vpack.c.b16 %v1564, %v1556
    %v2413 = vpack.c.b16 %v1565, %v1557
    %v2414 = vpack.c.b16 %v1566, %v1558
    %v2415 = vpack.c.b16 %v1567, %v1559
    %v2416 = vpack.c.b16 %v1568, %v1560
    %v2417 = vpack.c.b16 %v1569, %v1561
    %v2418 = vpack.c.b16 %v1570, %v1562
    %v2419 = vpack.c.b16 %v1571, %v1563
    %v2420 = vpack.c.b16 %v1580, %v1572
    %v2421 = vpack.c.b16 %v1581, %v1573
    %v2422 = vpack.c.b16 %v1582, %v1574
    %v2423 = vpack.c.b16 %v1583, %v1575
    %v2424 = vpack.c.b16 %v1584, %v1576
    %v2425 = vpack.c.b16 %v1585, %v1577
    %v2426 = vpack.c.b16 %v1586, %v1578
    %v2427 = vpack.c.b16 %v1587, %v1579
    %v2428 = vpack.c.b16 %v1596, %v1588
    %v2429 = vpack.c.b16 %v1597, %v1589
    %v2430 = vpack.c.b16 %v1598, %v1590
    %v2431 = vpack.c.b16 %v1599, %v1591
    %v2432 = vpack.c.b16 %v1600, %v1592
    %v2433 = vpack.c.b16 %v1601, %v1593
    %v2434 = vpack.c.b16 %v1602, %v1594
    %v2435 = vpack.c.b16 %v1603, %v1595
    %v2436 = vpack.c.b16 %v1612, %v1604
    %v2437 = vpack.c.b16 %v1613, %v1605
    %v2438 = vpack.c.b16 %v1614, %v1606
    %v2439 = vpack.c.b16 %v1615, %v1607
    %v2440 = vpack.c.b16 %v1616, %v1608
    %v2441 = vpack.c.b16 %v1617, %v1609
    %v2442 = vpack.c.b16 %v1618, %v1610
    %v2443 = vpack.c.b16 %v1619, %v1611
    %v2444 = vpack.c.b16 %v1628, %v1620
    %v2445 = vpack.c.b16 %v1629, %v1621
    %v2446 = vpack.c.b16 %v1630, %v1622
    %v2447 = vpack.c.b16 %v1631, %v1623
    %v2448 = vpack.c.b16 %v1632, %v1624
    %v2449 = vpack.c.b16 %v1633, %v1625
    %v2450 = vpack.c.b16 %v1634, %v1626
    %v2451 = vpack.c.b16 %v1635, %v1627
    %v2452 = vpack.c.b16 %v1644, %v1636
    %v2453 = vpack.c.b16 %v1645, %v1637
    %v2454 = vpack.c.b16 %v1646, %v1638
    %v2455 = vpack.c.b16 %v1647, %v1639
    %v2456 = vpack.c.b16 %v1648, %v1640
    %v2457 = vpack.c.b16 %v1649, %v1641
    %v2458 = vpack.c.b16 %v1650, %v1642
    %v2459 = vpack.c.b16 %v1651, %v1643
    %v2460 = vpack.c.b16 %v1660, %v1652
    %v2461 = vpack.c.b16 %v1661, %v1653
    %v2462 = vpack.c.b16 %v1662, %v1654
    %v2463 = vpack.c.b16 %v1663, %v1655
    %v2464 = vpack.c.b16 %v1664, %v1656
    %v2465 = vpack.c.b16 %v1665, %v1657
    %v2466 = vpack.c.b16 %v1666, %v1658
    %v2467 = vpack.c.b16 %v1667, %v1659
    %v2468 = vpack.c.b16 %v1676, %v1668
    %v2469 = vpack.c.b16 %v1677, %v1669
    %v2470 = vpack.c.b16 %v1678, %v1670
    %v2471 = vpack.c.b16 %v1679, %v1671
    %v2472 = vpack.c.b16 %v1680, %v1672
    %v2473 = vpack.c.b16 %v1681, %v1673
    %v2474 = vpack.c.b16 %v1682, %v1674
    %v2475 = vpack.c.b16 %v1683, %v1675
    %v2476 = vpack.c.b16 %v1692, %v1684
    %v2477 = vpack.c.b16 %v1693, %v1685
    %v2478 = vpack.c.b16 %v1694, %v1686
    %v2479 = vpack.c.b16 %v1695, %v1687
    %v2480 = vpack.c.b16 %v1696, %v1688
    %v2481 = vpack.c.b16 %v1697, %v1689
    %v2482 = vpack.c.b16 %v1698, %v1690
    %v2483 = vpack.c.b16 %v1699, %v1691
    %v2484 = vpack.c.b16 %v1708, %v1700
    %v2485 = vpack.c.b16 %v1709, %v1701
    %v2486 = vpack.c.b16 %v1710, %v1702
    %v2487 = vpack.c.b16 %v1711, %v1703
    %v2488 = vpack.c.b16 %v1712, %v1704
    %v2489 = vpack.c.b16 %v1713, %v1705
    %v2490 = vpack.c.b16 %v1714, %v1706
    %v2491 = vpack.c.b16 %v1715, %v1707
    %v2492 = vpack.c.b16 %v1724, %v1716
    %v2493 = vpack.c.b16 %v1725, %v1717
    %v2494 = vpack.c.b16 %v1726, %v1718
    %v2495 = vpack.c.b16 %v1727, %v1719
    %v2496 = vpack.c.b16 %v1728, %v1720
    %v2497 = vpack.c.b16 %v1729, %v1721
    %v2498 = vpack.c.b16 %v1730, %v1722
    %v2499 = vpack.c.b16 %v1731, %v1723
    %v2500 = vpack.c.b16 %v1740, %v1732
    %v2501 = vpack.c.b16 %v1741, %v1733
    %v2502 = vpack.c.b16 %v1742, %v1734
    %v2503 = vpack.c.b16 %v1743, %v1735
    %v2504 = vpack.c.b16 %v1744, %v1736
    %v2505 = vpack.c.b16 %v1745, %v1737
    %v2506 = vpack.c.b16 %v1746, %v1738
    %v2507 = vpack.c.b16 %v1747, %v1739
    %v2508 = vpack.c.b16 %v1756, %v1748
    %v2509 = vpack.c.b16 %v1757, %v1749
    %v2510 = vpack.c.b16 %v1758, %v1750
    %v2511 = vpack.c.b16 %v1759, %v1751
    %v2512 = vpack.c.b16 %v1760, %v1752
    %v2513 = vpack.c.b16 %v1761, %v1753
    %v2514 = vpack.c.b16 %v1762, %v1754
    %v2515 = vpack.c.b16 %v1763, %v1755
    %v2516 = vpack.c.b16 %v1772, %v1764
    %v2517 = vpack.c.b16 %v1773, %v1765
    %v2518 = vpack.c.b16 %v1774, %v1766
    %v2519 = vpack.c.b16 %v1775, %v1767
    %v2520 = vpack.c.b16 %v1776, %v1768
    %v2521 = vpack.c.b16 %v1777, %v1769
    %v2522 = vpack.c.b16 %v1778, %v1770
    %v2523 = vpack.c.b16 %v1779, %v1771
    %v2524 = vpack.c.b16 %v1788, %v1780
    %v2525 = vpack.c.b16 %v1789, %v1781
    %v2526 = vpack.c.b16 %v1790, %v1782
    %v2527 = vpack.c.b16 %v1791, %v1783
    %v2528 = vpack.c.b16 %v1792, %v1784
    %v2529 = vpack.c.b16 %v1793, %v1785
    %v2530 = vpack.c.b16 %v1794, %v1786
    %v2531 = vpack.c.b16 %v1795, %v1787
    %v2532 = vpack.c.b16 %v1804, %v1796
    %v2533 = vpack.c.b16 %v1805, %v1797
    %v2534 = vpack.c.b16 %v1806, %v1798
    %v2535 = vpack.c.b16 %v1807, %v1799
    %v2536 = vpack.c.b16 %v1808, %v1800
    %v2537 = vpack.c.b16 %v1809, %v1801
    %v2538 = vpack.c.b16 %v1810, %v1802
    %v2539 = vpack.c.b16 %v1811, %v1803
    %v2540 = vpack.c.b16 %v1820, %v1812
    %v2541 = vpack.c.b16 %v1821, %v1813
    %v2542 = vpack.c.b16 %v1822, %v1814
    %v2543 = vpack.c.b16 %v1823, %v1815
    %v2544 = vpack.c.b16 %v1824, %v1816
    %v2545 = vpack.c.b16 %v1825, %v1817
    %v2546 = vpack.c.b16 %v1826, %v1818
    %v2547 = vpack.c.b16 %v1827, %v1819
    %v2548 = vpack.c.b16 %v1836, %v1828
    %v2549 = vpack.c.b16 %v1837, %v1829
    %v2550 = vpack.c.b16 %v1838, %v1830
    %v2551 = vpack.c.b16 %v1839, %v1831
    %v2552 = vpack.c.b16 %v1840, %v1832
    %v2553 = vpack.c.b16 %v1841, %v1833
    %v2554 = vpack.c.b16 %v1842, %v1834
    %v2555 = vpack.c.b16 %v1843, %v1835
    %v2556 = vpack.c.b16 %v1852, %v1844
    %v2557 = vpack.c.b16 %v1853, %v1845
    %v2558 = vpack.c.b16 %v1854, %v1846
    %v2559 = vpack.c.b16 %v1855, %v1847
    %v2560 = vpack.c.b16 %v1856, %v1848
    %v2561 = vpack.c.b16 %v1857, %v1849
    %v2562 = vpack.c.b16 %v1858, %v1850
    %v2563 = vpack.c.b16 %v1859, %v1851
    %v2564 = vpack.c.b16 %v1868, %v1860
    %v2565 = vpack.c.b16 %v1869, %v1861
    %v2566 = vpack.c.b16 %v1870, %v1862
    %v2567 = vpack.c.b16 %v1871, %v1863
    %v2568 = vpack.c.b16 %v1872, %v1864
    %v2569 = vpack.c.b16 %v1873, %v1865
    %v2570 = vpack.c.b16 %v1874, %v1866
    %v2571 = vpack.c.b16 %v1875, %v1867
    %v2572 = vpack.c.b16 %v1884, %v1876
    %v2573 = vpack.c.b16 %v1885, %v1877
    %v2574 = vpack.c.b16 %v1886, %v1878
    %v2575 = vpack.c.b16 %v1887, %v1879
    %v2576 = vpack.c.b16 %v1888, %v1880
    %v2577 = vpack.c.b16 %v1889, %v1881
    %v2578 = vpack.c.b16 %v1890, %v1882
    %v2579 = vpack.c.b16 %v1891, %v1883
    %v2580 = vpack.c.b16 %v1900, %v1892
    %v2581 = vpack.c.b16 %v1901, %v1893
    %v2582 = vpack.c.b16 %v1902, %v1894
    %v2583 = vpack.c.b16 %v1903, %v1895
    %v2584 = vpack.c.b16 %v1904, %v1896
    %v2585 = vpack.c.b16 %v1905, %v1897
    %v2586 = vpack.c.b16 %v1906, %v1898
    %v2587 = vpack.c.b16 %v1907, %v1899
    %v2588 = vpack.c.b16 %v1916, %v1908
    %v2589 = vpack.c.b16 %v1917, %v1909
    %v2590 = vpack.c.b16 %v1918, %v1910
    %v2591 = vpack.c.b16 %v1919, %v1911
    %v2592 = vpack.c.b16 %v1920, %v1912
    %v2593 = vpack.c.b16 %v1921, %v1913
    %v2594 = vpack.c.b16 %v1922, %v1914
    %v2595 = vpack.c.b16 %v1923, %v1915
    %v2596 = vpack.c.b16 %v1932, %v1924
    %v2597 = vpack.c.b16 %v1933, %v1925
    %v2598 = vpack.c.b16 %v1934, %v1926
    %v2599 = vpack.c.b16 %v1935, %v1927
    %v2600 = vpack.c.b16 %v1936, %v1928
    %v2601 = vpack.c.b16 %v1937, %v1929
    %v2602 = vpack.c.b16 %v1938, %v1930
    %v2603 = vpack.c.b16 %v1939, %v1931
    %v2604 = vpack.c.b16 %v1948, %v1940
    %v2605 = vpack.c.b16 %v1949, %v1941
    %v2606 = vpack.c.b16 %v1950, %v1942
    %v2607 = vpack.c.b16 %v1951, %v1943
    %v2608 = vpack.c.b16 %v1952, %v1944
    %v2609 = vpack.c.b16 %v1953, %v1945
    %v2610 = vpack.c.b16 %v1954, %v1946
    %v2611 = vpack.c.b16 %v1955, %v1947
    %v2612 = vpack.c.b16 %v1964, %v1956
    %v2613 = vpack.c.b16 %v1965, %v1957
    %v2614 = vpack.c.b16 %v1966, %v1958
    %v2615 = vpack.c.b16 %v1967, %v1959
    %v2616 = vpack.c.b16 %v1968, %v1960
    %v2617 = vpack.c.b16 %v1969, %v1961
    %v2618 = vpack.c.b16 %v1970, %v1962
    %v2619 = vpack.c.b16 %v1971, %v1963
    %v2620 = vpack.c.b16 %v1980, %v1972
    %v2621 = vpack.c.b16 %v1981, %v1973
    %v2622 = vpack.c.b16 %v1982, %v1974
    %v2623 = vpack.c.b16 %v1983, %v1975
    %v2624 = vpack.c.b16 %v1984, %v1976
    %v2625 = vpack.c.b16 %v1985, %v1977
    %v2626 = vpack.c.b16 %v1986, %v1978
    %v2627 = vpack.c.b16 %v1987, %v1979
    %v2628 = vpack.c.b16 %v1996, %v1988
    %v2629 = vpack.c.b16 %v1997, %v1989
    %v2630 = vpack.c.b16 %v1998, %v1990
    %v2631 = vpack.c.b16 %v1999, %v1991
    %v2632 = vpack.c.b16 %v2000, %v1992
    %v2633 = vpack.c.b16 %v2001, %v1993
    %v2634 = vpack.c.b16 %v2002, %v1994
    %v2635 = vpack.c.b16 %v2003, %v1995
    %v2636 = vpack.c.b16 %v2012, %v2004
    %v2637 = vpack.c.b16 %v2013, %v2005
    %v2638 = vpack.c.b16 %v2014, %v2006
    %v2639 = vpack.c.b16 %v2015, %v2007
    %v2640 = vpack.c.b16 %v2016, %v2008
    %v2641 = vpack.c.b16 %v2017, %v2009
    %v2642 = vpack.c.b16 %v2018, %v2010
    %v2643 = vpack.c.b16 %v2019, %v2011
    %v2644 = vpack.c.b16 %v2028, %v2020
    %v2645 = vpack.c.b16 %v2029, %v2021
    %v2646 = vpack.c.b16 %v2030, %v2022
    %v2647 = vpack.c.b16 %v2031, %v2023
    %v2648 = vpack.c.b16 %v2032, %v2024
    %v2649 = vpack.c.b16 %v2033, %v2025
    %v2650 = vpack.c.b16 %v2034, %v2026
    %v2651 = vpack.c.b16 %v2035, %v2027
    %v2652 = vpack.c.b16 %v2044, %v2036
    %v2653 = vpack.c.b16 %v2045, %v2037
    %v2654 = vpack.c.b16 %v2046, %v2038
    %v2655 = vpack.c.b16 %v2047, %v2039
    %v2656 = vpack.c.b16 %v2048, %v2040
    %v2657 = vpack.c.b16 %v2049, %v2041
    %v2658 = vpack.c.b16 %v2050, %v2042
    %v2659 = vpack.c.b16 %v2051, %v2043
    %v2660 = vpack.c.b16 %v2060, %v2052
    %v2661 = vpack.c.b16 %v2061, %v2053
    %v2662 = vpack.c.b16 %v2062, %v2054
    %v2663 = vpack.c.b16 %v2063, %v2055
    %v2664 = vpack.c.b16 %v2064, %v2056
    %v2665 = vpack.c.b16 %v2065, %v2057
    %v2666 = vpack.c.b16 %v2066, %v2058
    %v2667 = vpack.c.b16 %v2067, %v2059
    %v2668 = vpack.c.b16 %v2076, %v2068
    %v2669 = vpack.c.b16 %v2077, %v2069
    %v2670 = vpack.c.b16 %v2078, %v2070
    %v2671 = vpack.c.b16 %v2079, %v2071
    %v2672 = vpack.c.b16 %v2080, %v2072
    %v2673 = vpack.c.b16 %v2081, %v2073
    %v2674 = vpack.c.b16 %v2082, %v2074
    %v2675 = vpack.c.b16 %v2083, %v2075
    %v2676 = vpack.c.b16 %v2092, %v2084
    %v2677 = vpack.c.b16 %v2093, %v2085
    %v2678 = vpack.c.b16 %v2094, %v2086
    %v2679 = vpack.c.b16 %v2095, %v2087
    %v2680 = vpack.c.b16 %v2096, %v2088
    %v2681 = vpack.c.b16 %v2097, %v2089
    %v2682 = vpack.c.b16 %v2098, %v2090
    %v2683 = vpack.c.b16 %v2099, %v2091
    %v2684 = vpack.c.b16 %v2108, %v2100
    %v2685 = vpack.c.b16 %v2109, %v2101
    %v2686 = vpack.c.b16 %v2110, %v2102
    %v2687 = vpack.c.b16 %v2111, %v2103
    %v2688 = vpack.c.b16 %v2112, %v2104
    %v2689 = vpack.c.b16 %v2113, %v2105
    %v2690 = vpack.c.b16 %v2114, %v2106
    %v2691 = vpack.c.b16 %v2115, %v2107
    %v2692 = vpack.c.b16 %v2124, %v2116
    %v2693 = vpack.c.b16 %v2125, %v2117
    %v2694 = vpack.c.b16 %v2126, %v2118
    %v2695 = vpack.c.b16 %v2127, %v2119
    %v2696 = vpack.c.b16 %v2128, %v2120
    %v2697 = vpack.c.b16 %v2129, %v2121
    %v2698 = vpack.c.b16 %v2130, %v2122
    %v2699 = vpack.c.b16 %v2131, %v2123
    %v2700 = vpack.c.b16 %v2140, %v2132
    %v2701 = vpack.c.b16 %v2141, %v2133
    %v2702 = vpack.c.b16 %v2142, %v2134
    %v2703 = vpack.c.b16 %v2143, %v2135
    %v2704 = vpack.c.b16 %v2144, %v2136
    %v2705 = vpack.c.b16 %v2145, %v2137
    %v2706 = vpack.c.b16 %v2146, %v2138
    %v2707 = vpack.c.b16 %v2147, %v2139
    %v2708 = vpack.c.b16 %v2156, %v2148
    %v2709 = vpack.c.b16 %v2157, %v2149
    %v2710 = vpack.c.b16 %v2158, %v2150
    %v2711 = vpack.c.b16 %v2159, %v2151
    %v2712 = vpack.c.b16 %v2160, %v2152
    %v2713 = vpack.c.b16 %v2161, %v2153
    %v2714 = vpack.c.b16 %v2162, %v2154
    %v2715 = vpack.c.b16 %v2163, %v2155
    %v2716 = vpack.c.b16 %v2172, %v2164
    %v2717 = vpack.c.b16 %v2173, %v2165
    %v2718 = vpack.c.b16 %v2174, %v2166
    %v2719 = vpack.c.b16 %v2175, %v2167
    %v2720 = vpack.c.b16 %v2176, %v2168
    %v2721 = vpack.c.b16 %v2177, %v2169
    %v2722 = vpack.c.b16 %v2178, %v2170
    %v2723 = vpack.c.b16 %v2179, %v2171
    %v2724 = vpack.c.b16 %v2188, %v2180
    %v2725 = vpack.c.b16 %v2189, %v2181
    %v2726 = vpack.c.b16 %v2190, %v2182
    %v2727 = vpack.c.b16 %v2191, %v2183
    %v2728 = vpack.c.b16 %v2192, %v2184
    %v2729 = vpack.c.b16 %v2193, %v2185
    %v2730 = vpack.c.b16 %v2194, %v2186
    %v2731 = vpack.c.b16 %v2195, %v2187
    %v2732 = vpack.c.b16 %v2204, %v2196
    %v2733 = vpack.c.b16 %v2205, %v2197
    %v2734 = vpack.c.b16 %v2206, %v2198
    %v2735 = vpack.c.b16 %v2207, %v2199
    %v2736 = vpack.c.b16 %v2208, %v2200
    %v2737 = vpack.c.b16 %v2209, %v2201
    %v2738 = vpack.c.b16 %v2210, %v2202
    %v2739 = vpack.c.b16 %v2211, %v2203
    %v2740 = vpack.c.b16 %v2220, %v2212
    %v2741 = vpack.c.b16 %v2221, %v2213
    %v2742 = vpack.c.b16 %v2222, %v2214
    %v2743 = vpack.c.b16 %v2223, %v2215
    %v2744 = vpack.c.b16 %v2224, %v2216
    %v2745 = vpack.c.b16 %v2225, %v2217
    %v2746 = vpack.c.b16 %v2226, %v2218
    %v2747 = vpack.c.b16 %v2227, %v2219
    %v2748 = vpack.c.b16 %v2236, %v2228
    %v2749 = vpack.c.b16 %v2237, %v2229
    %v2750 = vpack.c.b16 %v2238, %v2230
    %v2751 = vpack.c.b16 %v2239, %v2231
    %v2752 = vpack.c.b16 %v2240, %v2232
    %v2753 = vpack.c.b16 %v2241, %v2233
    %v2754 = vpack.c.b16 %v2242, %v2234
    %v2755 = vpack.c.b16 %v2243, %v2235
    %3268 = vmatprep.subr.bf16.mxu0 %v2245
    %3269 = vmatpush1.bf16.msra.mxu0 %v2244
    %3270 = vmatprep.subr.bf16.mxu0 %v2253
    %3271 = vmatpush1.bf16.msra.mxu0 %v2252
    %3272 = vmatprep.subr.bf16.mxu0 %v2261
    %3273 = vmatpush1.bf16.msra.mxu0 %v2260
    %3274 = vmatprep.subr.bf16.mxu0 %v2269
    %3275 = vmatpush1.bf16.msra.mxu0 %v2268
    %3276 = vmatprep.subr.bf16.mxu0 %v2277
    %3277 = vmatpush1.bf16.msra.mxu0 %v2276
    %3278 = vmatprep.subr.bf16.mxu0 %v2285
    %3279 = vmatpush1.bf16.msra.mxu0 %v2284
    %3280 = vmatprep.subr.bf16.mxu0 %v2293
    %3281 = vmatpush1.bf16.msra.mxu0 %v2292
    %3282 = vmatprep.subr.bf16.mxu0 %v2301
    %3283 = vmatpush1.bf16.msra.mxu0 %v2300
    %3284 = vmatprep.subr.bf16.mxu0 %v2309
    %3285 = vmatpush1.bf16.msra.mxu0 %v2308
    %3286 = vmatprep.subr.bf16.mxu0 %v2317
    %3287 = vmatpush1.bf16.msra.mxu0 %v2316
    %3288 = vmatprep.subr.bf16.mxu0 %v2325
    %3289 = vmatpush1.bf16.msra.mxu0 %v2324
    %3290 = vmatprep.subr.bf16.mxu0 %v2333
    %3291 = vmatpush1.bf16.msra.mxu0 %v2332
    %3292 = vmatprep.subr.bf16.mxu0 %v2341
    %3293 = vmatpush1.bf16.msra.mxu0 %v2340
    %3294 = vmatprep.subr.bf16.mxu0 %v2349
    %3295 = vmatpush1.bf16.msra.mxu0 %v2348
    %3296 = vmatprep.subr.bf16.mxu0 %v2357
    %3297 = vmatpush1.bf16.msra.mxu0 %v2356
    %3298 = vmatprep.subr.bf16.mxu0 %v2365
    %3299 = vmatpush1.bf16.msra.mxu0 %v2364
    %3300 = vmatprep.mubr.bf16.mxu0 %v693
    %3301 = vmatmul.mubr.bf16.gmra.mrb[0].mxu0 %v692
    %v3302 = vpop.f32.mrb[0].mxu0
    %v3303 = vadd.f32 %v631, %v3302
    %v3304 = vpop.f32.mrb[0].mxu0
    %v3305 = vadd.f32 %v635, %v3304
    %v3306 = vpop.f32.mrb[0].mxu0
    %v3307 = vadd.f32 %v631, %v3306
    %v3308 = vpop.f32.mrb[0].mxu0
    %v3309 = vadd.f32 %v635, %v3308
    %3310 = vdwg.mxu0
    %3311 = vmatprep.subr.bf16.mxu0 %v2373
    %3312 = vmatpush1.bf16.msra.mxu0 %v2372
    %3313 = vmatprep.subr.bf16.mxu0 %v2381
    %3314 = vmatpush1.bf16.msra.mxu0 %v2380
    %3315 = vmatprep.subr.bf16.mxu0 %v2389
    %3316 = vmatpush1.bf16.msra.mxu0 %v2388
    %3317 = vmatprep.subr.bf16.mxu0 %v2397
    %3318 = vmatpush1.bf16.msra.mxu0 %v2396
    %3319 = vmatprep.subr.bf16.mxu0 %v2405
    %3320 = vmatpush1.bf16.msra.mxu0 %v2404
    %3321 = vmatprep.subr.bf16.mxu0 %v2413
    %3322 = vmatpush1.bf16.msra.mxu0 %v2412
    %3323 = vmatprep.subr.bf16.mxu0 %v2421
    %3324 = vmatpush1.bf16.msra.mxu0 %v2420
    %3325 = vmatprep.subr.bf16.mxu0 %v2429
    %3326 = vmatpush1.bf16.msra.mxu0 %v2428
    %3327 = vmatprep.subr.bf16.mxu0 %v2437
    %3328 = vmatpush1.bf16.msra.mxu0 %v2436
    %3329 = vmatprep.subr.bf16.mxu0 %v2445
    %3330 = vmatpush1.bf16.msra.mxu0 %v2444
    %3331 = vmatprep.subr.bf16.mxu0 %v2453
    %3332 = vmatpush1.bf16.msra.mxu0 %v2452
    %3333 = vmatprep.subr.bf16.mxu0 %v2461
    %3334 = vmatpush1.bf16.msra.mxu0 %v2460
    %3335 = vmatprep.subr.bf16.mxu0 %v2469
    %3336 = vmatpush1.bf16.msra.mxu0 %v2468
    %3337 = vmatprep.subr.bf16.mxu0 %v2477
    %3338 = vmatpush1.bf16.msra.mxu0 %v2476
    %3339 = vmatprep.subr.bf16.mxu0 %v2485
    %3340 = vmatpush1.bf16.msra.mxu0 %v2484
    %3341 = vmatprep.subr.bf16.mxu0 %v2493
    %3342 = vmatpush1.bf16.msra.mxu0 %v2492
    %3343 = vmatprep.mubr.bf16.mxu0 %v695
    %3344 = vmatmul.mubr.bf16.gmra.mrb[0].mxu0 %v694
    %v3345 = vpop.f32.mrb[0].mxu0
    %v3346 = vadd.f32 %v3303, %v3345
    %v3347 = vpop.f32.mrb[0].mxu0
    %v3348 = vadd.f32 %v3305, %v3347
    %v3349 = vpop.f32.mrb[0].mxu0
    %v3350 = vadd.f32 %v3307, %v3349
    %v3351 = vpop.f32.mrb[0].mxu0
    %v3352 = vadd.f32 %v3309, %v3351
    %3353 = vdwg.mxu0
    %3354 = vmatprep.subr.bf16.mxu0 %v2501
    %3355 = vmatpush1.bf16.msra.mxu0 %v2500
    %3356 = vmatprep.subr.bf16.mxu0 %v2509
    %3357 = vmatpush1.bf16.msra.mxu0 %v2508
    %3358 = vmatprep.subr.bf16.mxu0 %v2517
    %3359 = vmatpush1.bf16.msra.mxu0 %v2516
    %3360 = vmatprep.subr.bf16.mxu0 %v2525
    %3361 = vmatpush1.bf16.msra.mxu0 %v2524
    %3362 = vmatprep.subr.bf16.mxu0 %v2533
    %3363 = vmatpush1.bf16.msra.mxu0 %v2532
    %3364 = vmatprep.subr.bf16.mxu0 %v2541
    %3365 = vmatpush1.bf16.msra.mxu0 %v2540
    %3366 = vmatprep.subr.bf16.mxu0 %v2549
    %3367 = vmatpush1.bf16.msra.mxu0 %v2548
    %3368 = vmatprep.subr.bf16.mxu0 %v2557
    %3369 = vmatpush1.bf16.msra.mxu0 %v2556
    %3370 = vmatprep.subr.bf16.mxu0 %v2565
    %3371 = vmatpush1.bf16.msra.mxu0 %v2564
    %3372 = vmatprep.subr.bf16.mxu0 %v2573
    %3373 = vmatpush1.bf16.msra.mxu0 %v2572
    %3374 = vmatprep.subr.bf16.mxu0 %v2581
    %3375 = vmatpush1.bf16.msra.mxu0 %v2580
    %3376 = vmatprep.subr.bf16.mxu0 %v2589
    %3377 = vmatpush1.bf16.msra.mxu0 %v2588
    %3378 = vmatprep.subr.bf16.mxu0 %v2597
    %3379 = vmatpush1.bf16.msra.mxu0 %v2596
    %3380 = vmatprep.subr.bf16.mxu0 %v2605
    %3381 = vmatpush1.bf16.msra.mxu0 %v2604
    %3382 = vmatprep.subr.bf16.mxu0 %v2613
    %3383 = vmatpush1.bf16.msra.mxu0 %v2612
    %3384 = vmatprep.subr.bf16.mxu0 %v2621
    %3385 = vmatpush1.bf16.msra.mxu0 %v2620
    %3386 = vmatprep.mubr.bf16.mxu0 %v697
    %3387 = vmatmul.mubr.bf16.gmra.mrb[0].mxu0 %v696
    %v3388 = vpop.f32.mrb[0].mxu0
    %v3389 = vadd.f32 %v3346, %v3388
    %v3390 = vpop.f32.mrb[0].mxu0
    %v3391 = vadd.f32 %v3348, %v3390
    %v3392 = vpop.f32.mrb[0].mxu0
    %v3393 = vadd.f32 %v3350, %v3392
    %v3394 = vpop.f32.mrb[0].mxu0
    %v3395 = vadd.f32 %v3352, %v3394
    %3396 = vdwg.mxu0
    %3397 = vmatprep.subr.bf16.mxu0 %v2629
    %3398 = vmatpush1.bf16.msra.mxu0 %v2628
    %3399 = vmatprep.subr.bf16.mxu0 %v2637
    %3400 = vmatpush1.bf16.msra.mxu0 %v2636
    %3401 = vmatprep.subr.bf16.mxu0 %v2645
    %3402 = vmatpush1.bf16.msra.mxu0 %v2644
    %3403 = vmatprep.subr.bf16.mxu0 %v2653
    %3404 = vmatpush1.bf16.msra.mxu0 %v2652
    %3405 = vmatprep.subr.bf16.mxu0 %v2661
    %3406 = vmatpush1.bf16.msra.mxu0 %v2660
    %3407 = vmatprep.subr.bf16.mxu0 %v2669
    %3408 = vmatpush1.bf16.msra.mxu0 %v2668
    %3409 = vmatprep.subr.bf16.mxu0 %v2677
    %3410 = vmatpush1.bf16.msra.mxu0 %v2676
    %3411 = vmatprep.subr.bf16.mxu0 %v2685
    %3412 = vmatpush1.bf16.msra.mxu0 %v2684
    %3413 = vmatprep.subr.bf16.mxu0 %v2693
    %3414 = vmatpush1.bf16.msra.mxu0 %v2692
    %3415 = vmatprep.subr.bf16.mxu0 %v2701
    %3416 = vmatpush1.bf16.msra.mxu0 %v2700
    %3417 = vmatprep.subr.bf16.mxu0 %v2709
    %3418 = vmatpush1.bf16.msra.mxu0 %v2708
    %3419 = vmatprep.subr.bf16.mxu0 %v2717
    %3420 = vmatpush1.bf16.msra.mxu0 %v2716
    %3421 = vmatprep.subr.bf16.mxu0 %v2725
    %3422 = vmatpush1.bf16.msra.mxu0 %v2724
    %3423 = vmatprep.subr.bf16.mxu0 %v2733
    %3424 = vmatpush1.bf16.msra.mxu0 %v2732
    %3425 = vmatprep.subr.bf16.mxu0 %v2741
    %3426 = vmatpush1.bf16.msra.mxu0 %v2740
    %3427 = vmatprep.subr.bf16.mxu0 %v2749
    %3428 = vmatpush1.bf16.msra.mxu0 %v2748
    %3429 = vmatprep.mubr.bf16.mxu0 %v699
    %3430 = vmatmul.mubr.bf16.gmra.mrb[0].mxu0 %v698
    %v3431 = vpop.f32.mrb[0].mxu0
    %v3432 = vadd.f32 %v3389, %v3431
    %v3433 = vpop.f32.mrb[0].mxu0
    %v3434 = vadd.f32 %v3391, %v3433
    %v3435 = vpop.f32.mrb[0].mxu0
    %v3436 = vadd.f32 %v3393, %v3435
    %v3437 = vpop.f32.mrb[0].mxu0
    %v3438 = vadd.f32 %v3395, %v3437
    %3439 = vdwg.mxu0
    %3440 = vmatprep.subr.bf16.mxu0 %v2247
    %3441 = vmatpush1.bf16.msra.mxu0 %v2246
    %3442 = vmatprep.subr.bf16.mxu0 %v2255
    %3443 = vmatpush1.bf16.msra.mxu0 %v2254
    %3444 = vmatprep.subr.bf16.mxu0 %v2263
    %3445 = vmatpush1.bf16.msra.mxu0 %v2262
    %3446 = vmatprep.subr.bf16.mxu0 %v2271
    %3447 = vmatpush1.bf16.msra.mxu0 %v2270
    %3448 = vmatprep.subr.bf16.mxu0 %v2279
    %3449 = vmatpush1.bf16.msra.mxu0 %v2278
    %3450 = vmatprep.subr.bf16.mxu0 %v2287
    %3451 = vmatpush1.bf16.msra.mxu0 %v2286
    %3452 = vmatprep.subr.bf16.mxu0 %v2295
    %3453 = vmatpush1.bf16.msra.mxu0 %v2294
    %3454 = vmatprep.subr.bf16.mxu0 %v2303
    %3455 = vmatpush1.bf16.msra.mxu0 %v2302
    %3456 = vmatprep.subr.bf16.mxu0 %v2311
    %3457 = vmatpush1.bf16.msra.mxu0 %v2310
    %3458 = vmatprep.subr.bf16.mxu0 %v2319
    %3459 = vmatpush1.bf16.msra.mxu0 %v2318
    %3460 = vmatprep.subr.bf16.mxu0 %v2327
    %3461 = vmatpush1.bf16.msra.mxu0 %v2326
    %3462 = vmatprep.subr.bf16.mxu0 %v2335
    %3463 = vmatpush1.bf16.msra.mxu0 %v2334
    %3464 = vmatprep.subr.bf16.mxu0 %v2343
    %3465 = vmatpush1.bf16.msra.mxu0 %v2342
    %3466 = vmatprep.subr.bf16.mxu0 %v2351
    %3467 = vmatpush1.bf16.msra.mxu0 %v2350
    %3468 = vmatprep.subr.bf16.mxu0 %v2359
    %3469 = vmatpush1.bf16.msra.mxu0 %v2358
    %3470 = vmatprep.subr.bf16.mxu0 %v2367
    %3471 = vmatpush1.bf16.msra.mxu0 %v2366
    %3472 = vmatprep.mubr.bf16.mxu0 %v693
    %3473 = vmatmul.mubr.bf16.gmra.mrb[0].mxu0 %v692
    %v3474 = vpop.f32.mrb[0].mxu0
    %v3475 = vadd.f32 %v639, %v3474
    %v3476 = vpop.f32.mrb[0].mxu0
    %v3477 = vadd.f32 %v643, %v3476
    %v3478 = vpop.f32.mrb[0].mxu0
    %v3479 = vadd.f32 %v639, %v3478
    %v3480 = vpop.f32.mrb[0].mxu0
    %v3481 = vadd.f32 %v643, %v3480
    %3482 = vdwg.mxu0
    %3483 = vmatprep.subr.bf16.mxu0 %v2375
    %3484 = vmatpush1.bf16.msra.mxu0 %v2374
    %3485 = vmatprep.subr.bf16.mxu0 %v2383
    %3486 = vmatpush1.bf16.msra.mxu0 %v2382
    %3487 = vmatprep.subr.bf16.mxu0 %v2391
    %3488 = vmatpush1.bf16.msra.mxu0 %v2390
    %3489 = vmatprep.subr.bf16.mxu0 %v2399
    %3490 = vmatpush1.bf16.msra.mxu0 %v2398
    %3491 = vmatprep.subr.bf16.mxu0 %v2407
    %3492 = vmatpush1.bf16.msra.mxu0 %v2406
    %3493 = vmatprep.subr.bf16.mxu0 %v2415
    %3494 = vmatpush1.bf16.msra.mxu0 %v2414
    %3495 = vmatprep.subr.bf16.mxu0 %v2423
    %3496 = vmatpush1.bf16.msra.mxu0 %v2422
    %3497 = vmatprep.subr.bf16.mxu0 %v2431
    %3498 = vmatpush1.bf16.msra.mxu0 %v2430
    %3499 = vmatprep.subr.bf16.mxu0 %v2439
    %3500 = vmatpush1.bf16.msra.mxu0 %v2438
    %3501 = vmatprep.subr.bf16.mxu0 %v2447
    %3502 = vmatpush1.bf16.msra.mxu0 %v2446
    %3503 = vmatprep.subr.bf16.mxu0 %v2455
    %3504 = vmatpush1.bf16.msra.mxu0 %v2454
    %3505 = vmatprep.subr.bf16.mxu0 %v2463
    %3506 = vmatpush1.bf16.msra.mxu0 %v2462
    %3507 = vmatprep.subr.bf16.mxu0 %v2471
    %3508 = vmatpush1.bf16.msra.mxu0 %v2470
    %3509 = vmatprep.subr.bf16.mxu0 %v2479
    %3510 = vmatpush1.bf16.msra.mxu0 %v2478
    %3511 = vmatprep.subr.bf16.mxu0 %v2487
    %3512 = vmatpush1.bf16.msra.mxu0 %v2486
    %3513 = vmatprep.subr.bf16.mxu0 %v2495
    %3514 = vmatpush1.bf16.msra.mxu0 %v2494
    %3515 = vmatprep.mubr.bf16.mxu0 %v695
    %3516 = vmatmul.mubr.bf16.gmra.mrb[0].mxu0 %v694
    %v3517 = vpop.f32.mrb[0].mxu0
    %v3518 = vadd.f32 %v3475, %v3517
    %v3519 = vpop.f32.mrb[0].mxu0
    %v3520 = vadd.f32 %v3477, %v3519
    %v3521 = vpop.f32.mrb[0].mxu0
    %v3522 = vadd.f32 %v3479, %v3521
    %v3523 = vpop.f32.mrb[0].mxu0
    %v3524 = vadd.f32 %v3481, %v3523
    %3525 = vdwg.mxu0
    %3526 = vmatprep.subr.bf16.mxu0 %v2503
    %3527 = vmatpush1.bf16.msra.mxu0 %v2502
    %3528 = vmatprep.subr.bf16.mxu0 %v2511
    %3529 = vmatpush1.bf16.msra.mxu0 %v2510
    %3530 = vmatprep.subr.bf16.mxu0 %v2519
    %3531 = vmatpush1.bf16.msra.mxu0 %v2518
    %3532 = vmatprep.subr.bf16.mxu0 %v2527
    %3533 = vmatpush1.bf16.msra.mxu0 %v2526
    %3534 = vmatprep.subr.bf16.mxu0 %v2535
    %3535 = vmatpush1.bf16.msra.mxu0 %v2534
    %3536 = vmatprep.subr.bf16.mxu0 %v2543
    %3537 = vmatpush1.bf16.msra.mxu0 %v2542
    %3538 = vmatprep.subr.bf16.mxu0 %v2551
    %3539 = vmatpush1.bf16.msra.mxu0 %v2550
    %3540 = vmatprep.subr.bf16.mxu0 %v2559
    %3541 = vmatpush1.bf16.msra.mxu0 %v2558
    %3542 = vmatprep.subr.bf16.mxu0 %v2567
    %3543 = vmatpush1.bf16.msra.mxu0 %v2566
    %3544 = vmatprep.subr.bf16.mxu0 %v2575
    %3545 = vmatpush1.bf16.msra.mxu0 %v2574
    %3546 = vmatprep.subr.bf16.mxu0 %v2583
    %3547 = vmatpush1.bf16.msra.mxu0 %v2582
    %3548 = vmatprep.subr.bf16.mxu0 %v2591
    %3549 = vmatpush1.bf16.msra.mxu0 %v2590
    %3550 = vmatprep.subr.bf16.mxu0 %v2599
    %3551 = vmatpush1.bf16.msra.mxu0 %v2598
    %3552 = vmatprep.subr.bf16.mxu0 %v2607
    %3553 = vmatpush1.bf16.msra.mxu0 %v2606
    %3554 = vmatprep.subr.bf16.mxu0 %v2615
    %3555 = vmatpush1.bf16.msra.mxu0 %v2614
    %3556 = vmatprep.subr.bf16.mxu0 %v2623
    %3557 = vmatpush1.bf16.msra.mxu0 %v2622
    %3558 = vmatprep.mubr.bf16.mxu0 %v697
    %3559 = vmatmul.mubr.bf16.gmra.mrb[0].mxu0 %v696
    %v3560 = vpop.f32.mrb[0].mxu0
    %v3561 = vadd.f32 %v3518, %v3560
    %v3562 = vpop.f32.mrb[0].mxu0
    %v3563 = vadd.f32 %v3520, %v3562
    %v3564 = vpop.f32.mrb[0].mxu0
    %v3565 = vadd.f32 %v3522, %v3564
    %v3566 = vpop.f32.mrb[0].mxu0
    %v3567 = vadd.f32 %v3524, %v3566
    %3568 = vdwg.mxu0
    %3569 = vmatprep.subr.bf16.mxu0 %v2631
    %3570 = vmatpush1.bf16.msra.mxu0 %v2630
    %3571 = vmatprep.subr.bf16.mxu0 %v2639
    %3572 = vmatpush1.bf16.msra.mxu0 %v2638
    %3573 = vmatprep.subr.bf16.mxu0 %v2647
    %3574 = vmatpush1.bf16.msra.mxu0 %v2646
    %3575 = vmatprep.subr.bf16.mxu0 %v2655
    %3576 = vmatpush1.bf16.msra.mxu0 %v2654
    %3577 = vmatprep.subr.bf16.mxu0 %v2663
    %3578 = vmatpush1.bf16.msra.mxu0 %v2662
    %3579 = vmatprep.subr.bf16.mxu0 %v2671
    %3580 = vmatpush1.bf16.msra.mxu0 %v2670
    %3581 = vmatprep.subr.bf16.mxu0 %v2679
    %3582 = vmatpush1.bf16.msra.mxu0 %v2678
    %3583 = vmatprep.subr.bf16.mxu0 %v2687
    %3584 = vmatpush1.bf16.msra.mxu0 %v2686
    %3585 = vmatprep.subr.bf16.mxu0 %v2695
    %3586 = vmatpush1.bf16.msra.mxu0 %v2694
    %3587 = vmatprep.subr.bf16.mxu0 %v2703
    %3588 = vmatpush1.bf16.msra.mxu0 %v2702
    %3589 = vmatprep.subr.bf16.mxu0 %v2711
    %3590 = vmatpush1.bf16.msra.mxu0 %v2710
    %3591 = vmatprep.subr.bf16.mxu0 %v2719
    %3592 = vmatpush1.bf16.msra.mxu0 %v2718
    %3593 = vmatprep.subr.bf16.mxu0 %v2727
    %3594 = vmatpush1.bf16.msra.mxu0 %v2726
    %3595 = vmatprep.subr.bf16.mxu0 %v2735
    %3596 = vmatpush1.bf16.msra.mxu0 %v2734
    %3597 = vmatprep.subr.bf16.mxu0 %v2743
    %3598 = vmatpush1.bf16.msra.mxu0 %v2742
    %3599 = vmatprep.subr.bf16.mxu0 %v2751
    %3600 = vmatpush1.bf16.msra.mxu0 %v2750
    %3601 = vmatprep.mubr.bf16.mxu0 %v699
    %3602 = vmatmul.mubr.bf16.gmra.mrb[0].mxu0 %v698
    %v3603 = vpop.f32.mrb[0].mxu0
    %v3604 = vadd.f32 %v3561, %v3603
    %v3605 = vpop.f32.mrb[0].mxu0
    %v3606 = vadd.f32 %v3563, %v3605
    %v3607 = vpop.f32.mrb[0].mxu0
    %v3608 = vadd.f32 %v3565, %v3607
    %v3609 = vpop.f32.mrb[0].mxu0
    %v3610 = vadd.f32 %v3567, %v3609
    %3611 = vdwg.mxu0
    %3612 = vmatprep.subr.bf16.mxu0 %v2249
    %3613 = vmatpush1.bf16.msra.mxu0 %v2248
    %3614 = vmatprep.subr.bf16.mxu0 %v2257
    %3615 = vmatpush1.bf16.msra.mxu0 %v2256
    %3616 = vmatprep.subr.bf16.mxu0 %v2265
    %3617 = vmatpush1.bf16.msra.mxu0 %v2264
    %3618 = vmatprep.subr.bf16.mxu0 %v2273
    %3619 = vmatpush1.bf16.msra.mxu0 %v2272
    %3620 = vmatprep.subr.bf16.mxu0 %v2281
    %3621 = vmatpush1.bf16.msra.mxu0 %v2280
    %3622 = vmatprep.subr.bf16.mxu0 %v2289
    %3623 = vmatpush1.bf16.msra.mxu0 %v2288
    %3624 = vmatprep.subr.bf16.mxu0 %v2297
    %3625 = vmatpush1.bf16.msra.mxu0 %v2296
    %3626 = vmatprep.subr.bf16.mxu0 %v2305
    %3627 = vmatpush1.bf16.msra.mxu0 %v2304
    %3628 = vmatprep.subr.bf16.mxu0 %v2313
    %3629 = vmatpush1.bf16.msra.mxu0 %v2312
    %3630 = vmatprep.subr.bf16.mxu0 %v2321
    %3631 = vmatpush1.bf16.msra.mxu0 %v2320
    %3632 = vmatprep.subr.bf16.mxu0 %v2329
    %3633 = vmatpush1.bf16.msra.mxu0 %v2328
    %3634 = vmatprep.subr.bf16.mxu0 %v2337
    %3635 = vmatpush1.bf16.msra.mxu0 %v2336
    %3636 = vmatprep.subr.bf16.mxu0 %v2345
    %3637 = vmatpush1.bf16.msra.mxu0 %v2344
    %3638 = vmatprep.subr.bf16.mxu0 %v2353
    %3639 = vmatpush1.bf16.msra.mxu0 %v2352
    %3640 = vmatprep.subr.bf16.mxu0 %v2361
    %3641 = vmatpush1.bf16.msra.mxu0 %v2360
    %3642 = vmatprep.subr.bf16.mxu0 %v2369
    %3643 = vmatpush1.bf16.msra.mxu0 %v2368
    %3644 = vmatprep.mubr.bf16.mxu0 %v693
    %3645 = vmatmul.mubr.bf16.gmra.mrb[0].mxu0 %v692
    %v3646 = vpop.f32.mrb[0].mxu0
    %v3647 = vadd.f32 %v647, %v3646
    %v3648 = vpop.f32.mrb[0].mxu0
    %v3649 = vadd.f32 %v651, %v3648
    %v3650 = vpop.f32.mrb[0].mxu0
    %v3651 = vadd.f32 %v647, %v3650
    %v3652 = vpop.f32.mrb[0].mxu0
    %v3653 = vadd.f32 %v651, %v3652
    %3654 = vdwg.mxu0
    %3655 = vmatprep.subr.bf16.mxu0 %v2377
    %3656 = vmatpush1.bf16.msra.mxu0 %v2376
    %3657 = vmatprep.subr.bf16.mxu0 %v2385
    %3658 = vmatpush1.bf16.msra.mxu0 %v2384
    %3659 = vmatprep.subr.bf16.mxu0 %v2393
    %3660 = vmatpush1.bf16.msra.mxu0 %v2392
    %3661 = vmatprep.subr.bf16.mxu0 %v2401
    %3662 = vmatpush1.bf16.msra.mxu0 %v2400
    %3663 = vmatprep.subr.bf16.mxu0 %v2409
    %3664 = vmatpush1.bf16.msra.mxu0 %v2408
    %3665 = vmatprep.subr.bf16.mxu0 %v2417
    %3666 = vmatpush1.bf16.msra.mxu0 %v2416
    %3667 = vmatprep.subr.bf16.mxu0 %v2425
    %3668 = vmatpush1.bf16.msra.mxu0 %v2424
    %3669 = vmatprep.subr.bf16.mxu0 %v2433
    %3670 = vmatpush1.bf16.msra.mxu0 %v2432
    %3671 = vmatprep.subr.bf16.mxu0 %v2441
    %3672 = vmatpush1.bf16.msra.mxu0 %v2440
    %3673 = vmatprep.subr.bf16.mxu0 %v2449
    %3674 = vmatpush1.bf16.msra.mxu0 %v2448
    %3675 = vmatprep.subr.bf16.mxu0 %v2457
    %3676 = vmatpush1.bf16.msra.mxu0 %v2456
    %3677 = vmatprep.subr.bf16.mxu0 %v2465
    %3678 = vmatpush1.bf16.msra.mxu0 %v2464
    %3679 = vmatprep.subr.bf16.mxu0 %v2473
    %3680 = vmatpush1.bf16.msra.mxu0 %v2472
    %3681 = vmatprep.subr.bf16.mxu0 %v2481
    %3682 = vmatpush1.bf16.msra.mxu0 %v2480
    %3683 = vmatprep.subr.bf16.mxu0 %v2489
    %3684 = vmatpush1.bf16.msra.mxu0 %v2488
    %3685 = vmatprep.subr.bf16.mxu0 %v2497
    %3686 = vmatpush1.bf16.msra.mxu0 %v2496
    %3687 = vmatprep.mubr.bf16.mxu0 %v695
    %3688 = vmatmul.mubr.bf16.gmra.mrb[0].mxu0 %v694
    %v3689 = vpop.f32.mrb[0].mxu0
    %v3690 = vadd.f32 %v3647, %v3689
    %v3691 = vpop.f32.mrb[0].mxu0
    %v3692 = vadd.f32 %v3649, %v3691
    %v3693 = vpop.f32.mrb[0].mxu0
    %v3694 = vadd.f32 %v3651, %v3693
    %v3695 = vpop.f32.mrb[0].mxu0
    %v3696 = vadd.f32 %v3653, %v3695
    %3697 = vdwg.mxu0
    %3698 = vmatprep.subr.bf16.mxu0 %v2505
    %3699 = vmatpush1.bf16.msra.mxu0 %v2504
    %3700 = vmatprep.subr.bf16.mxu0 %v2513
    %3701 = vmatpush1.bf16.msra.mxu0 %v2512
    %3702 = vmatprep.subr.bf16.mxu0 %v2521
    %3703 = vmatpush1.bf16.msra.mxu0 %v2520
    %3704 = vmatprep.subr.bf16.mxu0 %v2529
    %3705 = vmatpush1.bf16.msra.mxu0 %v2528
    %3706 = vmatprep.subr.bf16.mxu0 %v2537
    %3707 = vmatpush1.bf16.msra.mxu0 %v2536
    %3708 = vmatprep.subr.bf16.mxu0 %v2545
    %3709 = vmatpush1.bf16.msra.mxu0 %v2544
    %3710 = vmatprep.subr.bf16.mxu0 %v2553
    %3711 = vmatpush1.bf16.msra.mxu0 %v2552
    %3712 = vmatprep.subr.bf16.mxu0 %v2561
    %3713 = vmatpush1.bf16.msra.mxu0 %v2560
    %3714 = vmatprep.subr.bf16.mxu0 %v2569
    %3715 = vmatpush1.bf16.msra.mxu0 %v2568
    %3716 = vmatprep.subr.bf16.mxu0 %v2577
    %3717 = vmatpush1.bf16.msra.mxu0 %v2576
    %3718 = vmatprep.subr.bf16.mxu0 %v2585
    %3719 = vmatpush1.bf16.msra.mxu0 %v2584
    %3720 = vmatprep.subr.bf16.mxu0 %v2593
    %3721 = vmatpush1.bf16.msra.mxu0 %v2592
    %3722 = vmatprep.subr.bf16.mxu0 %v2601
    %3723 = vmatpush1.bf16.msra.mxu0 %v2600
    %3724 = vmatprep.subr.bf16.mxu0 %v2609
    %3725 = vmatpush1.bf16.msra.mxu0 %v2608
    %3726 = vmatprep.subr.bf16.mxu0 %v2617
    %3727 = vmatpush1.bf16.msra.mxu0 %v2616
    %3728 = vmatprep.subr.bf16.mxu0 %v2625
    %3729 = vmatpush1.bf16.msra.mxu0 %v2624
    %3730 = vmatprep.mubr.bf16.mxu0 %v697
    %3731 = vmatmul.mubr.bf16.gmra.mrb[0].mxu0 %v696
    %v3732 = vpop.f32.mrb[0].mxu0
    %v3733 = vadd.f32 %v3690, %v3732
    %v3734 = vpop.f32.mrb[0].mxu0
    %v3735 = vadd.f32 %v3692, %v3734
    %v3736 = vpop.f32.mrb[0].mxu0
    %v3737 = vadd.f32 %v3694, %v3736
    %v3738 = vpop.f32.mrb[0].mxu0
    %v3739 = vadd.f32 %v3696, %v3738
    %3740 = vdwg.mxu0
    %3741 = vmatprep.subr.bf16.mxu0 %v2633
    %3742 = vmatpush1.bf16.msra.mxu0 %v2632
    %3743 = vmatprep.subr.bf16.mxu0 %v2641
    %3744 = vmatpush1.bf16.msra.mxu0 %v2640
    %3745 = vmatprep.subr.bf16.mxu0 %v2649
    %3746 = vmatpush1.bf16.msra.mxu0 %v2648
    %3747 = vmatprep.subr.bf16.mxu0 %v2657
    %3748 = vmatpush1.bf16.msra.mxu0 %v2656
    %3749 = vmatprep.subr.bf16.mxu0 %v2665
    %3750 = vmatpush1.bf16.msra.mxu0 %v2664
    %3751 = vmatprep.subr.bf16.mxu0 %v2673
    %3752 = vmatpush1.bf16.msra.mxu0 %v2672
    %3753 = vmatprep.subr.bf16.mxu0 %v2681
    %3754 = vmatpush1.bf16.msra.mxu0 %v2680
    %3755 = vmatprep.subr.bf16.mxu0 %v2689
    %3756 = vmatpush1.bf16.msra.mxu0 %v2688
    %3757 = vmatprep.subr.bf16.mxu0 %v2697
    %3758 = vmatpush1.bf16.msra.mxu0 %v2696
    %3759 = vmatprep.subr.bf16.mxu0 %v2705
    %3760 = vmatpush1.bf16.msra.mxu0 %v2704
    %3761 = vmatprep.subr.bf16.mxu0 %v2713
    %3762 = vmatpush1.bf16.msra.mxu0 %v2712
    %3763 = vmatprep.subr.bf16.mxu0 %v2721
    %3764 = vmatpush1.bf16.msra.mxu0 %v2720
    %3765 = vmatprep.subr.bf16.mxu0 %v2729
    %3766 = vmatpush1.bf16.msra.mxu0 %v2728
    %3767 = vmatprep.subr.bf16.mxu0 %v2737
    %3768 = vmatpush1.bf16.msra.mxu0 %v2736
    %3769 = vmatprep.subr.bf16.mxu0 %v2745
    %3770 = vmatpush1.bf16.msra.mxu0 %v2744
    %3771 = vmatprep.subr.bf16.mxu0 %v2753
    %3772 = vmatpush1.bf16.msra.mxu0 %v2752
    %3773 = vmatprep.mubr.bf16.mxu0 %v699
    %3774 = vmatmul.mubr.bf16.gmra.mrb[0].mxu0 %v698
    %v3775 = vpop.f32.mrb[0].mxu0
    %v3776 = vadd.f32 %v3733, %v3775
    %v3777 = vpop.f32.mrb[0].mxu0
    %v3778 = vadd.f32 %v3735, %v3777
    %v3779 = vpop.f32.mrb[0].mxu0
    %v3780 = vadd.f32 %v3737, %v3779
    %v3781 = vpop.f32.mrb[0].mxu0
    %v3782 = vadd.f32 %v3739, %v3781
    %3783 = vdwg.mxu0
    %3784 = vmatprep.subr.bf16.mxu0 %v2251
    %3785 = vmatpush1.bf16.msra.mxu0 %v2250
    %3786 = vmatprep.subr.bf16.mxu0 %v2259
    %3787 = vmatpush1.bf16.msra.mxu0 %v2258
    %3788 = vmatprep.subr.bf16.mxu0 %v2267
    %3789 = vmatpush1.bf16.msra.mxu0 %v2266
    %3790 = vmatprep.subr.bf16.mxu0 %v2275
    %3791 = vmatpush1.bf16.msra.mxu0 %v2274
    %3792 = vmatprep.subr.bf16.mxu0 %v2283
    %3793 = vmatpush1.bf16.msra.mxu0 %v2282
    %3794 = vmatprep.subr.bf16.mxu0 %v2291
    %3795 = vmatpush1.bf16.msra.mxu0 %v2290
    %3796 = vmatprep.subr.bf16.mxu0 %v2299
    %3797 = vmatpush1.bf16.msra.mxu0 %v2298
    %3798 = vmatprep.subr.bf16.mxu0 %v2307
    %3799 = vmatpush1.bf16.msra.mxu0 %v2306
    %3800 = vmatprep.subr.bf16.mxu0 %v2315
    %3801 = vmatpush1.bf16.msra.mxu0 %v2314
    %3802 = vmatprep.subr.bf16.mxu0 %v2323
    %3803 = vmatpush1.bf16.msra.mxu0 %v2322
    %3804 = vmatprep.subr.bf16.mxu0 %v2331
    %3805 = vmatpush1.bf16.msra.mxu0 %v2330
    %3806 = vmatprep.subr.bf16.mxu0 %v2339
    %3807 = vmatpush1.bf16.msra.mxu0 %v2338
    %3808 = vmatprep.subr.bf16.mxu0 %v2347
    %3809 = vmatpush1.bf16.msra.mxu0 %v2346
    %3810 = vmatprep.subr.bf16.mxu0 %v2355
    %3811 = vmatpush1.bf16.msra.mxu0 %v2354
    %3812 = vmatprep.subr.bf16.mxu0 %v2363
    %3813 = vmatpush1.bf16.msra.mxu0 %v2362
    %3814 = vmatprep.subr.bf16.mxu0 %v2371
    %3815 = vmatpush1.bf16.msra.mxu0 %v2370
    %3816 = vmatprep.mubr.bf16.mxu0 %v693
    %3817 = vmatmul.mubr.bf16.gmra.mrb[0].mxu0 %v692
    %v3818 = vpop.f32.mrb[0].mxu0
    %v3819 = vadd.f32 %v655, %v3818
    %v3820 = vpop.f32.mrb[0].mxu0
    %v3821 = vadd.f32 %v659, %v3820
    %v3822 = vpop.f32.mrb[0].mxu0
    %v3823 = vadd.f32 %v655, %v3822
    %v3824 = vpop.f32.mrb[0].mxu0
    %v3825 = vadd.f32 %v659, %v3824
    %3826 = vdwg.mxu0
    %3827 = vmatprep.subr.bf16.mxu0 %v2379
    %3828 = vmatpush1.bf16.msra.mxu0 %v2378
    %3829 = vmatprep.subr.bf16.mxu0 %v2387
    %3830 = vmatpush1.bf16.msra.mxu0 %v2386
    %3831 = vmatprep.subr.bf16.mxu0 %v2395
    %3832 = vmatpush1.bf16.msra.mxu0 %v2394
    %3833 = vmatprep.subr.bf16.mxu0 %v2403
    %3834 = vmatpush1.bf16.msra.mxu0 %v2402
    %3835 = vmatprep.subr.bf16.mxu0 %v2411
    %3836 = vmatpush1.bf16.msra.mxu0 %v2410
    %3837 = vmatprep.subr.bf16.mxu0 %v2419
    %3838 = vmatpush1.bf16.msra.mxu0 %v2418
    %3839 = vmatprep.subr.bf16.mxu0 %v2427
    %3840 = vmatpush1.bf16.msra.mxu0 %v2426
    %3841 = vmatprep.subr.bf16.mxu0 %v2435
    %3842 = vmatpush1.bf16.msra.mxu0 %v2434
    %3843 = vmatprep.subr.bf16.mxu0 %v2443
    %3844 = vmatpush1.bf16.msra.mxu0 %v2442
    %3845 = vmatprep.subr.bf16.mxu0 %v2451
    %3846 = vmatpush1.bf16.msra.mxu0 %v2450
    %3847 = vmatprep.subr.bf16.mxu0 %v2459
    %3848 = vmatpush1.bf16.msra.mxu0 %v2458
    %3849 = vmatprep.subr.bf16.mxu0 %v2467
    %3850 = vmatpush1.bf16.msra.mxu0 %v2466
    %3851 = vmatprep.subr.bf16.mxu0 %v2475
    %3852 = vmatpush1.bf16.msra.mxu0 %v2474
    %3853 = vmatprep.subr.bf16.mxu0 %v2483
    %3854 = vmatpush1.bf16.msra.mxu0 %v2482
    %3855 = vmatprep.subr.bf16.mxu0 %v2491
    %3856 = vmatpush1.bf16.msra.mxu0 %v2490
    %3857 = vmatprep.subr.bf16.mxu0 %v2499
    %3858 = vmatpush1.bf16.msra.mxu0 %v2498
    %3859 = vmatprep.mubr.bf16.mxu0 %v695
    %3860 = vmatmul.mubr.bf16.gmra.mrb[0].mxu0 %v694
    %v3861 = vpop.f32.mrb[0].mxu0
    %v3862 = vadd.f32 %v3819, %v3861
    %v3863 = vpop.f32.mrb[0].mxu0
    %v3864 = vadd.f32 %v3821, %v3863
    %v3865 = vpop.f32.mrb[0].mxu0
    %v3866 = vadd.f32 %v3823, %v3865
    %v3867 = vpop.f32.mrb[0].mxu0
    %v3868 = vadd.f32 %v3825, %v3867
    %3869 = vdwg.mxu0
    %3870 = vmatprep.subr.bf16.mxu0 %v2507
    %3871 = vmatpush1.bf16.msra.mxu0 %v2506
    %3872 = vmatprep.subr.bf16.mxu0 %v2515
    %3873 = vmatpush1.bf16.msra.mxu0 %v2514
    %3874 = vmatprep.subr.bf16.mxu0 %v2523
    %3875 = vmatpush1.bf16.msra.mxu0 %v2522
    %3876 = vmatprep.subr.bf16.mxu0 %v2531
    %3877 = vmatpush1.bf16.msra.mxu0 %v2530
    %3878 = vmatprep.subr.bf16.mxu0 %v2539
    %3879 = vmatpush1.bf16.msra.mxu0 %v2538
    %3880 = vmatprep.subr.bf16.mxu0 %v2547
    %3881 = vmatpush1.bf16.msra.mxu0 %v2546
    %3882 = vmatprep.subr.bf16.mxu0 %v2555
    %3883 = vmatpush1.bf16.msra.mxu0 %v2554
    %3884 = vmatprep.subr.bf16.mxu0 %v2563
    %3885 = vmatpush1.bf16.msra.mxu0 %v2562
    %3886 = vmatprep.subr.bf16.mxu0 %v2571
    %3887 = vmatpush1.bf16.msra.mxu0 %v2570
    %3888 = vmatprep.subr.bf16.mxu0 %v2579
    %3889 = vmatpush1.bf16.msra.mxu0 %v2578
    %3890 = vmatprep.subr.bf16.mxu0 %v2587
    %3891 = vmatpush1.bf16.msra.mxu0 %v2586
    %3892 = vmatprep.subr.bf16.mxu0 %v2595
    %3893 = vmatpush1.bf16.msra.mxu0 %v2594
    %3894 = vmatprep.subr.bf16.mxu0 %v2603
    %3895 = vmatpush1.bf16.msra.mxu0 %v2602
    %3896 = vmatprep.subr.bf16.mxu0 %v2611
    %3897 = vmatpush1.bf16.msra.mxu0 %v2610
    %3898 = vmatprep.subr.bf16.mxu0 %v2619
    %3899 = vmatpush1.bf16.msra.mxu0 %v2618
    %3900 = vmatprep.subr.bf16.mxu0 %v2627
    %3901 = vmatpush1.bf16.msra.mxu0 %v2626
    %3902 = vmatprep.mubr.bf16.mxu0 %v697
    %3903 = vmatmul.mubr.bf16.gmra.mrb[0].mxu0 %v696
    %v3904 = vpop.f32.mrb[0].mxu0
    %v3905 = vadd.f32 %v3862, %v3904
    %v3906 = vpop.f32.mrb[0].mxu0
    %v3907 = vadd.f32 %v3864, %v3906
    %v3908 = vpop.f32.mrb[0].mxu0
    %v3909 = vadd.f32 %v3866, %v3908
    %v3910 = vpop.f32.mrb[0].mxu0
    %v3911 = vadd.f32 %v3868, %v3910
    %3912 = vdwg.mxu0
    %3913 = vmatprep.subr.bf16.mxu0 %v2635
    %3914 = vmatpush1.bf16.msra.mxu0 %v2634
    %3915 = vmatprep.subr.bf16.mxu0 %v2643
    %3916 = vmatpush1.bf16.msra.mxu0 %v2642
    %3917 = vmatprep.subr.bf16.mxu0 %v2651
    %3918 = vmatpush1.bf16.msra.mxu0 %v2650
    %3919 = vmatprep.subr.bf16.mxu0 %v2659
    %3920 = vmatpush1.bf16.msra.mxu0 %v2658
    %3921 = vmatprep.subr.bf16.mxu0 %v2667
    %3922 = vmatpush1.bf16.msra.mxu0 %v2666
    %3923 = vmatprep.subr.bf16.mxu0 %v2675
    %3924 = vmatpush1.bf16.msra.mxu0 %v2674
    %3925 = vmatprep.subr.bf16.mxu0 %v2683
    %3926 = vmatpush1.bf16.msra.mxu0 %v2682
    %3927 = vmatprep.subr.bf16.mxu0 %v2691
    %3928 = vmatpush1.bf16.msra.mxu0 %v2690
    %3929 = vmatprep.subr.bf16.mxu0 %v2699
    %3930 = vmatpush1.bf16.msra.mxu0 %v2698
    %3931 = vmatprep.subr.bf16.mxu0 %v2707
    %3932 = vmatpush1.bf16.msra.mxu0 %v2706
    %3933 = vmatprep.subr.bf16.mxu0 %v2715
    %3934 = vmatpush1.bf16.msra.mxu0 %v2714
    %3935 = vmatprep.subr.bf16.mxu0 %v2723
    %3936 = vmatpush1.bf16.msra.mxu0 %v2722
    %3937 = vmatprep.subr.bf16.mxu0 %v2731
    %3938 = vmatpush1.bf16.msra.mxu0 %v2730
    %3939 = vmatprep.subr.bf16.mxu0 %v2739
    %3940 = vmatpush1.bf16.msra.mxu0 %v2738
    %3941 = vmatprep.subr.bf16.mxu0 %v2747
    %3942 = vmatpush1.bf16.msra.mxu0 %v2746
    %3943 = vmatprep.subr.bf16.mxu0 %v2755
    %3944 = vmatpush1.bf16.msra.mxu0 %v2754
    %3945 = vmatprep.mubr.bf16.mxu0 %v699
    %3946 = vmatmul.mubr.bf16.gmra.mrb[0].mxu0 %v698
    %v3947 = vpop.f32.mrb[0].mxu0
    %v3948 = vadd.f32 %v3905, %v3947
    %v3949 = vpop.f32.mrb[0].mxu0
    %v3950 = vadd.f32 %v3907, %v3949
    %v3951 = vpop.f32.mrb[0].mxu0
    %v3952 = vadd.f32 %v3909, %v3951
    %v3953 = vpop.f32.mrb[0].mxu0
    %v3954 = vadd.f32 %v3911, %v3953
    %3955 = vdwg.mxu0
    %v3956 = vmax.f32 %v3432, 0.0
    %v3957 = vmax.f32 %v3434, 0.0
    %v3958 = vmax.f32 %v3604, 0.0
    %v3959 = vmax.f32 %v3606, 0.0
    %v3960 = vmax.f32 %v3776, 0.0
    %v3961 = vmax.f32 %v3778, 0.0
    %v3962 = vmax.f32 %v3948, 0.0
    %v3963 = vmax.f32 %v3950, 0.0
    %v3964 = vmax.f32 %v3436, 0.0
    %v3965 = vmax.f32 %v3438, 0.0
    %v3966 = vmax.f32 %v3608, 0.0
    %v3967 = vmax.f32 %v3610, 0.0
    %v3968 = vmax.f32 %v3780, 0.0
    %v3969 = vmax.f32 %v3782, 0.0
    %v3970 = vmax.f32 %v3952, 0.0
    %v3971 = vmax.f32 %v3954, 0.0
    %v3972 = vpack.c.bf16 %v3964, %v3956
    %v3973 = vpack.c.bf16 %v3965, %v3957
    %v3974 = vpack.c.bf16 %v3966, %v3958
    %v3975 = vpack.c.bf16 %v3967, %v3959
    %v3976 = vpack.c.bf16 %v3968, %v3960
    %v3977 = vpack.c.bf16 %v3969, %v3961
    %v3978 = vpack.c.bf16 %v3970, %v3962
    %v3979 = vpack.c.bf16 %v3971, %v3963
    %v3980 = vld [vmem:[#allocation8] sm:$0xff]
    %v3981 = vld [vmem:[#allocation8 + $0x8] sm:$0xff]
    %v3982 = vld [vmem:[#allocation8 + $0x10] sm:$0xff]
    %v3983 = vld [vmem:[#allocation8 + $0x18] sm:$0xff]
    %v3984 = vld [vmem:[#allocation8 + $0x20] sm:$0xff]
    %v3985 = vld [vmem:[#allocation8 + $0x28] sm:$0xff]
    %v3986 = vld [vmem:[#allocation8 + $0x30] sm:$0xff]
    %v3987 = vld [vmem:[#allocation8 + $0x38] sm:$0xff]
    %v3988 = vld [vmem:[#allocation8 + $0x40] sm:$0xff]
    %v3989 = vld [vmem:[#allocation8 + $0x48] sm:$0xff]
    %v3990 = vld [vmem:[#allocation8 + $0x50] sm:$0xff]
    %v3991 = vld [vmem:[#allocation8 + $0x58] sm:$0xff]
    %v3992 = vld [vmem:[#allocation8 + $0x60] sm:$0xff]
    %v3993 = vld [vmem:[#allocation8 + $0x68] sm:$0xff]
    %v3994 = vld [vmem:[#allocation8 + $0x70] sm:$0xff]
    %v3995 = vld [vmem:[#allocation8 + $0x78] sm:$0xff]
    %v3996 = vld [vmem:[#allocation8 + $0x80] sm:$0xff]
    %v3997 = vld [vmem:[#allocation8 + $0x88] sm:$0xff]
    %v3998 = vld [vmem:[#allocation8 + $0x90] sm:$0xff]
    %v3999 = vld [vmem:[#allocation8 + $0x98] sm:$0xff]
    %v4000 = vld [vmem:[#allocation8 + $0xa0] sm:$0xff]
    %v4001 = vld [vmem:[#allocation8 + $0xa8] sm:$0xff]
    %v4002 = vld [vmem:[#allocation8 + $0xb0] sm:$0xff]
    %v4003 = vld [vmem:[#allocation8 + $0xb8] sm:$0xff]
    %v4004 = vld [vmem:[#allocation8 + $0xc0] sm:$0xff]
    %v4005 = vld [vmem:[#allocation8 + $0xc8] sm:$0xff]
    %v4006 = vld [vmem:[#allocation8 + $0xd0] sm:$0xff]
    %v4007 = vld [vmem:[#allocation8 + $0xd8] sm:$0xff]
    %v4008 = vld [vmem:[#allocation8 + $0xe0] sm:$0xff]
    %v4009 = vld [vmem:[#allocation8 + $0xe8] sm:$0xff]
    %v4010 = vld [vmem:[#allocation8 + $0xf0] sm:$0xff]
    %v4011 = vld [vmem:[#allocation8 + $0xf8] sm:$0xff]
    %v4012 = vld [vmem:[#allocation8 + $0x100] sm:$0xff]
    %v4013 = vld [vmem:[#allocation8 + $0x108] sm:$0xff]
    %v4014 = vld [vmem:[#allocation8 + $0x110] sm:$0xff]
    %v4015 = vld [vmem:[#allocation8 + $0x118] sm:$0xff]
    %v4016 = vld [vmem:[#allocation8 + $0x120] sm:$0xff]
    %v4017 = vld [vmem:[#allocation8 + $0x128] sm:$0xff]
    %v4018 = vld [vmem:[#allocation8 + $0x130] sm:$0xff]
    %v4019 = vld [vmem:[#allocation8 + $0x138] sm:$0xff]
    %v4020 = vld [vmem:[#allocation8 + $0x140] sm:$0xff]
    %v4021 = vld [vmem:[#allocation8 + $0x148] sm:$0xff]
    %v4022 = vld [vmem:[#allocation8 + $0x150] sm:$0xff]
    %v4023 = vld [vmem:[#allocation8 + $0x158] sm:$0xff]
    %v4024 = vld [vmem:[#allocation8 + $0x160] sm:$0xff]
    %v4025 = vld [vmem:[#allocation8 + $0x168] sm:$0xff]
    %v4026 = vld [vmem:[#allocation8 + $0x170] sm:$0xff]
    %v4027 = vld [vmem:[#allocation8 + $0x178] sm:$0xff]
    %v4028 = vld [vmem:[#allocation8 + $0x180] sm:$0xff]
    %v4029 = vld [vmem:[#allocation8 + $0x188] sm:$0xff]
    %v4030 = vld [vmem:[#allocation8 + $0x190] sm:$0xff]
    %v4031 = vld [vmem:[#allocation8 + $0x198] sm:$0xff]
    %v4032 = vld [vmem:[#allocation8 + $0x1a0] sm:$0xff]
    %v4033 = vld [vmem:[#allocation8 + $0x1a8] sm:$0xff]
    %v4034 = vld [vmem:[#allocation8 + $0x1b0] sm:$0xff]
    %v4035 = vld [vmem:[#allocation8 + $0x1b8] sm:$0xff]
    %v4036 = vld [vmem:[#allocation8 + $0x1c0] sm:$0xff]
    %v4037 = vld [vmem:[#allocation8 + $0x1c8] sm:$0xff]
    %v4038 = vld [vmem:[#allocation8 + $0x1d0] sm:$0xff]
    %v4039 = vld [vmem:[#allocation8 + $0x1d8] sm:$0xff]
    %v4040 = vld [vmem:[#allocation8 + $0x1e0] sm:$0xff]
    %v4041 = vld [vmem:[#allocation8 + $0x1e8] sm:$0xff]
    %v4042 = vld [vmem:[#allocation8 + $0x1f0] sm:$0xff]
    %v4043 = vld [vmem:[#allocation8 + $0x1f8] sm:$0xff]
    %v4044 = vld [vmem:[#allocation8 + $0x200] sm:$0xff]
    %v4045 = vld [vmem:[#allocation8 + $0x208] sm:$0xff]
    %v4046 = vld [vmem:[#allocation8 + $0x210] sm:$0xff]
    %v4047 = vld [vmem:[#allocation8 + $0x218] sm:$0xff]
    %v4048 = vld [vmem:[#allocation8 + $0x220] sm:$0xff]
    %v4049 = vld [vmem:[#allocation8 + $0x228] sm:$0xff]
    %v4050 = vld [vmem:[#allocation8 + $0x230] sm:$0xff]
    %v4051 = vld [vmem:[#allocation8 + $0x238] sm:$0xff]
    %v4052 = vld [vmem:[#allocation8 + $0x240] sm:$0xff]
    %v4053 = vld [vmem:[#allocation8 + $0x248] sm:$0xff]
    %v4054 = vld [vmem:[#allocation8 + $0x250] sm:$0xff]
    %v4055 = vld [vmem:[#allocation8 + $0x258] sm:$0xff]
    %v4056 = vld [vmem:[#allocation8 + $0x260] sm:$0xff]
    %v4057 = vld [vmem:[#allocation8 + $0x268] sm:$0xff]
    %v4058 = vld [vmem:[#allocation8 + $0x270] sm:$0xff]
    %v4059 = vld [vmem:[#allocation8 + $0x278] sm:$0xff]
    %v4060 = vld [vmem:[#allocation8 + $0x280] sm:$0xff]
    %v4061 = vld [vmem:[#allocation8 + $0x288] sm:$0xff]
    %v4062 = vld [vmem:[#allocation8 + $0x290] sm:$0xff]
    %v4063 = vld [vmem:[#allocation8 + $0x298] sm:$0xff]
    %v4064 = vld [vmem:[#allocation8 + $0x2a0] sm:$0xff]
    %v4065 = vld [vmem:[#allocation8 + $0x2a8] sm:$0xff]
    %v4066 = vld [vmem:[#allocation8 + $0x2b0] sm:$0xff]
    %v4067 = vld [vmem:[#allocation8 + $0x2b8] sm:$0xff]
    %v4068 = vld [vmem:[#allocation8 + $0x2c0] sm:$0xff]
    %v4069 = vld [vmem:[#allocation8 + $0x2c8] sm:$0xff]
    %v4070 = vld [vmem:[#allocation8 + $0x2d0] sm:$0xff]
    %v4071 = vld [vmem:[#allocation8 + $0x2d8] sm:$0xff]
    %v4072 = vld [vmem:[#allocation8 + $0x2e0] sm:$0xff]
    %v4073 = vld [vmem:[#allocation8 + $0x2e8] sm:$0xff]
    %v4074 = vld [vmem:[#allocation8 + $0x2f0] sm:$0xff]
    %v4075 = vld [vmem:[#allocation8 + $0x2f8] sm:$0xff]
    %v4076 = vld [vmem:[#allocation8 + $0x300] sm:$0xff]
    %v4077 = vld [vmem:[#allocation8 + $0x308] sm:$0xff]
    %v4078 = vld [vmem:[#allocation8 + $0x310] sm:$0xff]
    %v4079 = vld [vmem:[#allocation8 + $0x318] sm:$0xff]
    %v4080 = vld [vmem:[#allocation8 + $0x320] sm:$0xff]
    %v4081 = vld [vmem:[#allocation8 + $0x328] sm:$0xff]
    %v4082 = vld [vmem:[#allocation8 + $0x330] sm:$0xff]
    %v4083 = vld [vmem:[#allocation8 + $0x338] sm:$0xff]
    %v4084 = vld [vmem:[#allocation8 + $0x340] sm:$0xff]
    %v4085 = vld [vmem:[#allocation8 + $0x348] sm:$0xff]
    %v4086 = vld [vmem:[#allocation8 + $0x350] sm:$0xff]
    %v4087 = vld [vmem:[#allocation8 + $0x358] sm:$0xff]
    %v4088 = vld [vmem:[#allocation8 + $0x360] sm:$0xff]
    %v4089 = vld [vmem:[#allocation8 + $0x368] sm:$0xff]
    %v4090 = vld [vmem:[#allocation8 + $0x370] sm:$0xff]
    %v4091 = vld [vmem:[#allocation8 + $0x378] sm:$0xff]
    %v4092 = vld [vmem:[#allocation8 + $0x380] sm:$0xff]
    %v4093 = vld [vmem:[#allocation8 + $0x388] sm:$0xff]
    %v4094 = vld [vmem:[#allocation8 + $0x390] sm:$0xff]
    %v4095 = vld [vmem:[#allocation8 + $0x398] sm:$0xff]
    %v4096 = vld [vmem:[#allocation8 + $0x3a0] sm:$0xff]
    %v4097 = vld [vmem:[#allocation8 + $0x3a8] sm:$0xff]
    %v4098 = vld [vmem:[#allocation8 + $0x3b0] sm:$0xff]
    %v4099 = vld [vmem:[#allocation8 + $0x3b8] sm:$0xff]
    %v4100 = vld [vmem:[#allocation8 + $0x3c0] sm:$0xff]
    %v4101 = vld [vmem:[#allocation8 + $0x3c8] sm:$0xff]
    %v4102 = vld [vmem:[#allocation8 + $0x3d0] sm:$0xff]
    %v4103 = vld [vmem:[#allocation8 + $0x3d8] sm:$0xff]
    %v4104 = vld [vmem:[#allocation8 + $0x3e0] sm:$0xff]
    %v4105 = vld [vmem:[#allocation8 + $0x3e8] sm:$0xff]
    %v4106 = vld [vmem:[#allocation8 + $0x3f0] sm:$0xff]
    %v4107 = vld [vmem:[#allocation8 + $0x3f8] sm:$0xff]
    %v4108 = vld [vmem:[#allocation10] sm:$0x3]
    %v4110 = vlaneseq
    %v4111 = vshrl.u32 %v4110, 7
    %v4112 = vsub.s32 0, %v4111
    %v4113 = vrot.slane %v4108, %v4112
    %v4114 = vlaneseq
    %v4115 = vshrl.u32 %v4114, 7
    %v4116 = vsub.s32 1, %v4115
    %v4117 = vrot.slane %v4108, %v4116
    %v4248 = vunpack.c.l.b16 %v3980
    %v4249 = vunpack.c.h.b16 %v3980
    %v4250 = vunpack.c.l.b16 %v3981
    %v4251 = vunpack.c.h.b16 %v3981
    %v4252 = vunpack.c.l.b16 %v3982
    %v4253 = vunpack.c.h.b16 %v3982
    %v4254 = vunpack.c.l.b16 %v3983
    %v4255 = vunpack.c.h.b16 %v3983
    %v4256 = vunpack.c.l.b16 %v3984
    %v4257 = vunpack.c.h.b16 %v3984
    %v4258 = vunpack.c.l.b16 %v3985
    %v4259 = vunpack.c.h.b16 %v3985
    %v4260 = vunpack.c.l.b16 %v3986
    %v4261 = vunpack.c.h.b16 %v3986
    %v4262 = vunpack.c.l.b16 %v3987
    %v4263 = vunpack.c.h.b16 %v3987
    %v4264 = vunpack.c.l.b16 %v3988
    %v4265 = vunpack.c.h.b16 %v3988
    %v4266 = vunpack.c.l.b16 %v3989
    %v4267 = vunpack.c.h.b16 %v3989
    %v4268 = vunpack.c.l.b16 %v3990
    %v4269 = vunpack.c.h.b16 %v3990
    %v4270 = vunpack.c.l.b16 %v3991
    %v4271 = vunpack.c.h.b16 %v3991
    %v4272 = vunpack.c.l.b16 %v3992
    %v4273 = vunpack.c.h.b16 %v3992
    %v4274 = vunpack.c.l.b16 %v3993
    %v4275 = vunpack.c.h.b16 %v3993
    %v4276 = vunpack.c.l.b16 %v3994
    %v4277 = vunpack.c.h.b16 %v3994
    %v4278 = vunpack.c.l.b16 %v3995
    %v4279 = vunpack.c.h.b16 %v3995
    %v4280 = vunpack.c.l.b16 %v3996
    %v4281 = vunpack.c.h.b16 %v3996
    %v4282 = vunpack.c.l.b16 %v3997
    %v4283 = vunpack.c.h.b16 %v3997
    %v4284 = vunpack.c.l.b16 %v3998
    %v4285 = vunpack.c.h.b16 %v3998
    %v4286 = vunpack.c.l.b16 %v3999
    %v4287 = vunpack.c.h.b16 %v3999
    %v4288 = vunpack.c.l.b16 %v4000
    %v4289 = vunpack.c.h.b16 %v4000
    %v4290 = vunpack.c.l.b16 %v4001
    %v4291 = vunpack.c.h.b16 %v4001
    %v4292 = vunpack.c.l.b16 %v4002
    %v4293 = vunpack.c.h.b16 %v4002
    %v4294 = vunpack.c.l.b16 %v4003
    %v4295 = vunpack.c.h.b16 %v4003
    %v4296 = vunpack.c.l.b16 %v4004
    %v4297 = vunpack.c.h.b16 %v4004
    %v4298 = vunpack.c.l.b16 %v4005
    %v4299 = vunpack.c.h.b16 %v4005
    %v4300 = vunpack.c.l.b16 %v4006
    %v4301 = vunpack.c.h.b16 %v4006
    %v4302 = vunpack.c.l.b16 %v4007
    %v4303 = vunpack.c.h.b16 %v4007
    %v4304 = vunpack.c.l.b16 %v4008
    %v4305 = vunpack.c.h.b16 %v4008
    %v4306 = vunpack.c.l.b16 %v4009
    %v4307 = vunpack.c.h.b16 %v4009
    %v4308 = vunpack.c.l.b16 %v4010
    %v4309 = vunpack.c.h.b16 %v4010
    %v4310 = vunpack.c.l.b16 %v4011
    %v4311 = vunpack.c.h.b16 %v4011
    %v4312 = vunpack.c.l.b16 %v4012
    %v4313 = vunpack.c.h.b16 %v4012
    %v4314 = vunpack.c.l.b16 %v4013
    %v4315 = vunpack.c.h.b16 %v4013
    %v4316 = vunpack.c.l.b16 %v4014
    %v4317 = vunpack.c.h.b16 %v4014
    %v4318 = vunpack.c.l.b16 %v4015
    %v4319 = vunpack.c.h.b16 %v4015
    %v4320 = vunpack.c.l.b16 %v4016
    %v4321 = vunpack.c.h.b16 %v4016
    %v4322 = vunpack.c.l.b16 %v4017
    %v4323 = vunpack.c.h.b16 %v4017
    %v4324 = vunpack.c.l.b16 %v4018
    %v4325 = vunpack.c.h.b16 %v4018
    %v4326 = vunpack.c.l.b16 %v4019
    %v4327 = vunpack.c.h.b16 %v4019
    %v4328 = vunpack.c.l.b16 %v4020
    %v4329 = vunpack.c.h.b16 %v4020
    %v4330 = vunpack.c.l.b16 %v4021
    %v4331 = vunpack.c.h.b16 %v4021
    %v4332 = vunpack.c.l.b16 %v4022
    %v4333 = vunpack.c.h.b16 %v4022
    %v4334 = vunpack.c.l.b16 %v4023
    %v4335 = vunpack.c.h.b16 %v4023
    %v4336 = vunpack.c.l.b16 %v4024
    %v4337 = vunpack.c.h.b16 %v4024
    %v4338 = vunpack.c.l.b16 %v4025
    %v4339 = vunpack.c.h.b16 %v4025
    %v4340 = vunpack.c.l.b16 %v4026
    %v4341 = vunpack.c.h.b16 %v4026
    %v4342 = vunpack.c.l.b16 %v4027
    %v4343 = vunpack.c.h.b16 %v4027
    %v4344 = vunpack.c.l.b16 %v4028
    %v4345 = vunpack.c.h.b16 %v4028
    %v4346 = vunpack.c.l.b16 %v4029
    %v4347 = vunpack.c.h.b16 %v4029
    %v4348 = vunpack.c.l.b16 %v4030
    %v4349 = vunpack.c.h.b16 %v4030
    %v4350 = vunpack.c.l.b16 %v4031
    %v4351 = vunpack.c.h.b16 %v4031
    %v4352 = vunpack.c.l.b16 %v4032
    %v4353 = vunpack.c.h.b16 %v4032
    %v4354 = vunpack.c.l.b16 %v4033
    %v4355 = vunpack.c.h.b16 %v4033
    %v4356 = vunpack.c.l.b16 %v4034
    %v4357 = vunpack.c.h.b16 %v4034
    %v4358 = vunpack.c.l.b16 %v4035
    %v4359 = vunpack.c.h.b16 %v4035
    %v4360 = vunpack.c.l.b16 %v4036
    %v4361 = vunpack.c.h.b16 %v4036
    %v4362 = vunpack.c.l.b16 %v4037
    %v4363 = vunpack.c.h.b16 %v4037
    %v4364 = vunpack.c.l.b16 %v4038
    %v4365 = vunpack.c.h.b16 %v4038
    %v4366 = vunpack.c.l.b16 %v4039
    %v4367 = vunpack.c.h.b16 %v4039
    %v4368 = vunpack.c.l.b16 %v4040
    %v4369 = vunpack.c.h.b16 %v4040
    %v4370 = vunpack.c.l.b16 %v4041
    %v4371 = vunpack.c.h.b16 %v4041
    %v4372 = vunpack.c.l.b16 %v4042
    %v4373 = vunpack.c.h.b16 %v4042
    %v4374 = vunpack.c.l.b16 %v4043
    %v4375 = vunpack.c.h.b16 %v4043
    %v4376 = vunpack.c.l.b16 %v4044
    %v4377 = vunpack.c.h.b16 %v4044
    %v4378 = vunpack.c.l.b16 %v4045
    %v4379 = vunpack.c.h.b16 %v4045
    %v4380 = vunpack.c.l.b16 %v4046
    %v4381 = vunpack.c.h.b16 %v4046
    %v4382 = vunpack.c.l.b16 %v4047
    %v4383 = vunpack.c.h.b16 %v4047
    %v4384 = vunpack.c.l.b16 %v4048
    %v4385 = vunpack.c.h.b16 %v4048
    %v4386 = vunpack.c.l.b16 %v4049
    %v4387 = vunpack.c.h.b16 %v4049
    %v4388 = vunpack.c.l.b16 %v4050
    %v4389 = vunpack.c.h.b16 %v4050
    %v4390 = vunpack.c.l.b16 %v4051
    %v4391 = vunpack.c.h.b16 %v4051
    %v4392 = vunpack.c.l.b16 %v4052
    %v4393 = vunpack.c.h.b16 %v4052
    %v4394 = vunpack.c.l.b16 %v4053
    %v4395 = vunpack.c.h.b16 %v4053
    %v4396 = vunpack.c.l.b16 %v4054
    %v4397 = vunpack.c.h.b16 %v4054
    %v4398 = vunpack.c.l.b16 %v4055
    %v4399 = vunpack.c.h.b16 %v4055
    %v4400 = vunpack.c.l.b16 %v4056
    %v4401 = vunpack.c.h.b16 %v4056
    %v4402 = vunpack.c.l.b16 %v4057
    %v4403 = vunpack.c.h.b16 %v4057
    %v4404 = vunpack.c.l.b16 %v4058
    %v4405 = vunpack.c.h.b16 %v4058
    %v4406 = vunpack.c.l.b16 %v4059
    %v4407 = vunpack.c.h.b16 %v4059
    %v4408 = vunpack.c.l.b16 %v4060
    %v4409 = vunpack.c.h.b16 %v4060
    %v4410 = vunpack.c.l.b16 %v4061
    %v4411 = vunpack.c.h.b16 %v4061
    %v4412 = vunpack.c.l.b16 %v4062
    %v4413 = vunpack.c.h.b16 %v4062
    %v4414 = vunpack.c.l.b16 %v4063
    %v4415 = vunpack.c.h.b16 %v4063
    %v4416 = vunpack.c.l.b16 %v4064
    %v4417 = vunpack.c.h.b16 %v4064
    %v4418 = vunpack.c.l.b16 %v4065
    %v4419 = vunpack.c.h.b16 %v4065
    %v4420 = vunpack.c.l.b16 %v4066
    %v4421 = vunpack.c.h.b16 %v4066
    %v4422 = vunpack.c.l.b16 %v4067
    %v4423 = vunpack.c.h.b16 %v4067
    %v4424 = vunpack.c.l.b16 %v4068
    %v4425 = vunpack.c.h.b16 %v4068
    %v4426 = vunpack.c.l.b16 %v4069
    %v4427 = vunpack.c.h.b16 %v4069
    %v4428 = vunpack.c.l.b16 %v4070
    %v4429 = vunpack.c.h.b16 %v4070
    %v4430 = vunpack.c.l.b16 %v4071
    %v4431 = vunpack.c.h.b16 %v4071
    %v4432 = vunpack.c.l.b16 %v4072
    %v4433 = vunpack.c.h.b16 %v4072
    %v4434 = vunpack.c.l.b16 %v4073
    %v4435 = vunpack.c.h.b16 %v4073
    %v4436 = vunpack.c.l.b16 %v4074
    %v4437 = vunpack.c.h.b16 %v4074
    %v4438 = vunpack.c.l.b16 %v4075
    %v4439 = vunpack.c.h.b16 %v4075
    %v4440 = vunpack.c.l.b16 %v4076
    %v4441 = vunpack.c.h.b16 %v4076
    %v4442 = vunpack.c.l.b16 %v4077
    %v4443 = vunpack.c.h.b16 %v4077
    %v4444 = vunpack.c.l.b16 %v4078
    %v4445 = vunpack.c.h.b16 %v4078
    %v4446 = vunpack.c.l.b16 %v4079
    %v4447 = vunpack.c.h.b16 %v4079
    %v4448 = vunpack.c.l.b16 %v4080
    %v4449 = vunpack.c.h.b16 %v4080
    %v4450 = vunpack.c.l.b16 %v4081
    %v4451 = vunpack.c.h.b16 %v4081
    %v4452 = vunpack.c.l.b16 %v4082
    %v4453 = vunpack.c.h.b16 %v4082
    %v4454 = vunpack.c.l.b16 %v4083
    %v4455 = vunpack.c.h.b16 %v4083
    %v4456 = vunpack.c.l.b16 %v4084
    %v4457 = vunpack.c.h.b16 %v4084
    %v4458 = vunpack.c.l.b16 %v4085
    %v4459 = vunpack.c.h.b16 %v4085
    %v4460 = vunpack.c.l.b16 %v4086
    %v4461 = vunpack.c.h.b16 %v4086
    %v4462 = vunpack.c.l.b16 %v4087
    %v4463 = vunpack.c.h.b16 %v4087
    %v4464 = vunpack.c.l.b16 %v4088
    %v4465 = vunpack.c.h.b16 %v4088
    %v4466 = vunpack.c.l.b16 %v4089
    %v4467 = vunpack.c.h.b16 %v4089
    %v4468 = vunpack.c.l.b16 %v4090
    %v4469 = vunpack.c.h.b16 %v4090
    %v4470 = vunpack.c.l.b16 %v4091
    %v4471 = vunpack.c.h.b16 %v4091
    %v4472 = vunpack.c.l.b16 %v4092
    %v4473 = vunpack.c.h.b16 %v4092
    %v4474 = vunpack.c.l.b16 %v4093
    %v4475 = vunpack.c.h.b16 %v4093
    %v4476 = vunpack.c.l.b16 %v4094
    %v4477 = vunpack.c.h.b16 %v4094
    %v4478 = vunpack.c.l.b16 %v4095
    %v4479 = vunpack.c.h.b16 %v4095
    %v4480 = vunpack.c.l.b16 %v4096
    %v4481 = vunpack.c.h.b16 %v4096
    %v4482 = vunpack.c.l.b16 %v4097
    %v4483 = vunpack.c.h.b16 %v4097
    %v4484 = vunpack.c.l.b16 %v4098
    %v4485 = vunpack.c.h.b16 %v4098
    %v4486 = vunpack.c.l.b16 %v4099
    %v4487 = vunpack.c.h.b16 %v4099
    %v4488 = vunpack.c.l.b16 %v4100
    %v4489 = vunpack.c.h.b16 %v4100
    %v4490 = vunpack.c.l.b16 %v4101
    %v4491 = vunpack.c.h.b16 %v4101
    %v4492 = vunpack.c.l.b16 %v4102
    %v4493 = vunpack.c.h.b16 %v4102
    %v4494 = vunpack.c.l.b16 %v4103
    %v4495 = vunpack.c.h.b16 %v4103
    %v4496 = vunpack.c.l.b16 %v4104
    %v4497 = vunpack.c.h.b16 %v4104
    %v4498 = vunpack.c.l.b16 %v4105
    %v4499 = vunpack.c.h.b16 %v4105
    %v4500 = vunpack.c.l.b16 %v4106
    %v4501 = vunpack.c.h.b16 %v4106
    %v4502 = vunpack.c.l.b16 %v4107
    %v4503 = vunpack.c.h.b16 %v4107
    %v4504 = vpack.c.b16 %v4250, %v4248
    %v4505 = vpack.c.b16 %v4251, %v4249
    %v4506 = vpack.c.b16 %v4254, %v4252
    %v4507 = vpack.c.b16 %v4255, %v4253
    %v4508 = vpack.c.b16 %v4258, %v4256
    %v4509 = vpack.c.b16 %v4259, %v4257
    %v4510 = vpack.c.b16 %v4262, %v4260
    %v4511 = vpack.c.b16 %v4263, %v4261
    %v4512 = vpack.c.b16 %v4266, %v4264
    %v4513 = vpack.c.b16 %v4267, %v4265
    %v4514 = vpack.c.b16 %v4270, %v4268
    %v4515 = vpack.c.b16 %v4271, %v4269
    %v4516 = vpack.c.b16 %v4274, %v4272
    %v4517 = vpack.c.b16 %v4275, %v4273
    %v4518 = vpack.c.b16 %v4278, %v4276
    %v4519 = vpack.c.b16 %v4279, %v4277
    %v4520 = vpack.c.b16 %v4282, %v4280
    %v4521 = vpack.c.b16 %v4283, %v4281
    %v4522 = vpack.c.b16 %v4286, %v4284
    %v4523 = vpack.c.b16 %v4287, %v4285
    %v4524 = vpack.c.b16 %v4290, %v4288
    %v4525 = vpack.c.b16 %v4291, %v4289
    %v4526 = vpack.c.b16 %v4294, %v4292
    %v4527 = vpack.c.b16 %v4295, %v4293
    %v4528 = vpack.c.b16 %v4298, %v4296
    %v4529 = vpack.c.b16 %v4299, %v4297
    %v4530 = vpack.c.b16 %v4302, %v4300
    %v4531 = vpack.c.b16 %v4303, %v4301
    %v4532 = vpack.c.b16 %v4306, %v4304
    %v4533 = vpack.c.b16 %v4307, %v4305
    %v4534 = vpack.c.b16 %v4310, %v4308
    %v4535 = vpack.c.b16 %v4311, %v4309
    %v4536 = vpack.c.b16 %v4314, %v4312
    %v4537 = vpack.c.b16 %v4315, %v4313
    %v4538 = vpack.c.b16 %v4318, %v4316
    %v4539 = vpack.c.b16 %v4319, %v4317
    %v4540 = vpack.c.b16 %v4322, %v4320
    %v4541 = vpack.c.b16 %v4323, %v4321
    %v4542 = vpack.c.b16 %v4326, %v4324
    %v4543 = vpack.c.b16 %v4327, %v4325
    %v4544 = vpack.c.b16 %v4330, %v4328
    %v4545 = vpack.c.b16 %v4331, %v4329
    %v4546 = vpack.c.b16 %v4334, %v4332
    %v4547 = vpack.c.b16 %v4335, %v4333
    %v4548 = vpack.c.b16 %v4338, %v4336
    %v4549 = vpack.c.b16 %v4339, %v4337
    %v4550 = vpack.c.b16 %v4342, %v4340
    %v4551 = vpack.c.b16 %v4343, %v4341
    %v4552 = vpack.c.b16 %v4346, %v4344
    %v4553 = vpack.c.b16 %v4347, %v4345
    %v4554 = vpack.c.b16 %v4350, %v4348
    %v4555 = vpack.c.b16 %v4351, %v4349
    %v4556 = vpack.c.b16 %v4354, %v4352
    %v4557 = vpack.c.b16 %v4355, %v4353
    %v4558 = vpack.c.b16 %v4358, %v4356
    %v4559 = vpack.c.b16 %v4359, %v4357
    %v4560 = vpack.c.b16 %v4362, %v4360
    %v4561 = vpack.c.b16 %v4363, %v4361
    %v4562 = vpack.c.b16 %v4366, %v4364
    %v4563 = vpack.c.b16 %v4367, %v4365
    %v4564 = vpack.c.b16 %v4370, %v4368
    %v4565 = vpack.c.b16 %v4371, %v4369
    %v4566 = vpack.c.b16 %v4374, %v4372
    %v4567 = vpack.c.b16 %v4375, %v4373
    %v4568 = vpack.c.b16 %v4378, %v4376
    %v4569 = vpack.c.b16 %v4379, %v4377
    %v4570 = vpack.c.b16 %v4382, %v4380
    %v4571 = vpack.c.b16 %v4383, %v4381
    %v4572 = vpack.c.b16 %v4386, %v4384
    %v4573 = vpack.c.b16 %v4387, %v4385
    %v4574 = vpack.c.b16 %v4390, %v4388
    %v4575 = vpack.c.b16 %v4391, %v4389
    %v4576 = vpack.c.b16 %v4394, %v4392
    %v4577 = vpack.c.b16 %v4395, %v4393
    %v4578 = vpack.c.b16 %v4398, %v4396
    %v4579 = vpack.c.b16 %v4399, %v4397
    %v4580 = vpack.c.b16 %v4402, %v4400
    %v4581 = vpack.c.b16 %v4403, %v4401
    %v4582 = vpack.c.b16 %v4406, %v4404
    %v4583 = vpack.c.b16 %v4407, %v4405
    %v4584 = vpack.c.b16 %v4410, %v4408
    %v4585 = vpack.c.b16 %v4411, %v4409
    %v4586 = vpack.c.b16 %v4414, %v4412
    %v4587 = vpack.c.b16 %v4415, %v4413
    %v4588 = vpack.c.b16 %v4418, %v4416
    %v4589 = vpack.c.b16 %v4419, %v4417
    %v4590 = vpack.c.b16 %v4422, %v4420
    %v4591 = vpack.c.b16 %v4423, %v4421
    %v4592 = vpack.c.b16 %v4426, %v4424
    %v4593 = vpack.c.b16 %v4427, %v4425
    %v4594 = vpack.c.b16 %v4430, %v4428
    %v4595 = vpack.c.b16 %v4431, %v4429
    %v4596 = vpack.c.b16 %v4434, %v4432
    %v4597 = vpack.c.b16 %v4435, %v4433
    %v4598 = vpack.c.b16 %v4438, %v4436
    %v4599 = vpack.c.b16 %v4439, %v4437
    %v4600 = vpack.c.b16 %v4442, %v4440
    %v4601 = vpack.c.b16 %v4443, %v4441
    %v4602 = vpack.c.b16 %v4446, %v4444
    %v4603 = vpack.c.b16 %v4447, %v4445
    %v4604 = vpack.c.b16 %v4450, %v4448
    %v4605 = vpack.c.b16 %v4451, %v4449
    %v4606 = vpack.c.b16 %v4454, %v4452
    %v4607 = vpack.c.b16 %v4455, %v4453
    %v4608 = vpack.c.b16 %v4458, %v4456
    %v4609 = vpack.c.b16 %v4459, %v4457
    %v4610 = vpack.c.b16 %v4462, %v4460
    %v4611 = vpack.c.b16 %v4463, %v4461
    %v4612 = vpack.c.b16 %v4466, %v4464
    %v4613 = vpack.c.b16 %v4467, %v4465
    %v4614 = vpack.c.b16 %v4470, %v4468
    %v4615 = vpack.c.b16 %v4471, %v4469
    %v4616 = vpack.c.b16 %v4474, %v4472
    %v4617 = vpack.c.b16 %v4475, %v4473
    %v4618 = vpack.c.b16 %v4478, %v4476
    %v4619 = vpack.c.b16 %v4479, %v4477
    %v4620 = vpack.c.b16 %v4482, %v4480
    %v4621 = vpack.c.b16 %v4483, %v4481
    %v4622 = vpack.c.b16 %v4486, %v4484
    %v4623 = vpack.c.b16 %v4487, %v4485
    %v4624 = vpack.c.b16 %v4490, %v4488
    %v4625 = vpack.c.b16 %v4491, %v4489
    %v4626 = vpack.c.b16 %v4494, %v4492
    %v4627 = vpack.c.b16 %v4495, %v4493
    %v4628 = vpack.c.b16 %v4498, %v4496
    %v4629 = vpack.c.b16 %v4499, %v4497
    %v4630 = vpack.c.b16 %v4502, %v4500
    %v4631 = vpack.c.b16 %v4503, %v4501
    %4760 = vmatprep.subr.bf16.mxu0 %v4505
    %4761 = vmatpush1.bf16.msra.mxu0 %v4504
    %4762 = vmatprep.subr.bf16.mxu0 %v4507
    %4763 = vmatpush1.bf16.msra.mxu0 %v4506
    %4764 = vmatprep.subr.bf16.mxu0 %v4509
    %4765 = vmatpush1.bf16.msra.mxu0 %v4508
    %4766 = vmatprep.subr.bf16.mxu0 %v4511
    %4767 = vmatpush1.bf16.msra.mxu0 %v4510
    %4768 = vmatprep.subr.bf16.mxu0 %v4513
    %4769 = vmatpush1.bf16.msra.mxu0 %v4512
    %4770 = vmatprep.subr.bf16.mxu0 %v4515
    %4771 = vmatpush1.bf16.msra.mxu0 %v4514
    %4772 = vmatprep.subr.bf16.mxu0 %v4517
    %4773 = vmatpush1.bf16.msra.mxu0 %v4516
    %4774 = vmatprep.subr.bf16.mxu0 %v4519
    %4775 = vmatpush1.bf16.msra.mxu0 %v4518
    %4776 = vmatprep.subr.bf16.mxu0 %v4521
    %4777 = vmatpush1.bf16.msra.mxu0 %v4520
    %4778 = vmatprep.subr.bf16.mxu0 %v4523
    %4779 = vmatpush1.bf16.msra.mxu0 %v4522
    %4780 = vmatprep.subr.bf16.mxu0 %v4525
    %4781 = vmatpush1.bf16.msra.mxu0 %v4524
    %4782 = vmatprep.subr.bf16.mxu0 %v4527
    %4783 = vmatpush1.bf16.msra.mxu0 %v4526
    %4784 = vmatprep.subr.bf16.mxu0 %v4529
    %4785 = vmatpush1.bf16.msra.mxu0 %v4528
    %4786 = vmatprep.subr.bf16.mxu0 %v4531
    %4787 = vmatpush1.bf16.msra.mxu0 %v4530
    %4788 = vmatprep.subr.bf16.mxu0 %v4533
    %4789 = vmatpush1.bf16.msra.mxu0 %v4532
    %4790 = vmatprep.subr.bf16.mxu0 %v4535
    %4791 = vmatpush1.bf16.msra.mxu0 %v4534
    %4792 = vmatprep.mubr.bf16.mxu0 %v3973
    %4793 = vmatmul.mubr.bf16.gmra.mrb[0].mxu0 %v3972
    %v4794 = vpop.f32.mrb[0].mxu0
    %v4795 = vadd.f32 %v4113, %v4794
    %v4796 = vpop.f32.mrb[0].mxu0
    %v4797 = vadd.f32 %v4117, %v4796
    %v4798 = vpop.f32.mrb[0].mxu0
    %v4799 = vadd.f32 %v4113, %v4798
    %v4800 = vpop.f32.mrb[0].mxu0
    %v4801 = vadd.f32 %v4117, %v4800
    %4802 = vdwg.mxu0
    %4803 = vmatprep.subr.bf16.mxu0 %v4537
    %4804 = vmatpush1.bf16.msra.mxu0 %v4536
    %4805 = vmatprep.subr.bf16.mxu0 %v4539
    %4806 = vmatpush1.bf16.msra.mxu0 %v4538
    %4807 = vmatprep.subr.bf16.mxu0 %v4541
    %4808 = vmatpush1.bf16.msra.mxu0 %v4540
    %4809 = vmatprep.subr.bf16.mxu0 %v4543
    %4810 = vmatpush1.bf16.msra.mxu0 %v4542
    %4811 = vmatprep.subr.bf16.mxu0 %v4545
    %4812 = vmatpush1.bf16.msra.mxu0 %v4544
    %4813 = vmatprep.subr.bf16.mxu0 %v4547
    %4814 = vmatpush1.bf16.msra.mxu0 %v4546
    %4815 = vmatprep.subr.bf16.mxu0 %v4549
    %4816 = vmatpush1.bf16.msra.mxu0 %v4548
    %4817 = vmatprep.subr.bf16.mxu0 %v4551
    %4818 = vmatpush1.bf16.msra.mxu0 %v4550
    %4819 = vmatprep.subr.bf16.mxu0 %v4553
    %4820 = vmatpush1.bf16.msra.mxu0 %v4552
    %4821 = vmatprep.subr.bf16.mxu0 %v4555
    %4822 = vmatpush1.bf16.msra.mxu0 %v4554
    %4823 = vmatprep.subr.bf16.mxu0 %v4557
    %4824 = vmatpush1.bf16.msra.mxu0 %v4556
    %4825 = vmatprep.subr.bf16.mxu0 %v4559
    %4826 = vmatpush1.bf16.msra.mxu0 %v4558
    %4827 = vmatprep.subr.bf16.mxu0 %v4561
    %4828 = vmatpush1.bf16.msra.mxu0 %v4560
    %4829 = vmatprep.subr.bf16.mxu0 %v4563
    %4830 = vmatpush1.bf16.msra.mxu0 %v4562
    %4831 = vmatprep.subr.bf16.mxu0 %v4565
    %4832 = vmatpush1.bf16.msra.mxu0 %v4564
    %4833 = vmatprep.subr.bf16.mxu0 %v4567
    %4834 = vmatpush1.bf16.msra.mxu0 %v4566
    %4835 = vmatprep.mubr.bf16.mxu0 %v3975
    %4836 = vmatmul.mubr.bf16.gmra.mrb[0].mxu0 %v3974
    %v4837 = vpop.f32.mrb[0].mxu0
    %v4838 = vadd.f32 %v4795, %v4837
    %v4839 = vpop.f32.mrb[0].mxu0
    %v4840 = vadd.f32 %v4797, %v4839
    %v4841 = vpop.f32.mrb[0].mxu0
    %v4842 = vadd.f32 %v4799, %v4841
    %v4843 = vpop.f32.mrb[0].mxu0
    %v4844 = vadd.f32 %v4801, %v4843
    %4845 = vdwg.mxu0
    %4846 = vmatprep.subr.bf16.mxu0 %v4569
    %4847 = vmatpush1.bf16.msra.mxu0 %v4568
    %4848 = vmatprep.subr.bf16.mxu0 %v4571
    %4849 = vmatpush1.bf16.msra.mxu0 %v4570
    %4850 = vmatprep.subr.bf16.mxu0 %v4573
    %4851 = vmatpush1.bf16.msra.mxu0 %v4572
    %4852 = vmatprep.subr.bf16.mxu0 %v4575
    %4853 = vmatpush1.bf16.msra.mxu0 %v4574
    %4854 = vmatprep.subr.bf16.mxu0 %v4577
    %4855 = vmatpush1.bf16.msra.mxu0 %v4576
    %4856 = vmatprep.subr.bf16.mxu0 %v4579
    %4857 = vmatpush1.bf16.msra.mxu0 %v4578
    %4858 = vmatprep.subr.bf16.mxu0 %v4581
    %4859 = vmatpush1.bf16.msra.mxu0 %v4580
    %4860 = vmatprep.subr.bf16.mxu0 %v4583
    %4861 = vmatpush1.bf16.msra.mxu0 %v4582
    %4862 = vmatprep.subr.bf16.mxu0 %v4585
    %4863 = vmatpush1.bf16.msra.mxu0 %v4584
    %4864 = vmatprep.subr.bf16.mxu0 %v4587
    %4865 = vmatpush1.bf16.msra.mxu0 %v4586
    %4866 = vmatprep.subr.bf16.mxu0 %v4589
    %4867 = vmatpush1.bf16.msra.mxu0 %v4588
    %4868 = vmatprep.subr.bf16.mxu0 %v4591
    %4869 = vmatpush1.bf16.msra.mxu0 %v4590
    %4870 = vmatprep.subr.bf16.mxu0 %v4593
    %4871 = vmatpush1.bf16.msra.mxu0 %v4592
    %4872 = vmatprep.subr.bf16.mxu0 %v4595
    %4873 = vmatpush1.bf16.msra.mxu0 %v4594
    %4874 = vmatprep.subr.bf16.mxu0 %v4597
    %4875 = vmatpush1.bf16.msra.mxu0 %v4596
    %4876 = vmatprep.subr.bf16.mxu0 %v4599
    %4877 = vmatpush1.bf16.msra.mxu0 %v4598
    %4878 = vmatprep.mubr.bf16.mxu0 %v3977
    %4879 = vmatmul.mubr.bf16.gmra.mrb[0].mxu0 %v3976
    %v4880 = vpop.f32.mrb[0].mxu0
    %v4881 = vadd.f32 %v4838, %v4880
    %v4882 = vpop.f32.mrb[0].mxu0
    %v4883 = vadd.f32 %v4840, %v4882
    %v4884 = vpop.f32.mrb[0].mxu0
    %v4885 = vadd.f32 %v4842, %v4884
    %v4886 = vpop.f32.mrb[0].mxu0
    %v4887 = vadd.f32 %v4844, %v4886
    %4888 = vdwg.mxu0
    %4889 = vmatprep.subr.bf16.mxu0 %v4601
    %4890 = vmatpush1.bf16.msra.mxu0 %v4600
    %4891 = vmatprep.subr.bf16.mxu0 %v4603
    %4892 = vmatpush1.bf16.msra.mxu0 %v4602
    %4893 = vmatprep.subr.bf16.mxu0 %v4605
    %4894 = vmatpush1.bf16.msra.mxu0 %v4604
    %4895 = vmatprep.subr.bf16.mxu0 %v4607
    %4896 = vmatpush1.bf16.msra.mxu0 %v4606
    %4897 = vmatprep.subr.bf16.mxu0 %v4609
    %4898 = vmatpush1.bf16.msra.mxu0 %v4608
    %4899 = vmatprep.subr.bf16.mxu0 %v4611
    %4900 = vmatpush1.bf16.msra.mxu0 %v4610
    %4901 = vmatprep.subr.bf16.mxu0 %v4613
    %4902 = vmatpush1.bf16.msra.mxu0 %v4612
    %4903 = vmatprep.subr.bf16.mxu0 %v4615
    %4904 = vmatpush1.bf16.msra.mxu0 %v4614
    %4905 = vmatprep.subr.bf16.mxu0 %v4617
    %4906 = vmatpush1.bf16.msra.mxu0 %v4616
    %4907 = vmatprep.subr.bf16.mxu0 %v4619
    %4908 = vmatpush1.bf16.msra.mxu0 %v4618
    %4909 = vmatprep.subr.bf16.mxu0 %v4621
    %4910 = vmatpush1.bf16.msra.mxu0 %v4620
    %4911 = vmatprep.subr.bf16.mxu0 %v4623
    %4912 = vmatpush1.bf16.msra.mxu0 %v4622
    %4913 = vmatprep.subr.bf16.mxu0 %v4625
    %4914 = vmatpush1.bf16.msra.mxu0 %v4624
    %4915 = vmatprep.subr.bf16.mxu0 %v4627
    %4916 = vmatpush1.bf16.msra.mxu0 %v4626
    %4917 = vmatprep.subr.bf16.mxu0 %v4629
    %4918 = vmatpush1.bf16.msra.mxu0 %v4628
    %4919 = vmatprep.subr.bf16.mxu0 %v4631
    %4920 = vmatpush1.bf16.msra.mxu0 %v4630
    %4921 = vmatprep.mubr.bf16.mxu0 %v3979
    %4922 = vmatmul.mubr.bf16.gmra.mrb[0].mxu0 %v3978
    %v4923 = vpop.f32.mrb[0].mxu0
    %v4924 = vadd.f32 %v4881, %v4923
    %v4925 = vpop.f32.mrb[0].mxu0
    %v4926 = vadd.f32 %v4883, %v4925
    %v4927 = vpop.f32.mrb[0].mxu0
    %v4928 = vadd.f32 %v4885, %v4927
    %v4929 = vpop.f32.mrb[0].mxu0
    %v4930 = vadd.f32 %v4887, %v4929
    %4931 = vdwg.mxu0
    %v4932 = vmul.f32 %v4924, %v4924
    %v4933 = vmul.f32 %v4926, %v4926
    %v4934 = vmul.f32 %v4928, %v4928
    %v4935 = vmul.f32 %v4930, %v4930
    %v4936 = vadd.f32 %v4932, %v4933
    %4937 = vadd.xlane.f32.xlu0 %v4936
    %v4938 = vpop.xlane.xlu0 %4937
    %v4939 = vadd.f32 %v4934, %v4935
    %4940 = vadd.xlane.f32.xlu0 %v4939
    %v4941 = vpop.xlane.xlu0 %4940
    %v4942 = vmax.f32 %v4938, 1e-24
    %v4943 = vmax.f32 %v4941, 1e-24
    %v4944 = vrsqrt.pop %v4942
    %v4945 = vrsqrt.pop %v4943
    %v4946 = vmul.f32 %v4924, %v4944
    %v4947 = vmul.f32 %v4926, %v4944
    %v4948 = vmul.f32 %v4928, %v4945
    %v4949 = vmul.f32 %v4930, %v4945
    %4950 = vmatprep.subr.mxu0 %v4949
    %4951 = vmatpush1.xpose.msra.mxu0 %v4948
    %4952 = vmatprep.subr.mxu0 0.0
    %4953 = vmatpush1.xpose.msra.mxu0 0.0
    %4954 = vmatprep.subr.mxu0 0.0
    %4955 = vmatpush1.xpose.msra.mxu0 0.0
    %4956 = vmatprep.subr.mxu0 0.0
    %4957 = vmatpush1.xpose.msra.mxu0 0.0
    %4958 = vmatprep.subr.mxu0 0.0
    %4959 = vmatpush1.xpose.msra.mxu0 0.0
    %4960 = vmatprep.subr.mxu0 0.0
    %4961 = vmatpush1.xpose.msra.mxu0 0.0
    %4962 = vmatprep.subr.mxu0 0.0
    %4963 = vmatpush1.xpose.msra.mxu0 0.0
    %4964 = vmatprep.subr.mxu0 0.0
    %4965 = vmatpush1.xpose.msra.mxu0 0.0
    %4966 = vmatprep.subr.mxu0 0.0
    %4967 = vmatpush1.xpose.msra.mxu0 0.0
    %4968 = vmatprep.subr.mxu0 0.0
    %4969 = vmatpush1.xpose.msra.mxu0 0.0
    %4970 = vmatprep.subr.mxu0 0.0
    %4971 = vmatpush1.xpose.msra.mxu0 0.0
    %4972 = vmatprep.subr.mxu0 0.0
    %4973 = vmatpush1.xpose.msra.mxu0 0.0
    %4974 = vmatprep.subr.mxu0 0.0
    %4975 = vmatpush1.xpose.msra.mxu0 0.0
    %4976 = vmatprep.subr.mxu0 0.0
    %4977 = vmatpush1.xpose.msra.mxu0 0.0
    %4978 = vmatprep.subr.mxu0 0.0
    %4979 = vmatpush1.xpose.msra.mxu0 0.0
    %4980 = vmatprep.subr.mxu0 0.0
    %4981 = vmatpush1.xpose.msra.mxu0 0.0
    %4982 = vmatprep.subr.mxu0 0.0
    %4983 = vmatpush1.xpose.msra.mxu0 0.0
    %4984 = vmatprep.subr.mxu0 0.0
    %4985 = vmatpush1.xpose.msra.mxu0 0.0
    %4986 = vmatprep.subr.mxu0 0.0
    %4987 = vmatpush1.xpose.msra.mxu0 0.0
    %4988 = vmatprep.subr.mxu0 0.0
    %4989 = vmatpush1.xpose.msra.mxu0 0.0
    %4990 = vmatprep.subr.mxu0 0.0
    %4991 = vmatpush1.xpose.msra.mxu0 0.0
    %4992 = vmatprep.subr.mxu0 0.0
    %4993 = vmatpush1.xpose.msra.mxu0 0.0
    %4994 = vmatprep.subr.mxu0 0.0
    %4995 = vmatpush1.xpose.msra.mxu0 0.0
    %4996 = vmatprep.subr.mxu0 0.0
    %4997 = vmatpush1.xpose.msra.mxu0 0.0
    %4998 = vmatprep.subr.mxu0 0.0
    %4999 = vmatpush1.xpose.msra.mxu0 0.0
    %5000 = vmatprep.subr.mxu0 0.0
    %5001 = vmatpush1.xpose.msra.mxu0 0.0
    %5002 = vmatprep.subr.mxu0 0.0
    %5003 = vmatpush1.xpose.msra.mxu0 0.0
    %5004 = vmatprep.subr.mxu0 0.0
    %5005 = vmatpush1.xpose.msra.mxu0 0.0
    %5006 = vmatprep.subr.mxu0 0.0
    %5007 = vmatpush1.xpose.msra.mxu0 0.0
    %5008 = vmatprep.subr.mxu0 0.0
    %5009 = vmatpush1.xpose.msra.mxu0 0.0
    %5010 = vmatprep.subr.mxu0 0.0
    %5011 = vmatpush1.xpose.msra.mxu0 0.0
    %5012 = vmatprep.subr.mxu0 0.0
    %5013 = vmatpush1.xpose.msra.mxu0 0.0
    %5014 = vmatprep.mubr.f32.mxu0 %v4947
    %5015 = vmatmul.mubr.f32.gmra.mrb[0].mxu0 %v4946
    %v5016 = vpop.f32.mrb[0].mxu0
    %v5017 = vadd.f32 0.0, %v5016
    %v5018 = vpop.f32.mrb[0].mxu0
    %5019 = vdwg.mxu0
    %v5020 = vrcp.pop 0.2
    %v5021 = vmul.f32 %v5017, %v5020
    %v5022 = vld [vmem:[%s5] sm:$0xff]
    %v5023 = vld [vmem:[#allocation11] sm:$0x1]
    %vm5024 = vcmp.ge.s32.totalorder %v5023, 0
    %v5025 = vsel %vm5024, 1, 0
    %v5026 = vlaneseq
    %v5027 = vshrl.u32 %v5026, 7
    %v5028 = vsub.s32 0, %v5027
    %v5029 = vrot.slane %v5025, %v5028
    %vm5030 = vcmp.eq.s32.totalorder %v5029, 1
    %v5031 = vsel %vm5030, %v5021, -1e+30
    %vm5032 = vcmask 64512
    %v5033 = vsel %vm5032, %v5031, -inf
    %5034 = vmax.xlane.f32.xlu0 %v5033
    %v5035 = vpop.xlane.xlu0 %5034
    %v5036 = vsub.f32 %v5031, %v5035
    %v5037 = vmul.f32 %v5036, 1.442695
    %v5038 = vpow.pop %v5037
    %v5039 = vsel %vm5032, %v5038, 0.0
    %5040 = vadd.xlane.f32.xlu0 %v5039
    %v5041 = vpop.xlane.xlu0 %5040
    %v5042 = vlog2.pop %v5041
    %v5043 = vmul.f32 %v5042, 0.6931472
    %v5044 = vsub.f32 %v5036, %v5043
    %5045 = vset.pattern.permute.xlu0 0
    %5046 = vperm.xlu0 %5045, %v5022
    %v5047 = vpop.permute.xlu0 %5046
    %v5048 = vlaneseq
    %v5049 = vshrl.u32 %v5048, 7
    %v5050 = vsub.s32 0, %v5049
    %v5051 = vrot.slane %v5023, %v5050
    %vm5052 = vcmp.eq.s32.totalorder %v5047, %v5051
    %vm5053 = vmand %vm5052, %vm5030
    %v5054 = vsel %vm5053, 1, 0
    %v5055 = vcvt.s32.f32 %v5054
    %v5056 = vsel %vm5032, %v5055, 0.0
    %5057 = vadd.xlane.f32.xlu0 %v5056
    %v5058 = vpop.xlane.xlu0 %5057
    %v5059 = vmul.f32 %v5044, %v5055
    %v5060 = vsel %vm5032, %v5059, 0.0
    %5061 = vadd.xlane.f32.xlu0 %v5060
    %v5062 = vpop.xlane.xlu0 %5061
    %v5063 = vmax.f32 %v5058, 1.0
    %v5064 = vrcp.pop %v5063
    %v5065 = vmul.f32 %v5062, %v5064
    %v5066 = vld [vmem:[%s7] sm:$0xff]
    %vm5067 = vcmp.ge.f32.partialorder %v5066, 0.5
    %v5068 = vsel %vm5067, 1, 0
    %v5069 = vcvt.s32.f32 %v5068
    %v5070 = vsub.f32 0.0, %v5065
    %v5071 = vmul.f32 %v5070, %v5069
    %vm5072 = vcmask 7168
    %v5073 = vsel %vm5072, %v5071, 0.0
    %5074 = vadd.xlane.f32.xlu0 %v5073
    %v5075 = vpop.xlane.xlu0 %5074
    %v5076 = vrot.slane %v5075, 4
    %v5077 = vadd.f32 %v5075, %v5076
    %v5078 = vrot.slane %v5077, 2
    %v5079 = vadd.f32 %v5077, %v5078
    %v5080 = vrot.slane %v5079, 1
    %v5081 = vadd.f32 %v5079, %v5080
    %s5082 = vtos %v5081
    %v5083 = vstv %s5082
    %v5084 = vsel %vm5072, %v5069, 0.0
    %5085 = vadd.xlane.f32.xlu0 %v5084
    %v5086 = vpop.xlane.xlu0 %5085
    %v5087 = vrot.slane %v5086, 4
    %v5088 = vadd.f32 %v5086, %v5087
    %v5089 = vrot.slane %v5088, 2
    %v5090 = vadd.f32 %v5088, %v5089
    %v5091 = vrot.slane %v5090, 1
    %v5092 = vadd.f32 %v5090, %v5091
    %s5093 = vtos %v5092
    %v5094 = vstv %s5093
    %vm5095 = vcmp.gt.f32.partialorder %v5094, 0.0
    %v5096 = vmax.f32 %v5094, 1.0
    %v5097 = vrcp.pop %v5096
    %v5098 = vmul.f32 %v5083, %v5097
    %v5099 = vsel %vm5095, %v5098, 0.0
    %vm5100 = vcmask 0
    %5101 = vst.msk [vmem:[#allocation13] sm:$0x1] %vm5100, %v5099
    // Predicated region
    $region58: #{tpu_custom_call.1} parent=1 // pred_check
      _
    $region59: #{tpu_custom_call.1} parent=1 // pred_check_branch
      %5103 = sbr.rel (0) target = $region61
    $region60: #{tpu_custom_call.1} parent=1 // pred_region
      %s5105 = ssub.s32 16, 16
      %5106 = vsyncadd [#allocation4], %s5105
      %s5108 = sshll.u32 [#allocation13], 4
      %s5109 = int_to_ptr.vmem [resolvable:$true] %s5108
      %5111 = dma.vmem_to_hbm [thread:$0]  %s5109, 16, %s8, [#allocation4]
    $region61: #{tpu_custom_call.1} parent=1 // pred_fallthru
      _
    // Predicated region
    $region62: #{tpu_custom_call.1} parent=1 // pred_check
      _
    $region63: #{tpu_custom_call.1} parent=1 // pred_check_branch
      %5113 = sbr.rel (0) target = $region65
    $region64: #{tpu_custom_call.1} parent=1 // pred_region
      %5114 = dma.done [#allocation4], 16
    $region65: #{tpu_custom_call.1} parent=1 // pred_fallthru
      _
    %5115 = vsyncpa [#allocation3], 1
    %5116 = vsyncpa [#allocation6], 1
    %5117 = vsyncpa [#allocation9], 1
    %5118 = vsyncpa [#allocation12], 1
    %5119 = vsyncpa [#allocation4], 1

</llo_original>
